<compile_context>
chip_gen: v6e
topology: v6e:2x2x1
jax: 0.10.0
libtpu: 0.0.40
codegen_flags: <defaults>
</compile_context>

<pallas_src>
import jax
import jax.numpy as jnp
from jax import lax
from jax.experimental import pallas as pl
from jax.experimental.pallas import tpu as pltpu

_BN_EPS = 1e-5
_MXU_DTYPE = jnp.bfloat16      # MXU operand dtype (accumulation is f32)


# ---------------------------------------------------------------------------
# In-kernel helper: 3x3 "same" conv (stride 1, zero pad 1) on a channels-last
# (Hd*Wd, C) activation.  pad_ref: ((Hd+2)*Wd, 3*C) bf16 scratch, w_ref: (3, 3*C, Cout).
# ---------------------------------------------------------------------------
def _conv3x3_same(h_f32, Hd, Wd, pad_ref, w_ref):
    HW = Hd * Wd
    C = h_f32.shape[-1]
    bt = pad_ref.dtype

    rows = lax.broadcasted_iota(jnp.int32, (HW, 1), 0)
    col = rows % Wd
    zero = jnp.zeros_like(h_f32)
    # shifted[i] = h[i-1], zero at the left image border (col == 0)      -> kw = 0 tap
    right = jnp.where(col == 0, zero, pltpu.roll(h_f32, 1, axis=0))
    # shifted[i] = h[i+1], zero at the right image border (col == Wd-1)  -> kw = 2 tap
    left = jnp.where(col == Wd - 1, zero, pltpu.roll(h_f32, HW - 1, axis=0))

    # Zero only the top/bottom pad rows (interior is fully overwritten every step).
    pad_ref[0:Wd, :] = jnp.zeros((Wd, 3 * C), bt)
    pad_ref[(Hd + 1) * Wd:(Hd + 2) * Wd, :] = jnp.zeros((Wd, 3 * C), bt)
    pad_ref[Wd:(Hd + 1) * Wd, 0:C] = right.astype(bt)
    pad_ref[Wd:(Hd + 1) * Wd, C:2 * C] = h_f32.astype(bt)
    pad_ref[Wd:(Hd + 1) * Wd, 2 * C:3 * C] = left.astype(bt)

    acc = None
    for kh in range(3):                                   # 3 MXU matmuls, K = 3*C
        p = jnp.dot(pad_ref[kh * Wd:kh * Wd + HW, :], w_ref[kh],
                    preferred_element_type=jnp.float32)
        acc = p if acc is None else acc + p
    return acc                                            # (Hd*Wd, Cout) f32


# ---------------------------------------------------------------------------
# Kernel: fused full block for stride == 1 (one image per grid step).
# ---------------------------------------------------------------------------
def _make_stride1_kernel(H, W, Cin, Cout, has_shortcut):
    def kernel(*refs):
        if has_shortcut:
            (x_ref, s0_ref, b0_ref, w0_ref, s1_ref, b1_ref, w1_ref, ws_ref,
             o_ref, pad0_ref, pad1_ref) = refs
        else:
            (x_ref, s0_ref, b0_ref, w0_ref, s1_ref, b1_ref, w1_ref,
             o_ref, pad0_ref, pad1_ref) = refs
            ws_ref = None

        x2 = x_ref[0].astype(jnp.float32)                         # (H*W, Cin)
        a = jnp.maximum(x2 * s0_ref[...] + b0_ref[...], 0.0)      # bn0 + relu (folded)

        acc0 = _conv3x3_same(a, H, W, pad0_ref, w0_ref)           # conv0
        h1 = jnp.maximum(acc0 * s1_ref[...] + b1_ref[...], 0.0)   # bn1 + relu
        acc1 = _conv3x3_same(h1, H, W, pad1_ref, w1_ref)          # conv1

        if has_shortcut:
            res = jnp.dot(a.astype(_MXU_DTYPE), ws_ref[...],
                          preferred_element_type=jnp.float32)     # 1x1 shortcut
        else:
            res = x2                                              # identity residual
        o_ref[0] = (acc1 + res).astype(o_ref.dtype)

    return kernel


def _block_stride1(x_nhwc, scale0, bias0, w0k, scale1, bias1, w1k, ws, out_dtype):
    N, H, W, Cin = x_nhwc.shape
    Cout = w1k.shape[-1]
    has_shortcut = ws is not None
    HW = H * W

    def _const(shape):
        nd = len(shape)
        return pl.BlockSpec(shape, lambda n, _nd=nd: (0,) * _nd)

    in_specs = [
        pl.BlockSpec((1, HW, Cin), lambda n: (n, 0, 0)),
        _const((1, Cin)), _const((1, Cin)),
        _const((3, 3 * Cin, Cout)),
        _const((1, Cout)), _const((1, Cout)),
        _const((3, 3 * Cout, Cout)),
    ]
    args = [x_nhwc.reshape(N, HW, Cin),
            scale0.reshape(1, Cin), bias0.reshape(1, Cin), w0k,
            scale1.reshape(1, Cout), bias1.reshape(1, Cout), w1k]
    if has_shortcut:
        in_specs.append(_const((Cin, Cout)))
        args.append(ws)

    out = pl.pallas_call(
        _make_stride1_kernel(H, W, Cin, Cout, has_shortcut),
        out_shape=jax.ShapeDtypeStruct((N, HW, Cout), out_dtype),
        grid=(N,),
        in_specs=in_specs,
        out_specs=pl.BlockSpec((1, HW, Cout), lambda n: (n, 0, 0)),
        scratch_shapes=[pltpu.VMEM(((H + 2) * W, 3 * Cin), _MXU_DTYPE),
                        pltpu.VMEM(((H + 2) * W, 3 * Cout), _MXU_DTYPE)],
        compiler_params=pltpu.CompilerParams(dimension_semantics=("parallel",)),
    )(*args)
    return out.reshape(N, H, W, Cout)


# ---------------------------------------------------------------------------
# Kernel: fused full block for stride == 2.  The wrapper supplies x already
# de-interleaved by row/column parity: (N, Ho, 2, Wo, 2*Cin) with lane blocks
# [even-column channels | odd-column channels]; everything else is in-kernel.
# ---------------------------------------------------------------------------
def _make_stride2_kernel(Ho, Wo, Cin, Cout):
    HWo = Ho * Wo

    def kernel(x_ref, s0_ref, b0_ref, w0_ref, s1_ref, b1_ref, w1_ref, ws_ref,
               o_ref, b2e_ref, b2o_ref, pad1_ref):
        bt = b2e_ref.dtype
        xv = x_ref[0].astype(jnp.float32)                         # (Ho, 2, Wo, 2*Cin)
        a = jnp.maximum(xv * s0_ref[...] + b0_ref[...], 0.0)      # bn0 + relu

        rows = lax.broadcasted_iota(jnp.int32, (HWo, 1), 0)
        last_col = (rows % Wo) == Wo - 1

        def kw_taps(ar):                                          # ar: (Ho, Wo, 2*Cin)
            e = ar[:, :, 0:Cin].reshape(HWo, Cin)                 # a[.., 2j,   :]
            o = ar[:, :, Cin:2 * Cin].reshape(HWo, Cin)           # a[.., 2j+1, :]
            e2 = jnp.where(last_col, jnp.zeros_like(e),
                           pltpu.roll(e, HWo - 1, axis=0))        # a[.., 2j+2, :]
            return e, o, e2

        # Even input rows (r = 2q): taps for kh = 0 and kh = 2.
        ee, oe, e2e = kw_taps(a[:, 0])
        b2e_ref[0:HWo, 0:Cin] = ee.astype(bt)
        b2e_ref[0:HWo, Cin:2 * Cin] = oe.astype(bt)
        b2e_ref[0:HWo, 2 * Cin:3 * Cin] = e2e.astype(bt)
        b2e_ref[HWo:HWo + Wo, :] = jnp.zeros((Wo, 3 * Cin), bt)   # bottom pad row (r = H)
        # Odd input rows (r = 2q+1): taps for kh = 1.
        eo, oo, e2o = kw_taps(a[:, 1])
        b2o_ref[:, 0:Cin] = eo.astype(bt)
        b2o_ref[:, Cin:2 * Cin] = oo.astype(bt)
        b2o_ref[:, 2 * Cin:3 * Cin] = e2o.astype(bt)

        # conv0 (stride 2): 3 MXU matmuls, contraction depth 3*Cin.
        taps = (b2e_ref[0:HWo, :], b2o_ref[...], b2e_ref[Wo:HWo + Wo, :])
        acc0 = None
        for kh in range(3):
            p = jnp.dot(taps[kh], w0_ref[kh], preferred_element_type=jnp.float32)
            acc0 = p if acc0 is None else acc0 + p

        h1 = jnp.maximum(acc0 * s1_ref[...] + b1_ref[...], 0.0)   # bn1 + relu
        acc1 = _conv3x3_same(h1, Ho, Wo, pad1_ref, w1_ref)        # conv1 (stride 1)

        # 1x1 / stride-2 shortcut on the activated input (even rows, even cols).
        res = jnp.dot(b2e_ref[0:HWo, 0:Cin], ws_ref[...],
                      preferred_element_type=jnp.float32)
        o_ref[0] = (acc1 + res).astype(o_ref.dtype)

    return kernel


def _block_stride2(x_eo, scale0eo, bias0eo, w0k, scale1, bias1, w1k, ws, out_dtype):
    N, Ho, _two, Wo, Cin2 = x_eo.shape
    Cin = Cin2 // 2
    Cout = w1k.shape[-1]
    HWo = Ho * Wo

    def _const(shape):
        nd = len(shape)
        return pl.BlockSpec(shape, lambda n, _nd=nd: (0,) * _nd)

    out = pl.pallas_call(
        _make_stride2_kernel(Ho, Wo, Cin, Cout),
        out_shape=jax.ShapeDtypeStruct((N, HWo, Cout), out_dtype),
        grid=(N,),
        in_specs=[
            pl.BlockSpec((1, Ho, 2, Wo, 2 * Cin), lambda n: (n, 0, 0, 0, 0)),
            _const((1, 2 * Cin)), _const((1, 2 * Cin)),
            _const((3, 3 * Cin, Cout)),
            _const((1, Cout)), _const((1, Cout)),
            _const((3, 3 * Cout, Cout)),
            _const((Cin, Cout)),
        ],
        out_specs=pl.BlockSpec((1, HWo, Cout), lambda n: (n, 0, 0)),
        scratch_shapes=[pltpu.VMEM(((Ho + 1) * Wo, 3 * Cin), _MXU_DTYPE),
                        pltpu.VMEM((HWo, 3 * Cin), _MXU_DTYPE),
                        pltpu.VMEM(((Ho + 2) * Wo, 3 * Cout), _MXU_DTYPE)],
        compiler_params=pltpu.CompilerParams(dimension_semantics=("parallel",)),
    )(x_eo, scale0eo.reshape(1, 2 * Cin), bias0eo.reshape(1, 2 * Cin), w0k,
      scale1.reshape(1, Cout), bias1.reshape(1, Cout), w1k, ws)
    return out.reshape(N, Ho, Wo, Cout)


# ---------------------------------------------------------------------------
# Wrapper: parameter folding + layout plumbing (pure JAX), all compute in Pallas.
# ---------------------------------------------------------------------------
def _dense_conv_weight(w_oihw, groups):
    """PyTorch (Cout, Cin//g, KH, KW) grouped weight -> dense (KH, KW, Cin, Cout)."""
    Cout, Cin_g, KH, KW = w_oihw.shape
    Cin = Cin_g * groups
    opg = Cout // groups
    dense = jnp.zeros((KH, KW, Cin, Cout), jnp.float32)
    for g in range(groups):
        blk = jnp.transpose(w_oihw[g * opg:(g + 1) * opg].astype(jnp.float32),
                            (2, 3, 1, 0))                 # (KH, KW, Cin_g, opg)
        dense = dense.at[:, :, g * Cin_g:(g + 1) * Cin_g,
                         g * opg:(g + 1) * opg].set(blk)
    return dense


def block_forward(x_nchw, params, *, stride, groups):
    N, Cin, H, W = x_nchw.shape
    w0 = params["conv0_w"]
    w1 = params["conv1_w"]
    Cout = w0.shape[0]
    has_shortcut = params["shortcut_w"] is not None

    g0, b0, m0, v0 = params["bn0"]
    g1, b1, m1, v1 = params["bn1"]
    # Fold BN (eval mode) into f32 scale/bias: no divide / sqrt inside the kernel.
    scale0 = (g0 / jnp.sqrt(v0 + _BN_EPS)).astype(jnp.float32)
    bias0 = (b0 - m0 * scale0).astype(jnp.float32)
    scale1 = (g1 / jnp.sqrt(v1 + _BN_EPS)).astype(jnp.float32)
    bias1 = (b1 - m1 * scale1).astype(jnp.float32)

    # bf16 MXU weights with the three kw taps folded into the contraction axis.
    w0k = _dense_conv_weight(w0, groups).reshape(3, 3 * Cin, Cout).astype(_MXU_DTYPE)
    w1k = _dense_conv_weight(w1, groups).reshape(3, 3 * Cout, Cout).astype(_MXU_DTYPE)
    ws = None
    if has_shortcut:
        ws = jnp.transpose(params["shortcut_w"][:, :, 0, 0], (1, 0)).astype(_MXU_DTYPE)

    out_dtype = x_nchw.dtype
    if stride == 1:
        # TODO(synk): keep the surrounding network NHWC end-to-end to drop this transpose.
        x_nhwc = jnp.transpose(x_nchw, (0, 2, 3, 1))      # native dtype, cast in-kernel
        out_nhwc = _block_stride1(x_nhwc, scale0, bias0, w0k, scale1, bias1, w1k,
                                  ws, out_dtype)
        return jnp.transpose(out_nhwc, (0, 3, 1, 2))
    elif stride == 2:
        assert has_shortcut, "stride=2 requires in_planes != out_planes (shortcut)"
        assert H % 2 == 0 and W % 2 == 0
        Ho, Wo = H // 2, W // 2
        # Single layout transpose (same cost class as plain NCHW->NHWC) that also
        # de-interleaves row/column parity -> no strided gathers inside the kernel.
        x_eo = jnp.transpose(x_nchw.reshape(N, Cin, Ho, 2, Wo, 2),
                             (0, 2, 3, 4, 5, 1)).reshape(N, Ho, 2, Wo, 2 * Cin)
        scale0eo = jnp.concatenate([scale0, scale0])
        bias0eo = jnp.concatenate([bias0, bias0])
        out_nhwc = _block_stride2(x_eo, scale0eo, bias0eo, w0k, scale1, bias1, w1k,
                                  ws, out_dtype)
        return jnp.transpose(out_nhwc, (0, 3, 1, 2))
    else:
        raise ValueError("Unsupported `stride`.")


# ---------------------------------------------------------------------------
# Pure-JAX reference (mirrors the PyTorch module, eval-mode BN).
# ---------------------------------------------------------------------------
def _bn_eval(x, gamma, beta, mean, var):
    inv = gamma / jnp.sqrt(var + _BN_EPS)
    return x * inv[None, :, None, None] + (beta - mean * inv)[None, :, None, None]


def block_forward_ref(x, params, *, stride, groups, mxu_dtype=None):
    """If mxu_dtype is given, conv/matmul operands are rounded to it first (mirrors
    the kernel's bf16 MXU inputs with f32 accumulation)."""
    def q(t):
        return t.astype(mxu_dtype).astype(jnp.float32) if mxu_dtype is not None else t

    g0, b0, m0, v0 = params["bn0"]
    g1, b1, m1, v1 = params["bn1"]
    w0, w1 = params["conv0_w"], params["conv1_w"]
    has_shortcut = params["shortcut_w"] is not None
    dn = ("NCHW", "OIHW", "NCHW")
    hi = lax.Precision.HIGHEST

    a = jax.nn.relu(_bn_eval(x, g0, b0, m0, v0))
    aq = q(a)
    if stride == 1:
        v = jnp.pad(aq, ((0, 0), (0, 0), (1, 1), (1, 1)))
    else:
        v = jnp.pad(aq, ((0, 0), (0, 0), (0, 1), (0, 1)))
    out = lax.conv_general_dilated(v, q(w0), (stride, stride), "VALID",
                                   dimension_numbers=dn, feature_group_count=groups,
                                   precision=hi)
    out = jax.nn.relu(_bn_eval(out, g1, b1, m1, v1))
    out = lax.conv_general_dilated(q(out), q(w1), (1, 1), ((1, 1), (1, 1)),
                                   dimension_numbers=dn, feature_group_count=groups,
                                   precision=hi)
    if has_shortcut:
        res = lax.conv_general_dilated(aq, q(params["shortcut_w"]), (stride, stride),
                                       "VALID", dimension_numbers=dn, precision=hi)
    else:
        res = x
    return res + out


# ---------------------------------------------------------------------------
# Deterministic parameter construction + self-test.
# ---------------------------------------------------------------------------
def _make_bn(key, c):
    k1, k2, k3, k4 = jax.random.split(key, 4)
    gamma = jax.random.uniform(k1, (c,), jnp.float32, 0.5, 1.5)
    beta = jax.random.normal(k2, (c,), jnp.float32) * 0.1
    mean = jax.random.normal(k3, (c,), jnp.float32) * 0.1
    var = jax.random.uniform(k4, (c,), jnp.float32, 0.5, 1.5)
    return (gamma, beta, mean, var)


def _make_params(key, cin, cout, groups):
    k0, k1, k2, k3, k4 = jax.random.split(key, 5)
    return {
        "bn0": _make_bn(k0, cin),
        "conv0_w": jax.random.normal(k1, (cout, cin // groups, 3, 3), jnp.float32) * 0.1,
        "bn1": _make_bn(k2, cout),
        "conv1_w": jax.random.normal(k3, (cout, cout // groups, 3, 3), jnp.float32) * 0.1,
        "shortcut_w": (jax.random.normal(k4, (cout, cin, 1, 1), jnp.float32) * 0.1
                       if cin != cout else None),
    }


if __name__ == "__main__":
    root = jax.random.PRNGKey(0)
    configs = [
        dict(N=2, H=16, W=16, cin=8, cout=16, stride=1, groups=1),  # shortcut, fused kernel
        dict(N=2, H=16, W=16, cin=8, cout=8, stride=1, groups=1),   # identity residual
        dict(N=2, H=16, W=16, cin=8, cout=16, stride=2, groups=2),  # downsample + grouped conv
    ]
    keys = jax.random.split(root, 2 * len(configs))
    for idx, cfg in enumerate(configs):
        kx, kp = keys[2 * idx], keys[2 * idx + 1]
        x = jax.random.normal(kx, (cfg["N"], cfg["cin"], cfg["H"], cfg["W"]), jnp.float32)
        params = _make_params(kp, cfg["cin"], cfg["cout"], cfg["groups"])

        out = block_forward(x, params, stride=cfg["stride"], groups=cfg["groups"])
        out = jax.block_until_ready(out)

        # Reference with conv operands rounded to bf16 (like the kernel's MXU inputs,
        # f32 accumulation both sides) -> differences are summation-order only.
        ref = block_forward_ref(x, params, stride=cfg["stride"], groups=cfg["groups"],
                                mxu_dtype=_MXU_DTYPE)
        assert out.shape == ref.shape and out.dtype == ref.dtype
        assert jnp.allclose(out, ref, atol=5e-3, rtol=5e-3), \
            float(jnp.max(jnp.abs(out - ref)))

    print("KERNEL_OK")
</pallas_src>

<mosaic_0001>
module attributes {stable_mosaic.version = 11 : i64} {
  func.func @kernel(%arg0: i32, %arg1: memref<1x256x8xf32, #tpu.memory_space<vmem>>, %arg2: memref<1x8xf32, #tpu.memory_space<vmem>>, %arg3: memref<1x8xf32, #tpu.memory_space<vmem>>, %arg4: memref<3x24x16xbf16, #tpu.memory_space<vmem>>, %arg5: memref<1x16xf32, #tpu.memory_space<vmem>>, %arg6: memref<1x16xf32, #tpu.memory_space<vmem>>, %arg7: memref<3x48x16xbf16, #tpu.memory_space<vmem>>, %arg8: memref<8x16xbf16, #tpu.memory_space<vmem>>, %arg9: memref<1x256x16xf32, #tpu.memory_space<vmem>>, %arg10: memref<288x24xbf16, #tpu.memory_space<vmem>>, %arg11: memref<288x48xbf16, #tpu.memory_space<vmem>>) attributes {dimension_semantics = [#tpu.dimension_semantics<parallel>], iteration_bounds = array<i64: 2>, scalar_prefetch = 0 : i64, scratch_operands = 2 : i64, tpu.core_type = #tpu.core_type<tc>, window_params = [{transform_indices = @transform_0, window_bounds = array<i64: 1, 256, 8>}, {pipeline_mode = #tpu.pipeline_mode<synchronous>, transform_indices = @transform_1, window_bounds = array<i64: 1, 8>}, {pipeline_mode = #tpu.pipeline_mode<synchronous>, transform_indices = @transform_2, window_bounds = array<i64: 1, 8>}, {pipeline_mode = #tpu.pipeline_mode<synchronous>, transform_indices = @transform_3, window_bounds = array<i64: 3, 24, 16>}, {pipeline_mode = #tpu.pipeline_mode<synchronous>, transform_indices = @transform_4, window_bounds = array<i64: 1, 16>}, {pipeline_mode = #tpu.pipeline_mode<synchronous>, transform_indices = @transform_5, window_bounds = array<i64: 1, 16>}, {pipeline_mode = #tpu.pipeline_mode<synchronous>, transform_indices = @transform_6, window_bounds = array<i64: 3, 48, 16>}, {pipeline_mode = #tpu.pipeline_mode<synchronous>, transform_indices = @transform_7, window_bounds = array<i64: 8, 16>}, {transform_indices = @transform_8, window_bounds = array<i64: 1, 256, 16>}]} {
    %c0 = arith.constant 0 : index
    %c0_0 = arith.constant 0 : index
    %c0_1 = arith.constant 0 : index
    %0 = vector.load %arg1[%c0, %c0_0, %c0_1] : memref<1x256x8xf32, #tpu.memory_space<vmem>>, vector<1x256x8xf32>
    %1 = vector.shape_cast %0 : vector<1x256x8xf32> to vector<256x8xf32>
    %c0_2 = arith.constant 0 : index
    %c0_3 = arith.constant 0 : index
    %2 = vector.load %arg2[%c0_2, %c0_3] : memref<1x8xf32, #tpu.memory_space<vmem>>, vector<1x8xf32>
    %3 = vector.broadcast %2 : vector<1x8xf32> to vector<256x8xf32>
    %4 = arith.mulf %1, %3 : vector<256x8xf32>
    %c0_4 = arith.constant 0 : index
    %c0_5 = arith.constant 0 : index
    %5 = vector.load %arg3[%c0_4, %c0_5] : memref<1x8xf32, #tpu.memory_space<vmem>>, vector<1x8xf32>
    %6 = vector.broadcast %5 : vector<1x8xf32> to vector<256x8xf32>
    %7 = arith.addf %4, %6 : vector<256x8xf32>
    %cst = arith.constant 0.000000e+00 : f32
    %8 = vector.broadcast %cst : f32 to vector<256x8xf32>
    %9 = arith.maximumf %7, %8 : vector<256x8xf32>
    %10 = tpu.iota {dimensions = array<i32: 0>} : vector<256x1xi32>
    %c16_i32 = arith.constant 16 : i32
    %c0_i32 = arith.constant 0 : i32
    %11 = arith.cmpi eq, %c16_i32, %c0_i32 : i32
    %c1_i32 = arith.constant 1 : i32
    %12 = arith.select %11, %c1_i32, %c16_i32 : i32
    %13 = vector.broadcast %12 : i32 to vector<256x1xi32>
    %14 = arith.remsi %10, %13 : vector<256x1xi32>
    %c0_i32_6 = arith.constant 0 : i32
    %15 = vector.broadcast %c0_i32_6 : i32 to vector<256x1xi32>
    %16 = arith.cmpi ne, %14, %15 : vector<256x1xi32>
    %c0_i32_7 = arith.constant 0 : i32
    %17 = vector.broadcast %c0_i32_7 : i32 to vector<256x1xi32>
    %18 = arith.cmpi slt, %14, %17 : vector<256x1xi32>
    %c0_i32_8 = arith.constant 0 : i32
    %19 = arith.cmpi slt, %12, %c0_i32_8 : i32
    %20 = vector.broadcast %19 : i1 to vector<256x1xi1>
    %21 = vector.broadcast %20 : vector<256x1xi1> to vector<256x1xi1>
    %22 = arith.xori %18, %21 : vector<256x1xi1>
    %23 = arith.andi %22, %16 : vector<256x1xi1>
    %24 = vector.broadcast %12 : i32 to vector<256x1xi32>
    %25 = arith.addi %14, %24 : vector<256x1xi32>
    %26 = arith.select %23, %25, %14 : vector<256x1xi1>, vector<256x1xi32>
    %cst_9 = arith.constant 0.000000e+00 : f32
    %27 = vector.broadcast %cst_9 : f32 to vector<256x8xf32>
    %c0_i32_10 = arith.constant 0 : i32
    %28 = vector.broadcast %c0_i32_10 : i32 to vector<256x1xi32>
    %29 = arith.cmpi eq, %26, %28 : vector<256x1xi32>
    %c1_i32_11 = arith.constant 1 : i32
    %30 = tpu.dynamic_rotate %9 by %c1_i32_11 dim 0 : vector<256x8xf32>, i32 -> vector<256x8xf32>
    %31 = vector.shape_cast %29 : vector<256x1xi1> to vector<256x1xi1>
    %32 = vector.broadcast %31 : vector<256x1xi1> to vector<256x8xi1>
    %33 = arith.select %32, %27, %30 : vector<256x8xi1>, vector<256x8xf32>
    %c15_i32 = arith.constant 15 : i32
    %34 = vector.broadcast %c15_i32 : i32 to vector<256x1xi32>
    %35 = arith.cmpi eq, %26, %34 : vector<256x1xi32>
    %c255_i32 = arith.constant 255 : i32
    %36 = tpu.dynamic_rotate %9 by %c255_i32 dim 0 : vector<256x8xf32>, i32 -> vector<256x8xf32>
    %37 = vector.shape_cast %35 : vector<256x1xi1> to vector<256x1xi1>
    %38 = vector.broadcast %37 : vector<256x1xi1> to vector<256x8xi1>
    %39 = arith.select %38, %27, %36 : vector<256x8xi1>, vector<256x8xf32>
    %cst_12 = arith.constant 0.000000e+00 : bf16
    %40 = vector.broadcast %cst_12 : bf16 to vector<16x24xbf16>
    %c0_13 = arith.constant 0 : index
    %c0_14 = arith.constant 0 : index
    %41 = vector.load %arg10[%c0_13, %c0_14] : memref<288x24xbf16, #tpu.memory_space<vmem>>, vector<16x24xbf16>
    tpu.vector_store %arg10[%c0_13, %c0_14], %40 {strides = array<i32>} : memref<288x24xbf16, #tpu.memory_space<vmem>>, vector<16x24xbf16>,
    %cst_15 = arith.constant 0.000000e+00 : bf16
    %42 = vector.broadcast %cst_15 : bf16 to vector<16x24xbf16>
    %c272 = arith.constant 272 : index
    %c0_16 = arith.constant 0 : index
    %43 = vector.load %arg10[%c272, %c0_16] : memref<288x24xbf16, #tpu.memory_space<vmem>>, vector<16x24xbf16>
    tpu.vector_store %arg10[%c272, %c0_16], %42 {strides = array<i32>} : memref<288x24xbf16, #tpu.memory_space<vmem>>, vector<16x24xbf16>,
    %44 = arith.truncf %33 : vector<256x8xf32> to vector<256x8xbf16>
    %c16 = arith.constant 16 : index
    %c0_17 = arith.constant 0 : index
    %45 = vector.load %arg10[%c16, %c0_17] : memref<288x24xbf16, #tpu.memory_space<vmem>>, vector<256x8xbf16>
    tpu.vector_store %arg10[%c16, %c0_17], %44 {strides = array<i32>} : memref<288x24xbf16, #tpu.memory_space<vmem>>, vector<256x8xbf16>,
    %46 = arith.truncf %9 : vector<256x8xf32> to vector<256x8xbf16>
    %c16_18 = arith.constant 16 : index
    %c8 = arith.constant 8 : index
    %47 = vector.load %arg10[%c16_18, %c8] : memref<288x24xbf16, #tpu.memory_space<vmem>>, vector<256x8xbf16>
    tpu.vector_store %arg10[%c16_18, %c8], %46 {strides = array<i32>} : memref<288x24xbf16, #tpu.memory_space<vmem>>, vector<256x8xbf16>,
    %48 = arith.truncf %39 : vector<256x8xf32> to vector<256x8xbf16>
    %c16_19 = arith.constant 16 : index
    %c16_20 = arith.constant 16 : index
    %49 = vector.load %arg10[%c16_19, %c16_20] : memref<288x24xbf16, #tpu.memory_space<vmem>>, vector<256x8xbf16>
    tpu.vector_store %arg10[%c16_19, %c16_20], %48 {strides = array<i32>} : memref<288x24xbf16, #tpu.memory_space<vmem>>, vector<256x8xbf16>,
    %c0_21 = arith.constant 0 : index
    %c0_22 = arith.constant 0 : index
    %50 = vector.load %arg10[%c0_21, %c0_22] : memref<288x24xbf16, #tpu.memory_space<vmem>>, vector<256x24xbf16>
    %c0_23 = arith.constant 0 : index
    %c0_24 = arith.constant 0 : index
    %c0_25 = arith.constant 0 : index
    %51 = vector.load %arg4[%c0_23, %c0_24, %c0_25] : memref<3x24x16xbf16, #tpu.memory_space<vmem>>, vector<1x24x16xbf16>
    %52 = vector.shape_cast %51 : vector<1x24x16xbf16> to vector<24x16xbf16>
    %cst_26 = arith.constant dense<0.000000e+00> : vector<256x16xf32>
    %53 = tpu.matmul %50, %52, %cst_26 {dimension_numbers = #tpu.dot_dimension_numbers<[1], [0], [0], [1], [0, 0, 1, 1], [], []>} : vector<256x24xbf16>, vector<24x16xbf16>, vector<256x16xf32> -> vector<256x16xf32>
    %c16_27 = arith.constant 16 : index
    %c0_28 = arith.constant 0 : index
    %54 = vector.load %arg10[%c16_27, %c0_28] : memref<288x24xbf16, #tpu.memory_space<vmem>>, vector<256x24xbf16>
    %c1 = arith.constant 1 : index
    %c0_29 = arith.constant 0 : index
    %c0_30 = arith.constant 0 : index
    %55 = vector.load %arg4[%c1, %c0_29, %c0_30] : memref<3x24x16xbf16, #tpu.memory_space<vmem>>, vector<1x24x16xbf16>
    %56 = vector.shape_cast %55 : vector<1x24x16xbf16> to vector<24x16xbf16>
    %cst_31 = arith.constant dense<0.000000e+00> : vector<256x16xf32>
    %57 = tpu.matmul %54, %56, %cst_31 {dimension_numbers = #tpu.dot_dimension_numbers<[1], [0], [0], [1], [0, 0, 1, 1], [], []>} : vector<256x24xbf16>, vector<24x16xbf16>, vector<256x16xf32> -> vector<256x16xf32>
    %58 = arith.addf %53, %57 : vector<256x16xf32>
    %c32 = arith.constant 32 : index
    %c0_32 = arith.constant 0 : index
    %59 = vector.load %arg10[%c32, %c0_32] : memref<288x24xbf16, #tpu.memory_space<vmem>>, vector<256x24xbf16>
    %c2 = arith.constant 2 : index
    %c0_33 = arith.constant 0 : index
    %c0_34 = arith.constant 0 : index
    %60 = vector.load %arg4[%c2, %c0_33, %c0_34] : memref<3x24x16xbf16, #tpu.memory_space<vmem>>, vector<1x24x16xbf16>
    %61 = vector.shape_cast %60 : vector<1x24x16xbf16> to vector<24x16xbf16>
    %cst_35 = arith.constant dense<0.000000e+00> : vector<256x16xf32>
    %62 = tpu.matmul %59, %61, %cst_35 {dimension_numbers = #tpu.dot_dimension_numbers<[1], [0], [0], [1], [0, 0, 1, 1], [], []>} : vector<256x24xbf16>, vector<24x16xbf16>, vector<256x16xf32> -> vector<256x16xf32>
    %63 = arith.addf %58, %62 : vector<256x16xf32>
    %c0_36 = arith.constant 0 : index
    %c0_37 = arith.constant 0 : index
    %64 = vector.load %arg5[%c0_36, %c0_37] : memref<1x16xf32, #tpu.memory_space<vmem>>, vector<1x16xf32>
    %65 = vector.broadcast %64 : vector<1x16xf32> to vector<256x16xf32>
    %66 = arith.mulf %63, %65 : vector<256x16xf32>
    %c0_38 = arith.constant 0 : index
    %c0_39 = arith.constant 0 : index
    %67 = vector.load %arg6[%c0_38, %c0_39] : memref<1x16xf32, #tpu.memory_space<vmem>>, vector<1x16xf32>
    %68 = vector.broadcast %67 : vector<1x16xf32> to vector<256x16xf32>
    %69 = arith.addf %66, %68 : vector<256x16xf32>
    %cst_40 = arith.constant 0.000000e+00 : f32
    %70 = vector.broadcast %cst_40 : f32 to vector<256x16xf32>
    %71 = arith.maximumf %69, %70 : vector<256x16xf32>
    %72 = tpu.iota {dimensions = array<i32: 0>} : vector<256x1xi32>
    %c16_i32_41 = arith.constant 16 : i32
    %c0_i32_42 = arith.constant 0 : i32
    %73 = arith.cmpi eq, %c16_i32_41, %c0_i32_42 : i32
    %c1_i32_43 = arith.constant 1 : i32
    %74 = arith.select %73, %c1_i32_43, %c16_i32_41 : i32
    %75 = vector.broadcast %74 : i32 to vector<256x1xi32>
    %76 = arith.remsi %72, %75 : vector<256x1xi32>
    %c0_i32_44 = arith.constant 0 : i32
    %77 = vector.broadcast %c0_i32_44 : i32 to vector<256x1xi32>
    %78 = arith.cmpi ne, %76, %77 : vector<256x1xi32>
    %c0_i32_45 = arith.constant 0 : i32
    %79 = vector.broadcast %c0_i32_45 : i32 to vector<256x1xi32>
    %80 = arith.cmpi slt, %76, %79 : vector<256x1xi32>
    %c0_i32_46 = arith.constant 0 : i32
    %81 = arith.cmpi slt, %74, %c0_i32_46 : i32
    %82 = vector.broadcast %81 : i1 to vector<256x1xi1>
    %83 = vector.broadcast %82 : vector<256x1xi1> to vector<256x1xi1>
    %84 = arith.xori %80, %83 : vector<256x1xi1>
    %85 = arith.andi %84, %78 : vector<256x1xi1>
    %86 = vector.broadcast %74 : i32 to vector<256x1xi32>
    %87 = arith.addi %76, %86 : vector<256x1xi32>
    %88 = arith.select %85, %87, %76 : vector<256x1xi1>, vector<256x1xi32>
    %cst_47 = arith.constant 0.000000e+00 : f32
    %89 = vector.broadcast %cst_47 : f32 to vector<256x16xf32>
    %c0_i32_48 = arith.constant 0 : i32
    %90 = vector.broadcast %c0_i32_48 : i32 to vector<256x1xi32>
    %91 = arith.cmpi eq, %88, %90 : vector<256x1xi32>
    %c1_i32_49 = arith.constant 1 : i32
    %92 = tpu.dynamic_rotate %71 by %c1_i32_49 dim 0 : vector<256x16xf32>, i32 -> vector<256x16xf32>
    %93 = vector.shape_cast %91 : vector<256x1xi1> to vector<256x1xi1>
    %94 = vector.broadcast %93 : vector<256x1xi1> to vector<256x16xi1>
    %95 = arith.select %94, %89, %92 : vector<256x16xi1>, vector<256x16xf32>
    %c15_i32_50 = arith.constant 15 : i32
    %96 = vector.broadcast %c15_i32_50 : i32 to vector<256x1xi32>
    %97 = arith.cmpi eq, %88, %96 : vector<256x1xi32>
    %c255_i32_51 = arith.constant 255 : i32
    %98 = tpu.dynamic_rotate %71 by %c255_i32_51 dim 0 : vector<256x16xf32>, i32 -> vector<256x16xf32>
    %99 = vector.shape_cast %97 : vector<256x1xi1> to vector<256x1xi1>
    %100 = vector.broadcast %99 : vector<256x1xi1> to vector<256x16xi1>
    %101 = arith.select %100, %89, %98 : vector<256x16xi1>, vector<256x16xf32>
    %cst_52 = arith.constant 0.000000e+00 : bf16
    %102 = vector.broadcast %cst_52 : bf16 to vector<16x48xbf16>
    %c0_53 = arith.constant 0 : index
    %c0_54 = arith.constant 0 : index
    %103 = vector.load %arg11[%c0_53, %c0_54] : memref<288x48xbf16, #tpu.memory_space<vmem>>, vector<16x48xbf16>
    tpu.vector_store %arg11[%c0_53, %c0_54], %102 {strides = array<i32>} : memref<288x48xbf16, #tpu.memory_space<vmem>>, vector<16x48xbf16>,
    %cst_55 = arith.constant 0.000000e+00 : bf16
    %104 = vector.broadcast %cst_55 : bf16 to vector<16x48xbf16>
    %c272_56 = arith.constant 272 : index
    %c0_57 = arith.constant 0 : index
    %105 = vector.load %arg11[%c272_56, %c0_57] : memref<288x48xbf16, #tpu.memory_space<vmem>>, vector<16x48xbf16>
    tpu.vector_store %arg11[%c272_56, %c0_57], %104 {strides = array<i32>} : memref<288x48xbf16, #tpu.memory_space<vmem>>, vector<16x48xbf16>,
    %106 = arith.truncf %95 : vector<256x16xf32> to vector<256x16xbf16>
    %c16_58 = arith.constant 16 : index
    %c0_59 = arith.constant 0 : index
    %107 = vector.load %arg11[%c16_58, %c0_59] : memref<288x48xbf16, #tpu.memory_space<vmem>>, vector<256x16xbf16>
    tpu.vector_store %arg11[%c16_58, %c0_59], %106 {strides = array<i32>} : memref<288x48xbf16, #tpu.memory_space<vmem>>, vector<256x16xbf16>,
    %108 = arith.truncf %71 : vector<256x16xf32> to vector<256x16xbf16>
    %c16_60 = arith.constant 16 : index
    %c16_61 = arith.constant 16 : index
    %109 = vector.load %arg11[%c16_60, %c16_61] : memref<288x48xbf16, #tpu.memory_space<vmem>>, vector<256x16xbf16>
    tpu.vector_store %arg11[%c16_60, %c16_61], %108 {strides = array<i32>} : memref<288x48xbf16, #tpu.memory_space<vmem>>, vector<256x16xbf16>,
    %110 = arith.truncf %101 : vector<256x16xf32> to vector<256x16xbf16>
    %c16_62 = arith.constant 16 : index
    %c32_63 = arith.constant 32 : index
    %111 = vector.load %arg11[%c16_62, %c32_63] : memref<288x48xbf16, #tpu.memory_space<vmem>>, vector<256x16xbf16>
    tpu.vector_store %arg11[%c16_62, %c32_63], %110 {strides = array<i32>} : memref<288x48xbf16, #tpu.memory_space<vmem>>, vector<256x16xbf16>,
    %c0_64 = arith.constant 0 : index
    %c0_65 = arith.constant 0 : index
    %112 = vector.load %arg11[%c0_64, %c0_65] : memref<288x48xbf16, #tpu.memory_space<vmem>>, vector<256x48xbf16>
    %c0_66 = arith.constant 0 : index
    %c0_67 = arith.constant 0 : index
    %c0_68 = arith.constant 0 : index
    %113 = vector.load %arg7[%c0_66, %c0_67, %c0_68] : memref<3x48x16xbf16, #tpu.memory_space<vmem>>, vector<1x48x16xbf16>
    %114 = vector.shape_cast %113 : vector<1x48x16xbf16> to vector<48x16xbf16>
    %cst_69 = arith.constant dense<0.000000e+00> : vector<256x16xf32>
    %115 = tpu.matmul %112, %114, %cst_69 {dimension_numbers = #tpu.dot_dimension_numbers<[1], [0], [0], [1], [0, 0, 1, 1], [], []>} : vector<256x48xbf16>, vector<48x16xbf16>, vector<256x16xf32> -> vector<256x16xf32>
    %c16_70 = arith.constant 16 : index
    %c0_71 = arith.constant 0 : index
    %116 = vector.load %arg11[%c16_70, %c0_71] : memref<288x48xbf16, #tpu.memory_space<vmem>>, vector<256x48xbf16>
    %c1_72 = arith.constant 1 : index
    %c0_73 = arith.constant 0 : index
    %c0_74 = arith.constant 0 : index
    %117 = vector.load %arg7[%c1_72, %c0_73, %c0_74] : memref<3x48x16xbf16, #tpu.memory_space<vmem>>, vector<1x48x16xbf16>
    %118 = vector.shape_cast %117 : vector<1x48x16xbf16> to vector<48x16xbf16>
    %cst_75 = arith.constant dense<0.000000e+00> : vector<256x16xf32>
    %119 = tpu.matmul %116, %118, %cst_75 {dimension_numbers = #tpu.dot_dimension_numbers<[1], [0], [0], [1], [0, 0, 1, 1], [], []>} : vector<256x48xbf16>, vector<48x16xbf16>, vector<256x16xf32> -> vector<256x16xf32>
    %120 = arith.addf %115, %119 : vector<256x16xf32>
    %c32_76 = arith.constant 32 : index
    %c0_77 = arith.constant 0 : index
    %121 = vector.load %arg11[%c32_76, %c0_77] : memref<288x48xbf16, #tpu.memory_space<vmem>>, vector<256x48xbf16>
    %c2_78 = arith.constant 2 : index
    %c0_79 = arith.constant 0 : index
    %c0_80 = arith.constant 0 : index
    %122 = vector.load %arg7[%c2_78, %c0_79, %c0_80] : memref<3x48x16xbf16, #tpu.memory_space<vmem>>, vector<1x48x16xbf16>
    %123 = vector.shape_cast %122 : vector<1x48x16xbf16> to vector<48x16xbf16>
    %cst_81 = arith.constant dense<0.000000e+00> : vector<256x16xf32>
    %124 = tpu.matmul %121, %123, %cst_81 {dimension_numbers = #tpu.dot_dimension_numbers<[1], [0], [0], [1], [0, 0, 1, 1], [], []>} : vector<256x48xbf16>, vector<48x16xbf16>, vector<256x16xf32> -> vector<256x16xf32>
    %125 = arith.addf %120, %124 : vector<256x16xf32>
    %126 = arith.truncf %9 : vector<256x8xf32> to vector<256x8xbf16>
    %c0_82 = arith.constant 0 : index
    %c0_83 = arith.constant 0 : index
    %127 = vector.load %arg8[%c0_82, %c0_83] : memref<8x16xbf16, #tpu.memory_space<vmem>>, vector<8x16xbf16>
    %cst_84 = arith.constant dense<0.000000e+00> : vector<256x16xf32>
    %128 = tpu.matmul %126, %127, %cst_84 {dimension_numbers = #tpu.dot_dimension_numbers<[1], [0], [0], [1], [0, 0, 1, 1], [], []>} : vector<256x8xbf16>, vector<8x16xbf16>, vector<256x16xf32> -> vector<256x16xf32>
    %129 = arith.addf %125, %128 : vector<256x16xf32>
    %c0_85 = arith.constant 0 : index
    %c0_86 = arith.constant 0 : index
    %c0_87 = arith.constant 0 : index
    %130 = vector.load %arg9[%c0_85, %c0_86, %c0_87] : memref<1x256x16xf32, #tpu.memory_space<vmem>>, vector<1x256x16xf32>
    %131 = vector.shape_cast %130 : vector<1x256x16xf32> to vector<256x16xf32>
    %132 = vector.shape_cast %129 : vector<256x16xf32> to vector<1x256x16xf32>
    tpu.vector_store %arg9[%c0_85, %c0_86, %c0_87], %132 {strides = array<i32>} : memref<1x256x16xf32, #tpu.memory_space<vmem>>, vector<1x256x16xf32>,
    return
  }
  func.func @transform_0(%arg0: i32) -> (i32, i32, i32) {
    %c0_i32 = arith.constant 0 : i32
    %c0_i32_0 = arith.constant 0 : i32
    %c0_i32_1 = arith.constant 0 : i32
    return %arg0, %c0_i32, %c0_i32_0 : i32, i32, i32
  }
  func.func @transform_1(%arg0: i32) -> (i32, i32) {
    %c0_i32 = arith.constant 0 : i32
    %c0_i32_0 = arith.constant 0 : i32
    %c0_i32_1 = arith.constant 0 : i32
    return %c0_i32, %c0_i32_0 : i32, i32
  }
  func.func @transform_2(%arg0: i32) -> (i32, i32) {
    %c0_i32 = arith.constant 0 : i32
    %c0_i32_0 = arith.constant 0 : i32
    %c0_i32_1 = arith.constant 0 : i32
    return %c0_i32, %c0_i32_0 : i32, i32
  }
  func.func @transform_3(%arg0: i32) -> (i32, i32, i32) {
    %c0_i32 = arith.constant 0 : i32
    %c0_i32_0 = arith.constant 0 : i32
    %c0_i32_1 = arith.constant 0 : i32
    %c0_i32_2 = arith.constant 0 : i32
    return %c0_i32, %c0_i32_0, %c0_i32_1 : i32, i32, i32
  }
  func.func @transform_4(%arg0: i32) -> (i32, i32) {
    %c0_i32 = arith.constant 0 : i32
    %c0_i32_0 = arith.constant 0 : i32
    %c0_i32_1 = arith.constant 0 : i32
    return %c0_i32, %c0_i32_0 : i32, i32
  }
  func.func @transform_5(%arg0: i32) -> (i32, i32) {
    %c0_i32 = arith.constant 0 : i32
    %c0_i32_0 = arith.constant 0 : i32
    %c0_i32_1 = arith.constant 0 : i32
    return %c0_i32, %c0_i32_0 : i32, i32
  }
  func.func @transform_6(%arg0: i32) -> (i32, i32, i32) {
    %c0_i32 = arith.constant 0 : i32
    %c0_i32_0 = arith.constant 0 : i32
    %c0_i32_1 = arith.constant 0 : i32
    %c0_i32_2 = arith.constant 0 : i32
    return %c0_i32, %c0_i32_0, %c0_i32_1 : i32, i32, i32
  }
  func.func @transform_7(%arg0: i32) -> (i32, i32) {
    %c0_i32 = arith.constant 0 : i32
    %c0_i32_0 = arith.constant 0 : i32
    %c0_i32_1 = arith.constant 0 : i32
    return %c0_i32, %c0_i32_0 : i32, i32
  }
  func.func @transform_8(%arg0: i32) -> (i32, i32, i32) {
    %c0_i32 = arith.constant 0 : i32
    %c0_i32_0 = arith.constant 0 : i32
    %c0_i32_1 = arith.constant 0 : i32
    return %arg0, %c0_i32, %c0_i32_0 : i32, i32, i32
  }
}

</mosaic_0001>

<llo_original>
// kernel: tpu_custom_call.1
$region0: #{tpu_custom_call.1}
  #allocation0 [shape = 'u32[]', space=smem, size = 0x4, offset = 0x4, fixed_abs, tag = 'smem constant byte address 0x4 - core index']
  #allocation1 [shape = 'u32[144,128]{1,0:T(1,128)}', space=vmem, size = 0x12000, scoped, tag = 'internal scratch']
  #allocation2 [shape = 'bf16[288,24]{1,0:T(8,128)(2,1)}', space=vmem, size = 0x12000, scoped, tag = 'scratch operand']
  #allocation3 [shape = 'bf16[288,48]{1,0:T(8,128)(2,1)}', space=vmem, size = 0x12000, scoped, tag = 'scratch operand']
  %s0 = inlined_call_operand.vmem [shape: f32[2,256,8], index: 0, kind: input, shape index: {}]
  %s1 = inlined_call_operand.vmem [shape: f32[1,8], index: 1, kind: input, shape index: {}]
  %s2 = inlined_call_operand.vmem [shape: f32[1,8], index: 2, kind: input, shape index: {}]
  %s3 = inlined_call_operand.vmem [shape: bf16[3,24,16], index: 3, kind: input, shape index: {}]
  %s4 = inlined_call_operand.vmem [shape: f32[1,16], index: 4, kind: input, shape index: {}]
  %s5 = inlined_call_operand.vmem [shape: f32[1,16], index: 5, kind: input, shape index: {}]
  %s6 = inlined_call_operand.vmem [shape: bf16[3,48,16], index: 6, kind: input, shape index: {}]
  %s7 = inlined_call_operand.vmem [shape: bf16[8,16], index: 7, kind: input, shape index: {}]
  %s8 = inlined_call_operand.vmem [shape: f32[2,256,16], index: 8, kind: output, shape index: {}]
  %s9 = sld [smem:[#allocation0]]
  $region65: #{tpu_custom_call.1} parent=0
    _
  %s11 = ssub.s32 1, %s9
  %s12 = scalar_select 0, %s11, %s9
  loop: start=0, step=1, limit=4
  $region2: #{tpu_custom_call.1} parent=0 // loop_pre_header
    _
  $region3: #{tpu_custom_call.1} parent=0 // loop_header
    %s14 = sphi 0, %s18
    %p15 = scmp.ge.s32.totalorder %s14, 4
    %s24 = sphi 0, %s26
    %s27 = sphi 0, %s24
    %s28 = sphi 0, %s27
    %s44 = sphi 0, %s28
    %s48 = sphi 0, %s48
    %s50 = sphi 0, %s48
    %s51 = sphi 0, %s50
    %s65 = sphi 0, %s51
    %s69 = sphi 0, %s69
    %s71 = sphi 0, %s69
    %s72 = sphi 0, %s71
    %s86 = sphi 0, %s72
    %s90 = sphi 0, %s90
    %s92 = sphi 0, %s90
    %s93 = sphi 0, %s92
    %s107 = sphi 0, %s93
    %s111 = sphi 0, %s111
    %s113 = sphi 0, %s111
    %s114 = sphi 0, %s113
    %s128 = sphi 0, %s114
    %s132 = sphi 0, %s132
    %s134 = sphi 0, %s132
    %s135 = sphi 0, %s134
    %s149 = sphi 0, %s135
    %s153 = sphi 0, %s153
    %s155 = sphi 0, %s153
    %s156 = sphi 0, %s155
    %s170 = sphi 0, %s156
    %s174 = sphi 0, %s174
    %s176 = sphi 0, %s174
    %s177 = sphi 0, %s176
    %s191 = sphi 0, %s177
    %s197 = sphi 0, %s199
    %s200 = sphi 0, %s197
    %s201 = sphi 0, %s200
    %s217 = sphi 0, %s201
  $region4: #{tpu_custom_call.1} parent=0 // loop_header_branch
    %17 = sbr.rel (%p15) target = $region8
  $region5: #{tpu_custom_call.1} parent=0 // loop_body
    %s19 = ssub.s32 %s14, 1
    %s20 = ssub.s32 %s14, 2
    %s21 = sadd.s32 %s14, 1
    %s22 = ssub.s32 %s14, %s21
    %p23 = scmp.eq.s32.totalorder %s22, 0
    %s25 = sadd.s32 %s24, 1
    %s26 = scalar_select %p23, %s24, %s25
    %p29 = pneg %p23
    %p30 = scmp.eq.s32.totalorder %s14, 1
    %p31 = por %p29, %p30
    %p32 = scmp.ne.s32.totalorder %s24, %s27
    %p33 = scmp.eq.s32.totalorder %s14, 0
    %p34 = por %p32, %p33
    %p35 = scmp.ne.s32.totalorder %s24, %s27
    %p36 = scmp.eq.s32.totalorder %s19, 1
    %p37 = por %p35, %p36
    %p38 = scmp.ne.s32.totalorder %s27, %s28
    %p39 = scmp.eq.s32.totalorder %s19, 0
    %p40 = por %p38, %p39
    %p41 = scmp.ne.s32.totalorder %s27, %s28
    %p42 = scmp.eq.s32.totalorder %s20, 1
    %p43 = por %p41, %p42
    %p45 = scmp.ne.s32.totalorder %s28, %s44
    %p46 = scmp.eq.s32.totalorder %s20, 0
    %p47 = por %p45, %p46
    %s49 = sadd.s32 %s48, 1
    %p52 = scmp.eq.s32.totalorder %s14, 1
    %p53 = scmp.ne.s32.totalorder %s48, %s50
    %p54 = scmp.eq.s32.totalorder %s14, 0
    %p55 = por %p53, %p54
    %p56 = scmp.ne.s32.totalorder %s48, %s50
    %p57 = scmp.eq.s32.totalorder %s19, 1
    %p58 = por %p56, %p57
    %p59 = scmp.ne.s32.totalorder %s50, %s51
    %p60 = scmp.eq.s32.totalorder %s19, 0
    %p61 = por %p59, %p60
    %p62 = scmp.ne.s32.totalorder %s50, %s51
    %p63 = scmp.eq.s32.totalorder %s20, 1
    %p64 = por %p62, %p63
    %p66 = scmp.ne.s32.totalorder %s51, %s65
    %p67 = scmp.eq.s32.totalorder %s20, 0
    %p68 = por %p66, %p67
    %s70 = sadd.s32 %s69, 1
    %p73 = scmp.eq.s32.totalorder %s14, 1
    %p74 = scmp.ne.s32.totalorder %s69, %s71
    %p75 = scmp.eq.s32.totalorder %s14, 0
    %p76 = por %p74, %p75
    %p77 = scmp.ne.s32.totalorder %s69, %s71
    %p78 = scmp.eq.s32.totalorder %s19, 1
    %p79 = por %p77, %p78
    %p80 = scmp.ne.s32.totalorder %s71, %s72
    %p81 = scmp.eq.s32.totalorder %s19, 0
    %p82 = por %p80, %p81
    %p83 = scmp.ne.s32.totalorder %s71, %s72
    %p84 = scmp.eq.s32.totalorder %s20, 1
    %p85 = por %p83, %p84
    %p87 = scmp.ne.s32.totalorder %s72, %s86
    %p88 = scmp.eq.s32.totalorder %s20, 0
    %p89 = por %p87, %p88
    %s91 = sadd.s32 %s90, 1
    %p94 = scmp.eq.s32.totalorder %s14, 1
    %p95 = scmp.ne.s32.totalorder %s90, %s92
    %p96 = scmp.eq.s32.totalorder %s14, 0
    %p97 = por %p95, %p96
    %p98 = scmp.ne.s32.totalorder %s90, %s92
    %p99 = scmp.eq.s32.totalorder %s19, 1
    %p100 = por %p98, %p99
    %p101 = scmp.ne.s32.totalorder %s92, %s93
    %p102 = scmp.eq.s32.totalorder %s19, 0
    %p103 = por %p101, %p102
    %p104 = scmp.ne.s32.totalorder %s92, %s93
    %p105 = scmp.eq.s32.totalorder %s20, 1
    %p106 = por %p104, %p105
    %p108 = scmp.ne.s32.totalorder %s93, %s107
    %p109 = scmp.eq.s32.totalorder %s20, 0
    %p110 = por %p108, %p109
    %s112 = sadd.s32 %s111, 1
    %p115 = scmp.eq.s32.totalorder %s14, 1
    %p116 = scmp.ne.s32.totalorder %s111, %s113
    %p117 = scmp.eq.s32.totalorder %s14, 0
    %p118 = por %p116, %p117
    %p119 = scmp.ne.s32.totalorder %s111, %s113
    %p120 = scmp.eq.s32.totalorder %s19, 1
    %p121 = por %p119, %p120
    %p122 = scmp.ne.s32.totalorder %s113, %s114
    %p123 = scmp.eq.s32.totalorder %s19, 0
    %p124 = por %p122, %p123
    %p125 = scmp.ne.s32.totalorder %s113, %s114
    %p126 = scmp.eq.s32.totalorder %s20, 1
    %p127 = por %p125, %p126
    %p129 = scmp.ne.s32.totalorder %s114, %s128
    %p130 = scmp.eq.s32.totalorder %s20, 0
    %p131 = por %p129, %p130
    %s133 = sadd.s32 %s132, 1
    %p136 = scmp.eq.s32.totalorder %s14, 1
    %p137 = scmp.ne.s32.totalorder %s132, %s134
    %p138 = scmp.eq.s32.totalorder %s14, 0
    %p139 = por %p137, %p138
    %p140 = scmp.ne.s32.totalorder %s132, %s134
    %p141 = scmp.eq.s32.totalorder %s19, 1
    %p142 = por %p140, %p141
    %p143 = scmp.ne.s32.totalorder %s134, %s135
    %p144 = scmp.eq.s32.totalorder %s19, 0
    %p145 = por %p143, %p144
    %p146 = scmp.ne.s32.totalorder %s134, %s135
    %p147 = scmp.eq.s32.totalorder %s20, 1
    %p148 = por %p146, %p147
    %p150 = scmp.ne.s32.totalorder %s135, %s149
    %p151 = scmp.eq.s32.totalorder %s20, 0
    %p152 = por %p150, %p151
    %s154 = sadd.s32 %s153, 1
    %p157 = scmp.eq.s32.totalorder %s14, 1
    %p158 = scmp.ne.s32.totalorder %s153, %s155
    %p159 = scmp.eq.s32.totalorder %s14, 0
    %p160 = por %p158, %p159
    %p161 = scmp.ne.s32.totalorder %s153, %s155
    %p162 = scmp.eq.s32.totalorder %s19, 1
    %p163 = por %p161, %p162
    %p164 = scmp.ne.s32.totalorder %s155, %s156
    %p165 = scmp.eq.s32.totalorder %s19, 0
    %p166 = por %p164, %p165
    %p167 = scmp.ne.s32.totalorder %s155, %s156
    %p168 = scmp.eq.s32.totalorder %s20, 1
    %p169 = por %p167, %p168
    %p171 = scmp.ne.s32.totalorder %s156, %s170
    %p172 = scmp.eq.s32.totalorder %s20, 0
    %p173 = por %p171, %p172
    %s175 = sadd.s32 %s174, 1
    %p178 = scmp.eq.s32.totalorder %s14, 1
    %p179 = scmp.ne.s32.totalorder %s174, %s176
    %p180 = scmp.eq.s32.totalorder %s14, 0
    %p181 = por %p179, %p180
    %p182 = scmp.ne.s32.totalorder %s174, %s176
    %p183 = scmp.eq.s32.totalorder %s19, 1
    %p184 = por %p182, %p183
    %p185 = scmp.ne.s32.totalorder %s176, %s177
    %p186 = scmp.eq.s32.totalorder %s19, 0
    %p187 = por %p185, %p186
    %p188 = scmp.ne.s32.totalorder %s176, %s177
    %p189 = scmp.eq.s32.totalorder %s20, 1
    %p190 = por %p188, %p189
    %p192 = scmp.ne.s32.totalorder %s177, %s191
    %p193 = scmp.eq.s32.totalorder %s20, 0
    %p194 = por %p192, %p193
    %s195 = ssub.s32 %s14, %s21
    %p196 = scmp.eq.s32.totalorder %s195, 0
    %s198 = sadd.s32 %s197, 1
    %s199 = scalar_select %p196, %s197, %s198
    %p202 = pneg %p196
    %p203 = scmp.eq.s32.totalorder %s14, 1
    %p204 = por %p202, %p203
    %p205 = scmp.ne.s32.totalorder %s197, %s200
    %p206 = scmp.eq.s32.totalorder %s14, 0
    %p207 = por %p205, %p206
    %p208 = scmp.ne.s32.totalorder %s197, %s200
    %p209 = scmp.eq.s32.totalorder %s19, 1
    %p210 = por %p208, %p209
    %p211 = scmp.ne.s32.totalorder %s200, %s201
    %p212 = scmp.eq.s32.totalorder %s19, 0
    %p213 = por %p211, %p212
    %p214 = scmp.ne.s32.totalorder %s200, %s201
    %p215 = scmp.eq.s32.totalorder %s20, 1
    %p216 = por %p214, %p215
    %p218 = scmp.ne.s32.totalorder %s201, %s217
    %p219 = scmp.eq.s32.totalorder %s20, 0
    %p220 = por %p218, %p219
    %p221 = scmp.le.s32.totalorder 1, %s14
    %p222 = scmp.lt.s32.totalorder %s14, 3
    %p223 = pnand %p221, %p222
    %p224 = pneg %p223
    // Predicated region
    $region9: #{tpu_custom_call.1} parent=5 // pred_check
      _
    $region10: #{tpu_custom_call.1} parent=5 // pred_check_branch
      %226 = sbr.rel (%p223) target = $region12
    $region11: #{tpu_custom_call.1} parent=5 // pred_region
      %s227 = ssub.s32 %s14, 1
      // Predicated region
      $region13: #{tpu_custom_call.1} parent=11 // pred_check
        %p228 = pneg %p61
      $region14: #{tpu_custom_call.1} parent=11 // pred_check_branch
        %230 = sbr.rel (%p228) target = $region16
      $region15: #{tpu_custom_call.1} parent=11 // pred_region
        _
      $region16: #{tpu_custom_call.1} parent=11 // pred_fallthru
        _
      // Predicated region
      $region17: #{tpu_custom_call.1} parent=11 // pred_check
        %p231 = pneg %p82
      $region18: #{tpu_custom_call.1} parent=11 // pred_check_branch
        %233 = sbr.rel (%p231) target = $region20
      $region19: #{tpu_custom_call.1} parent=11 // pred_region
        _
      $region20: #{tpu_custom_call.1} parent=11 // pred_fallthru
        _
      // Predicated region
      $region21: #{tpu_custom_call.1} parent=11 // pred_check
        %p234 = pneg %p103
      $region22: #{tpu_custom_call.1} parent=11 // pred_check_branch
        %236 = sbr.rel (%p234) target = $region24
      $region23: #{tpu_custom_call.1} parent=11 // pred_region
        _
      $region24: #{tpu_custom_call.1} parent=11 // pred_fallthru
        _
      // Predicated region
      $region25: #{tpu_custom_call.1} parent=11 // pred_check
        %p237 = pneg %p124
      $region26: #{tpu_custom_call.1} parent=11 // pred_check_branch
        %239 = sbr.rel (%p237) target = $region28
      $region27: #{tpu_custom_call.1} parent=11 // pred_region
        _
      $region28: #{tpu_custom_call.1} parent=11 // pred_fallthru
        _
      // Predicated region
      $region29: #{tpu_custom_call.1} parent=11 // pred_check
        %p240 = pneg %p145
      $region30: #{tpu_custom_call.1} parent=11 // pred_check_branch
        %242 = sbr.rel (%p240) target = $region32
      $region31: #{tpu_custom_call.1} parent=11 // pred_region
        _
      $region32: #{tpu_custom_call.1} parent=11 // pred_fallthru
        _
      // Predicated region
      $region33: #{tpu_custom_call.1} parent=11 // pred_check
        %p243 = pneg %p166
      $region34: #{tpu_custom_call.1} parent=11 // pred_check_branch
        %245 = sbr.rel (%p243) target = $region36
      $region35: #{tpu_custom_call.1} parent=11 // pred_region
        _
      $region36: #{tpu_custom_call.1} parent=11 // pred_fallthru
        _
      // Predicated region
      $region37: #{tpu_custom_call.1} parent=11 // pred_check
        %p246 = pneg %p187
      $region38: #{tpu_custom_call.1} parent=11 // pred_check_branch
        %248 = sbr.rel (%p246) target = $region40
      $region39: #{tpu_custom_call.1} parent=11 // pred_region
        _
      $region40: #{tpu_custom_call.1} parent=11 // pred_fallthru
        _
    $region12: #{tpu_custom_call.1} parent=5 // pred_fallthru
      _
    %p249 = scmp.lt.s32.totalorder %s14, 2
    // Predicated region
    $region41: #{tpu_custom_call.1} parent=5 // pred_check
      %p250 = pneg %p249
    $region42: #{tpu_custom_call.1} parent=5 // pred_check_branch
      %252 = sbr.rel (%p250) target = $region44
    $region43: #{tpu_custom_call.1} parent=5 // pred_region
      // Predicated region
      $region45: #{tpu_custom_call.1} parent=43 // pred_check
        %p253 = pneg %p34
      $region46: #{tpu_custom_call.1} parent=43 // pred_check_branch
        %255 = sbr.rel (%p253) target = $region48
      $region47: #{tpu_custom_call.1} parent=43 // pred_region
        %p256 = scmp.lt.s32.totalorder %s14, 1
        %s257 = scalar_select %p256, %s14, 1
        %s258 = smul.addr %s257, 32
        %s259 = smul.addr %s258, 8
        %s260 = scalar_lea.vmem %s0, %s259
      $region48: #{tpu_custom_call.1} parent=43 // pred_fallthru
        _
    $region44: #{tpu_custom_call.1} parent=5 // pred_fallthru
      _
    %p261 = scmp.le.s32.totalorder 1, %s14
    %p262 = scmp.lt.s32.totalorder %s14, 3
    %p263 = pnand %p261, %p262
    %p264 = pneg %p263
    // Predicated region
    $region49: #{tpu_custom_call.1} parent=5 // pred_check
      _
    $region50: #{tpu_custom_call.1} parent=5 // pred_check_branch
      %266 = sbr.rel (%p263) target = $region52
    $region51: #{tpu_custom_call.1} parent=5 // pred_region
      %s267 = ssub.s32 %s14, 1
      %p268 = scmp.lt.s32.totalorder %s19, 1
      %s269 = scalar_select %p268, %s19, 1
      %s270 = smul.addr %s269, 32
      %s271 = smul.addr %s270, 8
      %s272 = scalar_lea.vmem %s0, %s271
      %p273 = pneg %p40
      %p274 = pneg %p37
      %p275 = pneg %p61
      %p276 = pneg %p58
      %p277 = pneg %p82
      %p278 = pneg %p79
      %p279 = pneg %p103
      %p280 = pneg %p100
      %p281 = pneg %p124
      %p282 = pneg %p121
      %p283 = pneg %p145
      %p284 = pneg %p142
      %p285 = pneg %p166
      %p286 = pneg %p163
      %p287 = pneg %p187
      %p288 = pneg %p184
      %p289 = pneg %p213
      %p290 = pneg %p210
      %p291 = scmp.lt.s32.totalorder %s19, 1
      %s292 = scalar_select %p291, %s19, 1
      %s293 = smul.addr %s292, 32
      %s294 = smul.addr %s293, 8
      %s295 = scalar_lea.vmem %s8, %s294
      %p296 = scmp.lt.s32.totalorder %s19, 1
      %s297 = scalar_select %p296, %s19, 1
      %s298 = smul.addr %s297, 32
      %s299 = smul.addr %s298, 8
      %s300 = scalar_lea.vmem %s0, %s299
      %p301 = scmp.lt.s32.totalorder %s19, 1
      %s302 = scalar_select %p301, %s19, 1
      %s303 = smul.addr %s302, 32
      %s304 = smul.addr %s303, 8
      %s305 = scalar_lea.vmem %s8, %s304
      %v307 = vld [vmem:[%s300] sm:$0xff]
      %v308 = vld [vmem:[%s300 + $0x8] sm:$0xff]
      %v309 = vld [vmem:[%s300 + $0x10] sm:$0xff]
      %v310 = vld [vmem:[%s300 + $0x18] sm:$0xff]
      %v311 = vld [vmem:[%s300 + $0x20] sm:$0xff]
      %v312 = vld [vmem:[%s300 + $0x28] sm:$0xff]
      %v313 = vld [vmem:[%s300 + $0x30] sm:$0xff]
      %v314 = vld [vmem:[%s300 + $0x38] sm:$0xff]
      %v315 = vld [vmem:[%s300 + $0x40] sm:$0xff]
      %v316 = vld [vmem:[%s300 + $0x48] sm:$0xff]
      %v317 = vld [vmem:[%s300 + $0x50] sm:$0xff]
      %v318 = vld [vmem:[%s300 + $0x58] sm:$0xff]
      %v319 = vld [vmem:[%s300 + $0x60] sm:$0xff]
      %v320 = vld [vmem:[%s300 + $0x68] sm:$0xff]
      %v321 = vld [vmem:[%s300 + $0x70] sm:$0xff]
      %v322 = vld [vmem:[%s300 + $0x78] sm:$0xff]
      %v323 = vld [vmem:[%s300 + $0x80] sm:$0xff]
      %v324 = vld [vmem:[%s300 + $0x88] sm:$0xff]
      %v325 = vld [vmem:[%s300 + $0x90] sm:$0xff]
      %v326 = vld [vmem:[%s300 + $0x98] sm:$0xff]
      %v327 = vld [vmem:[%s300 + $0xa0] sm:$0xff]
      %v328 = vld [vmem:[%s300 + $0xa8] sm:$0xff]
      %v329 = vld [vmem:[%s300 + $0xb0] sm:$0xff]
      %v330 = vld [vmem:[%s300 + $0xb8] sm:$0xff]
      %v331 = vld [vmem:[%s300 + $0xc0] sm:$0xff]
      %v332 = vld [vmem:[%s300 + $0xc8] sm:$0xff]
      %v333 = vld [vmem:[%s300 + $0xd0] sm:$0xff]
      %v334 = vld [vmem:[%s300 + $0xd8] sm:$0xff]
      %v335 = vld [vmem:[%s300 + $0xe0] sm:$0xff]
      %v336 = vld [vmem:[%s300 + $0xe8] sm:$0xff]
      %v337 = vld [vmem:[%s300 + $0xf0] sm:$0xff]
      %v338 = vld [vmem:[%s300 + $0xf8] sm:$0xff]
      %v339 = vld [vmem:[%s1] sm:$0x1]
      %v341 = vlaneseq
      %v342 = vshrl.u32 %v341, 7
      %v343 = vsub.s32 0, %v342
      %v344 = vrot.slane %v339, %v343
      %v346 = vmul.f32 %v307, %v344
      %v347 = vmul.f32 %v308, %v344
      %v348 = vmul.f32 %v309, %v344
      %v349 = vmul.f32 %v310, %v344
      %v350 = vmul.f32 %v311, %v344
      %v351 = vmul.f32 %v312, %v344
      %v352 = vmul.f32 %v313, %v344
      %v353 = vmul.f32 %v314, %v344
      %v354 = vmul.f32 %v315, %v344
      %v355 = vmul.f32 %v316, %v344
      %v356 = vmul.f32 %v317, %v344
      %v357 = vmul.f32 %v318, %v344
      %v358 = vmul.f32 %v319, %v344
      %v359 = vmul.f32 %v320, %v344
      %v360 = vmul.f32 %v321, %v344
      %v361 = vmul.f32 %v322, %v344
      %v362 = vmul.f32 %v323, %v344
      %v363 = vmul.f32 %v324, %v344
      %v364 = vmul.f32 %v325, %v344
      %v365 = vmul.f32 %v326, %v344
      %v366 = vmul.f32 %v327, %v344
      %v367 = vmul.f32 %v328, %v344
      %v368 = vmul.f32 %v329, %v344
      %v369 = vmul.f32 %v330, %v344
      %v370 = vmul.f32 %v331, %v344
      %v371 = vmul.f32 %v332, %v344
      %v372 = vmul.f32 %v333, %v344
      %v373 = vmul.f32 %v334, %v344
      %v374 = vmul.f32 %v335, %v344
      %v375 = vmul.f32 %v336, %v344
      %v376 = vmul.f32 %v337, %v344
      %v377 = vmul.f32 %v338, %v344
      %v378 = vld [vmem:[%s2] sm:$0x1]
      %v380 = vlaneseq
      %v381 = vshrl.u32 %v380, 7
      %v382 = vsub.s32 0, %v381
      %v383 = vrot.slane %v378, %v382
      %v385 = vadd.f32 %v346, %v383
      %v386 = vadd.f32 %v347, %v383
      %v387 = vadd.f32 %v348, %v383
      %v388 = vadd.f32 %v349, %v383
      %v389 = vadd.f32 %v350, %v383
      %v390 = vadd.f32 %v351, %v383
      %v391 = vadd.f32 %v352, %v383
      %v392 = vadd.f32 %v353, %v383
      %v393 = vadd.f32 %v354, %v383
      %v394 = vadd.f32 %v355, %v383
      %v395 = vadd.f32 %v356, %v383
      %v396 = vadd.f32 %v357, %v383
      %v397 = vadd.f32 %v358, %v383
      %v398 = vadd.f32 %v359, %v383
      %v399 = vadd.f32 %v360, %v383
      %v400 = vadd.f32 %v361, %v383
      %v401 = vadd.f32 %v362, %v383
      %v402 = vadd.f32 %v363, %v383
      %v403 = vadd.f32 %v364, %v383
      %v404 = vadd.f32 %v365, %v383
      %v405 = vadd.f32 %v366, %v383
      %v406 = vadd.f32 %v367, %v383
      %v407 = vadd.f32 %v368, %v383
      %v408 = vadd.f32 %v369, %v383
      %v409 = vadd.f32 %v370, %v383
      %v410 = vadd.f32 %v371, %v383
      %v411 = vadd.f32 %v372, %v383
      %v412 = vadd.f32 %v373, %v383
      %v413 = vadd.f32 %v374, %v383
      %v414 = vadd.f32 %v375, %v383
      %v415 = vadd.f32 %v376, %v383
      %v416 = vadd.f32 %v377, %v383
      %v417 = vmax.f32 %v385, 0.0
      %v418 = vmax.f32 %v386, 0.0
      %v419 = vmax.f32 %v387, 0.0
      %v420 = vmax.f32 %v388, 0.0
      %v421 = vmax.f32 %v389, 0.0
      %v422 = vmax.f32 %v390, 0.0
      %v423 = vmax.f32 %v391, 0.0
      %v424 = vmax.f32 %v392, 0.0
      %v425 = vmax.f32 %v393, 0.0
      %v426 = vmax.f32 %v394, 0.0
      %v427 = vmax.f32 %v395, 0.0
      %v428 = vmax.f32 %v396, 0.0
      %v429 = vmax.f32 %v397, 0.0
      %v430 = vmax.f32 %v398, 0.0
      %v431 = vmax.f32 %v399, 0.0
      %v432 = vmax.f32 %v400, 0.0
      %v433 = vmax.f32 %v401, 0.0
      %v434 = vmax.f32 %v402, 0.0
      %v435 = vmax.f32 %v403, 0.0
      %v436 = vmax.f32 %v404, 0.0
      %v437 = vmax.f32 %v405, 0.0
      %v438 = vmax.f32 %v406, 0.0
      %v439 = vmax.f32 %v407, 0.0
      %v440 = vmax.f32 %v408, 0.0
      %v441 = vmax.f32 %v409, 0.0
      %v442 = vmax.f32 %v410, 0.0
      %v443 = vmax.f32 %v411, 0.0
      %v444 = vmax.f32 %v412, 0.0
      %v445 = vmax.f32 %v413, 0.0
      %v446 = vmax.f32 %v414, 0.0
      %v447 = vmax.f32 %v415, 0.0
      %v448 = vmax.f32 %v416, 0.0
      %v449 = vlaneseq
      %v450 = vshrl.u32 %v449, 7
      %v451 = vadd.s32 %v450, 8
      %v452 = vadd.s32 %v450, 16
      %v453 = vadd.s32 %v450, 24
      %v454 = vadd.s32 %v450, 32
      %v455 = vadd.s32 %v450, 40
      %v456 = vadd.s32 %v450, 48
      %v457 = vadd.s32 %v450, 56
      %v458 = vadd.s32 %v450, 64
      %v459 = vadd.s32 %v450, 72
      %v460 = vadd.s32 %v450, 80
      %v461 = vadd.s32 %v450, 88
      %v462 = vadd.s32 %v450, 96
      %v463 = vadd.s32 %v450, 104
      %v464 = vadd.s32 %v450, 112
      %v465 = vadd.s32 %v450, 120
      %v466 = vadd.s32 %v450, 128
      %v467 = vadd.s32 %v450, 136
      %v468 = vadd.s32 %v450, 144
      %v469 = vadd.s32 %v450, 152
      %v470 = vadd.s32 %v450, 160
      %v471 = vadd.s32 %v450, 168
      %v472 = vadd.s32 %v450, 176
      %v473 = vadd.s32 %v450, 184
      %v474 = vadd.s32 %v450, 192
      %v475 = vadd.s32 %v450, 200
      %v476 = vadd.s32 %v450, 208
      %v477 = vadd.s32 %v450, 216
      %v478 = vadd.s32 %v450, 224
      %v479 = vadd.s32 %v450, 232
      %v480 = vadd.s32 %v450, 240
      %v481 = vadd.s32 %v450, 248
      %vm482 = vcmp.lt.s32.totalorder %v450, 0
      %v483 = vsub.s32 0, %v450
      %v484 = vsel %vm482, %v483, %v450
      %v485 = vshrl.u32 %v484, 4
      %v486 = vand.u32 %v484, 15
      %v487 = vsub.s32 0, %v486
      %v488 = vsel %vm482, %v487, %v486
      %vm489 = vcmp.lt.s32.totalorder %v451, 0
      %v490 = vsub.s32 0, %v451
      %v491 = vsel %vm489, %v490, %v451
      %v492 = vshrl.u32 %v491, 4
      %v493 = vand.u32 %v491, 15
      %v494 = vsub.s32 0, %v493
      %v495 = vsel %vm489, %v494, %v493
      %vm496 = vcmp.lt.s32.totalorder %v452, 0
      %v497 = vsub.s32 0, %v452
      %v498 = vsel %vm496, %v497, %v452
      %v499 = vshrl.u32 %v498, 4
      %v500 = vand.u32 %v498, 15
      %v501 = vsub.s32 0, %v500
      %v502 = vsel %vm496, %v501, %v500
      %vm503 = vcmp.lt.s32.totalorder %v453, 0
      %v504 = vsub.s32 0, %v453
      %v505 = vsel %vm503, %v504, %v453
      %v506 = vshrl.u32 %v505, 4
      %v507 = vand.u32 %v505, 15
      %v508 = vsub.s32 0, %v507
      %v509 = vsel %vm503, %v508, %v507
      %vm510 = vcmp.lt.s32.totalorder %v454, 0
      %v511 = vsub.s32 0, %v454
      %v512 = vsel %vm510, %v511, %v454
      %v513 = vshrl.u32 %v512, 4
      %v514 = vand.u32 %v512, 15
      %v515 = vsub.s32 0, %v514
      %v516 = vsel %vm510, %v515, %v514
      %vm517 = vcmp.lt.s32.totalorder %v455, 0
      %v518 = vsub.s32 0, %v455
      %v519 = vsel %vm517, %v518, %v455
      %v520 = vshrl.u32 %v519, 4
      %v521 = vand.u32 %v519, 15
      %v522 = vsub.s32 0, %v521
      %v523 = vsel %vm517, %v522, %v521
      %vm524 = vcmp.lt.s32.totalorder %v456, 0
      %v525 = vsub.s32 0, %v456
      %v526 = vsel %vm524, %v525, %v456
      %v527 = vshrl.u32 %v526, 4
      %v528 = vand.u32 %v526, 15
      %v529 = vsub.s32 0, %v528
      %v530 = vsel %vm524, %v529, %v528
      %vm531 = vcmp.lt.s32.totalorder %v457, 0
      %v532 = vsub.s32 0, %v457
      %v533 = vsel %vm531, %v532, %v457
      %v534 = vshrl.u32 %v533, 4
      %v535 = vand.u32 %v533, 15
      %v536 = vsub.s32 0, %v535
      %v537 = vsel %vm531, %v536, %v535
      %vm538 = vcmp.lt.s32.totalorder %v458, 0
      %v539 = vsub.s32 0, %v458
      %v540 = vsel %vm538, %v539, %v458
      %v541 = vshrl.u32 %v540, 4
      %v542 = vand.u32 %v540, 15
      %v543 = vsub.s32 0, %v542
      %v544 = vsel %vm538, %v543, %v542
      %vm545 = vcmp.lt.s32.totalorder %v459, 0
      %v546 = vsub.s32 0, %v459
      %v547 = vsel %vm545, %v546, %v459
      %v548 = vshrl.u32 %v547, 4
      %v549 = vand.u32 %v547, 15
      %v550 = vsub.s32 0, %v549
      %v551 = vsel %vm545, %v550, %v549
      %vm552 = vcmp.lt.s32.totalorder %v460, 0
      %v553 = vsub.s32 0, %v460
      %v554 = vsel %vm552, %v553, %v460
      %v555 = vshrl.u32 %v554, 4
      %v556 = vand.u32 %v554, 15
      %v557 = vsub.s32 0, %v556
      %v558 = vsel %vm552, %v557, %v556
      %vm559 = vcmp.lt.s32.totalorder %v461, 0
      %v560 = vsub.s32 0, %v461
      %v561 = vsel %vm559, %v560, %v461
      %v562 = vshrl.u32 %v561, 4
      %v563 = vand.u32 %v561, 15
      %v564 = vsub.s32 0, %v563
      %v565 = vsel %vm559, %v564, %v563
      %vm566 = vcmp.lt.s32.totalorder %v462, 0
      %v567 = vsub.s32 0, %v462
      %v568 = vsel %vm566, %v567, %v462
      %v569 = vshrl.u32 %v568, 4
      %v570 = vand.u32 %v568, 15
      %v571 = vsub.s32 0, %v570
      %v572 = vsel %vm566, %v571, %v570
      %vm573 = vcmp.lt.s32.totalorder %v463, 0
      %v574 = vsub.s32 0, %v463
      %v575 = vsel %vm573, %v574, %v463
      %v576 = vshrl.u32 %v575, 4
      %v577 = vand.u32 %v575, 15
      %v578 = vsub.s32 0, %v577
      %v579 = vsel %vm573, %v578, %v577
      %vm580 = vcmp.lt.s32.totalorder %v464, 0
      %v581 = vsub.s32 0, %v464
      %v582 = vsel %vm580, %v581, %v464
      %v583 = vshrl.u32 %v582, 4
      %v584 = vand.u32 %v582, 15
      %v585 = vsub.s32 0, %v584
      %v586 = vsel %vm580, %v585, %v584
      %vm587 = vcmp.lt.s32.totalorder %v465, 0
      %v588 = vsub.s32 0, %v465
      %v589 = vsel %vm587, %v588, %v465
      %v590 = vshrl.u32 %v589, 4
      %v591 = vand.u32 %v589, 15
      %v592 = vsub.s32 0, %v591
      %v593 = vsel %vm587, %v592, %v591
      %vm594 = vcmp.lt.s32.totalorder %v466, 0
      %v595 = vsub.s32 0, %v466
      %v596 = vsel %vm594, %v595, %v466
      %v597 = vshrl.u32 %v596, 4
      %v598 = vand.u32 %v596, 15
      %v599 = vsub.s32 0, %v598
      %v600 = vsel %vm594, %v599, %v598
      %vm601 = vcmp.lt.s32.totalorder %v467, 0
      %v602 = vsub.s32 0, %v467
      %v603 = vsel %vm601, %v602, %v467
      %v604 = vshrl.u32 %v603, 4
      %v605 = vand.u32 %v603, 15
      %v606 = vsub.s32 0, %v605
      %v607 = vsel %vm601, %v606, %v605
      %vm608 = vcmp.lt.s32.totalorder %v468, 0
      %v609 = vsub.s32 0, %v468
      %v610 = vsel %vm608, %v609, %v468
      %v611 = vshrl.u32 %v610, 4
      %v612 = vand.u32 %v610, 15
      %v613 = vsub.s32 0, %v612
      %v614 = vsel %vm608, %v613, %v612
      %vm615 = vcmp.lt.s32.totalorder %v469, 0
      %v616 = vsub.s32 0, %v469
      %v617 = vsel %vm615, %v616, %v469
      %v618 = vshrl.u32 %v617, 4
      %v619 = vand.u32 %v617, 15
      %v620 = vsub.s32 0, %v619
      %v621 = vsel %vm615, %v620, %v619
      %vm622 = vcmp.lt.s32.totalorder %v470, 0
      %v623 = vsub.s32 0, %v470
      %v624 = vsel %vm622, %v623, %v470
      %v625 = vshrl.u32 %v624, 4
      %v626 = vand.u32 %v624, 15
      %v627 = vsub.s32 0, %v626
      %v628 = vsel %vm622, %v627, %v626
      %vm629 = vcmp.lt.s32.totalorder %v471, 0
      %v630 = vsub.s32 0, %v471
      %v631 = vsel %vm629, %v630, %v471
      %v632 = vshrl.u32 %v631, 4
      %v633 = vand.u32 %v631, 15
      %v634 = vsub.s32 0, %v633
      %v635 = vsel %vm629, %v634, %v633
      %vm636 = vcmp.lt.s32.totalorder %v472, 0
      %v637 = vsub.s32 0, %v472
      %v638 = vsel %vm636, %v637, %v472
      %v639 = vshrl.u32 %v638, 4
      %v640 = vand.u32 %v638, 15
      %v641 = vsub.s32 0, %v640
      %v642 = vsel %vm636, %v641, %v640
      %vm643 = vcmp.lt.s32.totalorder %v473, 0
      %v644 = vsub.s32 0, %v473
      %v645 = vsel %vm643, %v644, %v473
      %v646 = vshrl.u32 %v645, 4
      %v647 = vand.u32 %v645, 15
      %v648 = vsub.s32 0, %v647
      %v649 = vsel %vm643, %v648, %v647
      %vm650 = vcmp.lt.s32.totalorder %v474, 0
      %v651 = vsub.s32 0, %v474
      %v652 = vsel %vm650, %v651, %v474
      %v653 = vshrl.u32 %v652, 4
      %v654 = vand.u32 %v652, 15
      %v655 = vsub.s32 0, %v654
      %v656 = vsel %vm650, %v655, %v654
      %vm657 = vcmp.lt.s32.totalorder %v475, 0
      %v658 = vsub.s32 0, %v475
      %v659 = vsel %vm657, %v658, %v475
      %v660 = vshrl.u32 %v659, 4
      %v661 = vand.u32 %v659, 15
      %v662 = vsub.s32 0, %v661
      %v663 = vsel %vm657, %v662, %v661
      %vm664 = vcmp.lt.s32.totalorder %v476, 0
      %v665 = vsub.s32 0, %v476
      %v666 = vsel %vm664, %v665, %v476
      %v667 = vshrl.u32 %v666, 4
      %v668 = vand.u32 %v666, 15
      %v669 = vsub.s32 0, %v668
      %v670 = vsel %vm664, %v669, %v668
      %vm671 = vcmp.lt.s32.totalorder %v477, 0
      %v672 = vsub.s32 0, %v477
      %v673 = vsel %vm671, %v672, %v477
      %v674 = vshrl.u32 %v673, 4
      %v675 = vand.u32 %v673, 15
      %v676 = vsub.s32 0, %v675
      %v677 = vsel %vm671, %v676, %v675
      %vm678 = vcmp.lt.s32.totalorder %v478, 0
      %v679 = vsub.s32 0, %v478
      %v680 = vsel %vm678, %v679, %v478
      %v681 = vshrl.u32 %v680, 4
      %v682 = vand.u32 %v680, 15
      %v683 = vsub.s32 0, %v682
      %v684 = vsel %vm678, %v683, %v682
      %vm685 = vcmp.lt.s32.totalorder %v479, 0
      %v686 = vsub.s32 0, %v479
      %v687 = vsel %vm685, %v686, %v479
      %v688 = vshrl.u32 %v687, 4
      %v689 = vand.u32 %v687, 15
      %v690 = vsub.s32 0, %v689
      %v691 = vsel %vm685, %v690, %v689
      %vm692 = vcmp.lt.s32.totalorder %v480, 0
      %v693 = vsub.s32 0, %v480
      %v694 = vsel %vm692, %v693, %v480
      %v695 = vshrl.u32 %v694, 4
      %v696 = vand.u32 %v694, 15
      %v697 = vsub.s32 0, %v696
      %v698 = vsel %vm692, %v697, %v696
      %vm699 = vcmp.lt.s32.totalorder %v481, 0
      %v700 = vsub.s32 0, %v481
      %v701 = vsel %vm699, %v700, %v481
      %v702 = vshrl.u32 %v701, 4
      %v703 = vand.u32 %v701, 15
      %v704 = vsub.s32 0, %v703
      %v705 = vsel %vm699, %v704, %v703
      %vm706 = vcmp.ne.s32.totalorder %v488, 0
      %vm707 = vcmp.ne.s32.totalorder %v495, 0
      %vm708 = vcmp.ne.s32.totalorder %v502, 0
      %vm709 = vcmp.ne.s32.totalorder %v509, 0
      %vm710 = vcmp.ne.s32.totalorder %v516, 0
      %vm711 = vcmp.ne.s32.totalorder %v523, 0
      %vm712 = vcmp.ne.s32.totalorder %v530, 0
      %vm713 = vcmp.ne.s32.totalorder %v537, 0
      %vm714 = vcmp.ne.s32.totalorder %v544, 0
      %vm715 = vcmp.ne.s32.totalorder %v551, 0
      %vm716 = vcmp.ne.s32.totalorder %v558, 0
      %vm717 = vcmp.ne.s32.totalorder %v565, 0
      %vm718 = vcmp.ne.s32.totalorder %v572, 0
      %vm719 = vcmp.ne.s32.totalorder %v579, 0
      %vm720 = vcmp.ne.s32.totalorder %v586, 0
      %vm721 = vcmp.ne.s32.totalorder %v593, 0
      %vm722 = vcmp.ne.s32.totalorder %v600, 0
      %vm723 = vcmp.ne.s32.totalorder %v607, 0
      %vm724 = vcmp.ne.s32.totalorder %v614, 0
      %vm725 = vcmp.ne.s32.totalorder %v621, 0
      %vm726 = vcmp.ne.s32.totalorder %v628, 0
      %vm727 = vcmp.ne.s32.totalorder %v635, 0
      %vm728 = vcmp.ne.s32.totalorder %v642, 0
      %vm729 = vcmp.ne.s32.totalorder %v649, 0
      %vm730 = vcmp.ne.s32.totalorder %v656, 0
      %vm731 = vcmp.ne.s32.totalorder %v663, 0
      %vm732 = vcmp.ne.s32.totalorder %v670, 0
      %vm733 = vcmp.ne.s32.totalorder %v677, 0
      %vm734 = vcmp.ne.s32.totalorder %v684, 0
      %vm735 = vcmp.ne.s32.totalorder %v691, 0
      %vm736 = vcmp.ne.s32.totalorder %v698, 0
      %vm737 = vcmp.ne.s32.totalorder %v705, 0
      %vm738 = vcmp.lt.s32.totalorder %v488, 0
      %vm739 = vcmp.lt.s32.totalorder %v495, 0
      %vm740 = vcmp.lt.s32.totalorder %v502, 0
      %vm741 = vcmp.lt.s32.totalorder %v509, 0
      %vm742 = vcmp.lt.s32.totalorder %v516, 0
      %vm743 = vcmp.lt.s32.totalorder %v523, 0
      %vm744 = vcmp.lt.s32.totalorder %v530, 0
      %vm745 = vcmp.lt.s32.totalorder %v537, 0
      %vm746 = vcmp.lt.s32.totalorder %v544, 0
      %vm747 = vcmp.lt.s32.totalorder %v551, 0
      %vm748 = vcmp.lt.s32.totalorder %v558, 0
      %vm749 = vcmp.lt.s32.totalorder %v565, 0
      %vm750 = vcmp.lt.s32.totalorder %v572, 0
      %vm751 = vcmp.lt.s32.totalorder %v579, 0
      %vm752 = vcmp.lt.s32.totalorder %v586, 0
      %vm753 = vcmp.lt.s32.totalorder %v593, 0
      %vm754 = vcmp.lt.s32.totalorder %v600, 0
      %vm755 = vcmp.lt.s32.totalorder %v607, 0
      %vm756 = vcmp.lt.s32.totalorder %v614, 0
      %vm757 = vcmp.lt.s32.totalorder %v621, 0
      %vm758 = vcmp.lt.s32.totalorder %v628, 0
      %vm759 = vcmp.lt.s32.totalorder %v635, 0
      %vm760 = vcmp.lt.s32.totalorder %v642, 0
      %vm761 = vcmp.lt.s32.totalorder %v649, 0
      %vm762 = vcmp.lt.s32.totalorder %v656, 0
      %vm763 = vcmp.lt.s32.totalorder %v663, 0
      %vm764 = vcmp.lt.s32.totalorder %v670, 0
      %vm765 = vcmp.lt.s32.totalorder %v677, 0
      %vm766 = vcmp.lt.s32.totalorder %v684, 0
      %vm767 = vcmp.lt.s32.totalorder %v691, 0
      %vm768 = vcmp.lt.s32.totalorder %v698, 0
      %vm769 = vcmp.lt.s32.totalorder %v705, 0
      %vm770 = vmand %vm738, %vm706
      %vm771 = vmand %vm739, %vm707
      %vm772 = vmand %vm740, %vm708
      %vm773 = vmand %vm741, %vm709
      %vm774 = vmand %vm742, %vm710
      %vm775 = vmand %vm743, %vm711
      %vm776 = vmand %vm744, %vm712
      %vm777 = vmand %vm745, %vm713
      %vm778 = vmand %vm746, %vm714
      %vm779 = vmand %vm747, %vm715
      %vm780 = vmand %vm748, %vm716
      %vm781 = vmand %vm749, %vm717
      %vm782 = vmand %vm750, %vm718
      %vm783 = vmand %vm751, %vm719
      %vm784 = vmand %vm752, %vm720
      %vm785 = vmand %vm753, %vm721
      %vm786 = vmand %vm754, %vm722
      %vm787 = vmand %vm755, %vm723
      %vm788 = vmand %vm756, %vm724
      %vm789 = vmand %vm757, %vm725
      %vm790 = vmand %vm758, %vm726
      %vm791 = vmand %vm759, %vm727
      %vm792 = vmand %vm760, %vm728
      %vm793 = vmand %vm761, %vm729
      %vm794 = vmand %vm762, %vm730
      %vm795 = vmand %vm763, %vm731
      %vm796 = vmand %vm764, %vm732
      %vm797 = vmand %vm765, %vm733
      %vm798 = vmand %vm766, %vm734
      %vm799 = vmand %vm767, %vm735
      %vm800 = vmand %vm768, %vm736
      %vm801 = vmand %vm769, %vm737
      %v802 = vadd.s32 %v488, 16
      %v803 = vadd.s32 %v495, 16
      %v804 = vadd.s32 %v502, 16
      %v805 = vadd.s32 %v509, 16
      %v806 = vadd.s32 %v516, 16
      %v807 = vadd.s32 %v523, 16
      %v808 = vadd.s32 %v530, 16
      %v809 = vadd.s32 %v537, 16
      %v810 = vadd.s32 %v544, 16
      %v811 = vadd.s32 %v551, 16
      %v812 = vadd.s32 %v558, 16
      %v813 = vadd.s32 %v565, 16
      %v814 = vadd.s32 %v572, 16
      %v815 = vadd.s32 %v579, 16
      %v816 = vadd.s32 %v586, 16
      %v817 = vadd.s32 %v593, 16
      %v818 = vadd.s32 %v600, 16
      %v819 = vadd.s32 %v607, 16
      %v820 = vadd.s32 %v614, 16
      %v821 = vadd.s32 %v621, 16
      %v822 = vadd.s32 %v628, 16
      %v823 = vadd.s32 %v635, 16
      %v824 = vadd.s32 %v642, 16
      %v825 = vadd.s32 %v649, 16
      %v826 = vadd.s32 %v656, 16
      %v827 = vadd.s32 %v663, 16
      %v828 = vadd.s32 %v670, 16
      %v829 = vadd.s32 %v677, 16
      %v830 = vadd.s32 %v684, 16
      %v831 = vadd.s32 %v691, 16
      %v832 = vadd.s32 %v698, 16
      %v833 = vadd.s32 %v705, 16
      %v834 = vsel %vm770, %v802, %v488
      %v835 = vsel %vm771, %v803, %v495
      %v836 = vsel %vm772, %v804, %v502
      %v837 = vsel %vm773, %v805, %v509
      %v838 = vsel %vm774, %v806, %v516
      %v839 = vsel %vm775, %v807, %v523
      %v840 = vsel %vm776, %v808, %v530
      %v841 = vsel %vm777, %v809, %v537
      %v842 = vsel %vm778, %v810, %v544
      %v843 = vsel %vm779, %v811, %v551
      %v844 = vsel %vm780, %v812, %v558
      %v845 = vsel %vm781, %v813, %v565
      %v846 = vsel %vm782, %v814, %v572
      %v847 = vsel %vm783, %v815, %v579
      %v848 = vsel %vm784, %v816, %v586
      %v849 = vsel %vm785, %v817, %v593
      %v850 = vsel %vm786, %v818, %v600
      %v851 = vsel %vm787, %v819, %v607
      %v852 = vsel %vm788, %v820, %v614
      %v853 = vsel %vm789, %v821, %v621
      %v854 = vsel %vm790, %v822, %v628
      %v855 = vsel %vm791, %v823, %v635
      %v856 = vsel %vm792, %v824, %v642
      %v857 = vsel %vm793, %v825, %v649
      %v858 = vsel %vm794, %v826, %v656
      %v859 = vsel %vm795, %v827, %v663
      %v860 = vsel %vm796, %v828, %v670
      %v861 = vsel %vm797, %v829, %v677
      %v862 = vsel %vm798, %v830, %v684
      %v863 = vsel %vm799, %v831, %v691
      %v864 = vsel %vm800, %v832, %v698
      %v865 = vsel %vm801, %v833, %v705
      %vm866 = vcmp.eq.s32.totalorder %v834, 0
      %vm867 = vcmp.eq.s32.totalorder %v835, 0
      %vm868 = vcmp.eq.s32.totalorder %v836, 0
      %vm869 = vcmp.eq.s32.totalorder %v837, 0
      %vm870 = vcmp.eq.s32.totalorder %v838, 0
      %vm871 = vcmp.eq.s32.totalorder %v839, 0
      %vm872 = vcmp.eq.s32.totalorder %v840, 0
      %vm873 = vcmp.eq.s32.totalorder %v841, 0
      %vm874 = vcmp.eq.s32.totalorder %v842, 0
      %vm875 = vcmp.eq.s32.totalorder %v843, 0
      %vm876 = vcmp.eq.s32.totalorder %v844, 0
      %vm877 = vcmp.eq.s32.totalorder %v845, 0
      %vm878 = vcmp.eq.s32.totalorder %v846, 0
      %vm879 = vcmp.eq.s32.totalorder %v847, 0
      %vm880 = vcmp.eq.s32.totalorder %v848, 0
      %vm881 = vcmp.eq.s32.totalorder %v849, 0
      %vm882 = vcmp.eq.s32.totalorder %v850, 0
      %vm883 = vcmp.eq.s32.totalorder %v851, 0
      %vm884 = vcmp.eq.s32.totalorder %v852, 0
      %vm885 = vcmp.eq.s32.totalorder %v853, 0
      %vm886 = vcmp.eq.s32.totalorder %v854, 0
      %vm887 = vcmp.eq.s32.totalorder %v855, 0
      %vm888 = vcmp.eq.s32.totalorder %v856, 0
      %vm889 = vcmp.eq.s32.totalorder %v857, 0
      %vm890 = vcmp.eq.s32.totalorder %v858, 0
      %vm891 = vcmp.eq.s32.totalorder %v859, 0
      %vm892 = vcmp.eq.s32.totalorder %v860, 0
      %vm893 = vcmp.eq.s32.totalorder %v861, 0
      %vm894 = vcmp.eq.s32.totalorder %v862, 0
      %vm895 = vcmp.eq.s32.totalorder %v863, 0
      %vm896 = vcmp.eq.s32.totalorder %v864, 0
      %vm897 = vcmp.eq.s32.totalorder %v865, 0
      %v898 = vrot.slane %v417, 7
      %v899 = vrot.slane %v418, 7
      %v900 = vrot.slane %v419, 7
      %v901 = vrot.slane %v420, 7
      %v902 = vrot.slane %v421, 7
      %v903 = vrot.slane %v422, 7
      %v904 = vrot.slane %v423, 7
      %v905 = vrot.slane %v424, 7
      %v906 = vrot.slane %v425, 7
      %v907 = vrot.slane %v426, 7
      %v908 = vrot.slane %v427, 7
      %v909 = vrot.slane %v428, 7
      %v910 = vrot.slane %v429, 7
      %v911 = vrot.slane %v430, 7
      %v912 = vrot.slane %v431, 7
      %v913 = vrot.slane %v432, 7
      %v914 = vrot.slane %v433, 7
      %v915 = vrot.slane %v434, 7
      %v916 = vrot.slane %v435, 7
      %v917 = vrot.slane %v436, 7
      %v918 = vrot.slane %v437, 7
      %v919 = vrot.slane %v438, 7
      %v920 = vrot.slane %v439, 7
      %v921 = vrot.slane %v440, 7
      %v922 = vrot.slane %v441, 7
      %v923 = vrot.slane %v442, 7
      %v924 = vrot.slane %v443, 7
      %v925 = vrot.slane %v444, 7
      %v926 = vrot.slane %v445, 7
      %v927 = vrot.slane %v446, 7
      %v928 = vrot.slane %v447, 7
      %v929 = vrot.slane %v448, 7
      %vm930 = vcmp.lt.s32.totalorder %v450, 1
      %v931 = vsel %vm930, %v928, %v929
      %v932 = vsel %vm930, %v927, %v928
      %v933 = vsel %vm930, %v926, %v927
      %v934 = vsel %vm930, %v925, %v926
      %v935 = vsel %vm930, %v924, %v925
      %v936 = vsel %vm930, %v923, %v924
      %v937 = vsel %vm930, %v922, %v923
      %v938 = vsel %vm930, %v921, %v922
      %v939 = vsel %vm930, %v920, %v921
      %v940 = vsel %vm930, %v919, %v920
      %v941 = vsel %vm930, %v918, %v919
      %v942 = vsel %vm930, %v917, %v918
      %v943 = vsel %vm930, %v916, %v917
      %v944 = vsel %vm930, %v915, %v916
      %v945 = vsel %vm930, %v914, %v915
      %v946 = vsel %vm930, %v913, %v914
      %v947 = vsel %vm930, %v912, %v913
      %v948 = vsel %vm930, %v911, %v912
      %v949 = vsel %vm930, %v910, %v911
      %v950 = vsel %vm930, %v909, %v910
      %v951 = vsel %vm930, %v908, %v909
      %v952 = vsel %vm930, %v907, %v908
      %v953 = vsel %vm930, %v906, %v907
      %v954 = vsel %vm930, %v905, %v906
      %v955 = vsel %vm930, %v904, %v905
      %v956 = vsel %vm930, %v903, %v904
      %v957 = vsel %vm930, %v902, %v903
      %v958 = vsel %vm930, %v901, %v902
      %v959 = vsel %vm930, %v900, %v901
      %v960 = vsel %vm930, %v899, %v900
      %v961 = vsel %vm930, %v898, %v899
      %v962 = vsel %vm930, %v929, %v898
      %v963 = vsel %vm866, 1, 0
      %v964 = vsel %vm867, 1, 0
      %v965 = vsel %vm868, 1, 0
      %v966 = vsel %vm869, 1, 0
      %v967 = vsel %vm870, 1, 0
      %v968 = vsel %vm871, 1, 0
      %v969 = vsel %vm872, 1, 0
      %v970 = vsel %vm873, 1, 0
      %v971 = vsel %vm874, 1, 0
      %v972 = vsel %vm875, 1, 0
      %v973 = vsel %vm876, 1, 0
      %v974 = vsel %vm877, 1, 0
      %v975 = vsel %vm878, 1, 0
      %v976 = vsel %vm879, 1, 0
      %v977 = vsel %vm880, 1, 0
      %v978 = vsel %vm881, 1, 0
      %v979 = vsel %vm882, 1, 0
      %v980 = vsel %vm883, 1, 0
      %v981 = vsel %vm884, 1, 0
      %v982 = vsel %vm885, 1, 0
      %v983 = vsel %vm886, 1, 0
      %v984 = vsel %vm887, 1, 0
      %v985 = vsel %vm888, 1, 0
      %v986 = vsel %vm889, 1, 0
      %v987 = vsel %vm890, 1, 0
      %v988 = vsel %vm891, 1, 0
      %v989 = vsel %vm892, 1, 0
      %v990 = vsel %vm893, 1, 0
      %v991 = vsel %vm894, 1, 0
      %v992 = vsel %vm895, 1, 0
      %v993 = vsel %vm896, 1, 0
      %v994 = vsel %vm897, 1, 0
      %vm995 = vcmp.eq.s32.totalorder %v963, 1
      %vm996 = vcmp.eq.s32.totalorder %v964, 1
      %vm997 = vcmp.eq.s32.totalorder %v965, 1
      %vm998 = vcmp.eq.s32.totalorder %v966, 1
      %vm999 = vcmp.eq.s32.totalorder %v967, 1
      %vm1000 = vcmp.eq.s32.totalorder %v968, 1
      %vm1001 = vcmp.eq.s32.totalorder %v969, 1
      %vm1002 = vcmp.eq.s32.totalorder %v970, 1
      %vm1003 = vcmp.eq.s32.totalorder %v971, 1
      %vm1004 = vcmp.eq.s32.totalorder %v972, 1
      %vm1005 = vcmp.eq.s32.totalorder %v973, 1
      %vm1006 = vcmp.eq.s32.totalorder %v974, 1
      %vm1007 = vcmp.eq.s32.totalorder %v975, 1
      %vm1008 = vcmp.eq.s32.totalorder %v976, 1
      %vm1009 = vcmp.eq.s32.totalorder %v977, 1
      %vm1010 = vcmp.eq.s32.totalorder %v978, 1
      %vm1011 = vcmp.eq.s32.totalorder %v979, 1
      %vm1012 = vcmp.eq.s32.totalorder %v980, 1
      %vm1013 = vcmp.eq.s32.totalorder %v981, 1
      %vm1014 = vcmp.eq.s32.totalorder %v982, 1
      %vm1015 = vcmp.eq.s32.totalorder %v983, 1
      %vm1016 = vcmp.eq.s32.totalorder %v984, 1
      %vm1017 = vcmp.eq.s32.totalorder %v985, 1
      %vm1018 = vcmp.eq.s32.totalorder %v986, 1
      %vm1019 = vcmp.eq.s32.totalorder %v987, 1
      %vm1020 = vcmp.eq.s32.totalorder %v988, 1
      %vm1021 = vcmp.eq.s32.totalorder %v989, 1
      %vm1022 = vcmp.eq.s32.totalorder %v990, 1
      %vm1023 = vcmp.eq.s32.totalorder %v991, 1
      %vm1024 = vcmp.eq.s32.totalorder %v992, 1
      %vm1025 = vcmp.eq.s32.totalorder %v993, 1
      %vm1026 = vcmp.eq.s32.totalorder %v994, 1
      %v1027 = vsel %vm995, 0.0, %v962
      %v1028 = vsel %vm996, 0.0, %v961
      %v1029 = vsel %vm997, 0.0, %v960
      %v1030 = vsel %vm998, 0.0, %v959
      %v1031 = vsel %vm999, 0.0, %v958
      %v1032 = vsel %vm1000, 0.0, %v957
      %v1033 = vsel %vm1001, 0.0, %v956
      %v1034 = vsel %vm1002, 0.0, %v955
      %v1035 = vsel %vm1003, 0.0, %v954
      %v1036 = vsel %vm1004, 0.0, %v953
      %v1037 = vsel %vm1005, 0.0, %v952
      %v1038 = vsel %vm1006, 0.0, %v951
      %v1039 = vsel %vm1007, 0.0, %v950
      %v1040 = vsel %vm1008, 0.0, %v949
      %v1041 = vsel %vm1009, 0.0, %v948
      %v1042 = vsel %vm1010, 0.0, %v947
      %v1043 = vsel %vm1011, 0.0, %v946
      %v1044 = vsel %vm1012, 0.0, %v945
      %v1045 = vsel %vm1013, 0.0, %v944
      %v1046 = vsel %vm1014, 0.0, %v943
      %v1047 = vsel %vm1015, 0.0, %v942
      %v1048 = vsel %vm1016, 0.0, %v941
      %v1049 = vsel %vm1017, 0.0, %v940
      %v1050 = vsel %vm1018, 0.0, %v939
      %v1051 = vsel %vm1019, 0.0, %v938
      %v1052 = vsel %vm1020, 0.0, %v937
      %v1053 = vsel %vm1021, 0.0, %v936
      %v1054 = vsel %vm1022, 0.0, %v935
      %v1055 = vsel %vm1023, 0.0, %v934
      %v1056 = vsel %vm1024, 0.0, %v933
      %v1057 = vsel %vm1025, 0.0, %v932
      %v1058 = vsel %vm1026, 0.0, %v931
      %vm1059 = vcmp.eq.s32.totalorder %v834, 15
      %vm1060 = vcmp.eq.s32.totalorder %v835, 15
      %vm1061 = vcmp.eq.s32.totalorder %v836, 15
      %vm1062 = vcmp.eq.s32.totalorder %v837, 15
      %vm1063 = vcmp.eq.s32.totalorder %v838, 15
      %vm1064 = vcmp.eq.s32.totalorder %v839, 15
      %vm1065 = vcmp.eq.s32.totalorder %v840, 15
      %vm1066 = vcmp.eq.s32.totalorder %v841, 15
      %vm1067 = vcmp.eq.s32.totalorder %v842, 15
      %vm1068 = vcmp.eq.s32.totalorder %v843, 15
      %vm1069 = vcmp.eq.s32.totalorder %v844, 15
      %vm1070 = vcmp.eq.s32.totalorder %v845, 15
      %vm1071 = vcmp.eq.s32.totalorder %v846, 15
      %vm1072 = vcmp.eq.s32.totalorder %v847, 15
      %vm1073 = vcmp.eq.s32.totalorder %v848, 15
      %vm1074 = vcmp.eq.s32.totalorder %v849, 15
      %vm1075 = vcmp.eq.s32.totalorder %v850, 15
      %vm1076 = vcmp.eq.s32.totalorder %v851, 15
      %vm1077 = vcmp.eq.s32.totalorder %v852, 15
      %vm1078 = vcmp.eq.s32.totalorder %v853, 15
      %vm1079 = vcmp.eq.s32.totalorder %v854, 15
      %vm1080 = vcmp.eq.s32.totalorder %v855, 15
      %vm1081 = vcmp.eq.s32.totalorder %v856, 15
      %vm1082 = vcmp.eq.s32.totalorder %v857, 15
      %vm1083 = vcmp.eq.s32.totalorder %v858, 15
      %vm1084 = vcmp.eq.s32.totalorder %v859, 15
      %vm1085 = vcmp.eq.s32.totalorder %v860, 15
      %vm1086 = vcmp.eq.s32.totalorder %v861, 15
      %vm1087 = vcmp.eq.s32.totalorder %v862, 15
      %vm1088 = vcmp.eq.s32.totalorder %v863, 15
      %vm1089 = vcmp.eq.s32.totalorder %v864, 15
      %vm1090 = vcmp.eq.s32.totalorder %v865, 15
      %v1091 = vrot.slane %v417, 1
      %v1092 = vrot.slane %v418, 1
      %v1093 = vrot.slane %v419, 1
      %v1094 = vrot.slane %v420, 1
      %v1095 = vrot.slane %v421, 1
      %v1096 = vrot.slane %v422, 1
      %v1097 = vrot.slane %v423, 1
      %v1098 = vrot.slane %v424, 1
      %v1099 = vrot.slane %v425, 1
      %v1100 = vrot.slane %v426, 1
      %v1101 = vrot.slane %v427, 1
      %v1102 = vrot.slane %v428, 1
      %v1103 = vrot.slane %v429, 1
      %v1104 = vrot.slane %v430, 1
      %v1105 = vrot.slane %v431, 1
      %v1106 = vrot.slane %v432, 1
      %v1107 = vrot.slane %v433, 1
      %v1108 = vrot.slane %v434, 1
      %v1109 = vrot.slane %v435, 1
      %v1110 = vrot.slane %v436, 1
      %v1111 = vrot.slane %v437, 1
      %v1112 = vrot.slane %v438, 1
      %v1113 = vrot.slane %v439, 1
      %v1114 = vrot.slane %v440, 1
      %v1115 = vrot.slane %v441, 1
      %v1116 = vrot.slane %v442, 1
      %v1117 = vrot.slane %v443, 1
      %v1118 = vrot.slane %v444, 1
      %v1119 = vrot.slane %v445, 1
      %v1120 = vrot.slane %v446, 1
      %v1121 = vrot.slane %v447, 1
      %v1122 = vrot.slane %v448, 1
      %vm1123 = vcmp.lt.s32.totalorder %v450, 7
      %v1124 = vsel %vm1123, %v1121, %v1122
      %v1125 = vsel %vm1123, %v1120, %v1121
      %v1126 = vsel %vm1123, %v1119, %v1120
      %v1127 = vsel %vm1123, %v1118, %v1119
      %v1128 = vsel %vm1123, %v1117, %v1118
      %v1129 = vsel %vm1123, %v1116, %v1117
      %v1130 = vsel %vm1123, %v1115, %v1116
      %v1131 = vsel %vm1123, %v1114, %v1115
      %v1132 = vsel %vm1123, %v1113, %v1114
      %v1133 = vsel %vm1123, %v1112, %v1113
      %v1134 = vsel %vm1123, %v1111, %v1112
      %v1135 = vsel %vm1123, %v1110, %v1111
      %v1136 = vsel %vm1123, %v1109, %v1110
      %v1137 = vsel %vm1123, %v1108, %v1109
      %v1138 = vsel %vm1123, %v1107, %v1108
      %v1139 = vsel %vm1123, %v1106, %v1107
      %v1140 = vsel %vm1123, %v1105, %v1106
      %v1141 = vsel %vm1123, %v1104, %v1105
      %v1142 = vsel %vm1123, %v1103, %v1104
      %v1143 = vsel %vm1123, %v1102, %v1103
      %v1144 = vsel %vm1123, %v1101, %v1102
      %v1145 = vsel %vm1123, %v1100, %v1101
      %v1146 = vsel %vm1123, %v1099, %v1100
      %v1147 = vsel %vm1123, %v1098, %v1099
      %v1148 = vsel %vm1123, %v1097, %v1098
      %v1149 = vsel %vm1123, %v1096, %v1097
      %v1150 = vsel %vm1123, %v1095, %v1096
      %v1151 = vsel %vm1123, %v1094, %v1095
      %v1152 = vsel %vm1123, %v1093, %v1094
      %v1153 = vsel %vm1123, %v1092, %v1093
      %v1154 = vsel %vm1123, %v1091, %v1092
      %v1155 = vsel %vm1123, %v1122, %v1091
      %v1156 = vsel %vm1059, 1, 0
      %v1157 = vsel %vm1060, 1, 0
      %v1158 = vsel %vm1061, 1, 0
      %v1159 = vsel %vm1062, 1, 0
      %v1160 = vsel %vm1063, 1, 0
      %v1161 = vsel %vm1064, 1, 0
      %v1162 = vsel %vm1065, 1, 0
      %v1163 = vsel %vm1066, 1, 0
      %v1164 = vsel %vm1067, 1, 0
      %v1165 = vsel %vm1068, 1, 0
      %v1166 = vsel %vm1069, 1, 0
      %v1167 = vsel %vm1070, 1, 0
      %v1168 = vsel %vm1071, 1, 0
      %v1169 = vsel %vm1072, 1, 0
      %v1170 = vsel %vm1073, 1, 0
      %v1171 = vsel %vm1074, 1, 0
      %v1172 = vsel %vm1075, 1, 0
      %v1173 = vsel %vm1076, 1, 0
      %v1174 = vsel %vm1077, 1, 0
      %v1175 = vsel %vm1078, 1, 0
      %v1176 = vsel %vm1079, 1, 0
      %v1177 = vsel %vm1080, 1, 0
      %v1178 = vsel %vm1081, 1, 0
      %v1179 = vsel %vm1082, 1, 0
      %v1180 = vsel %vm1083, 1, 0
      %v1181 = vsel %vm1084, 1, 0
      %v1182 = vsel %vm1085, 1, 0
      %v1183 = vsel %vm1086, 1, 0
      %v1184 = vsel %vm1087, 1, 0
      %v1185 = vsel %vm1088, 1, 0
      %v1186 = vsel %vm1089, 1, 0
      %v1187 = vsel %vm1090, 1, 0
      %vm1188 = vcmp.eq.s32.totalorder %v1156, 1
      %vm1189 = vcmp.eq.s32.totalorder %v1157, 1
      %vm1190 = vcmp.eq.s32.totalorder %v1158, 1
      %vm1191 = vcmp.eq.s32.totalorder %v1159, 1
      %vm1192 = vcmp.eq.s32.totalorder %v1160, 1
      %vm1193 = vcmp.eq.s32.totalorder %v1161, 1
      %vm1194 = vcmp.eq.s32.totalorder %v1162, 1
      %vm1195 = vcmp.eq.s32.totalorder %v1163, 1
      %vm1196 = vcmp.eq.s32.totalorder %v1164, 1
      %vm1197 = vcmp.eq.s32.totalorder %v1165, 1
      %vm1198 = vcmp.eq.s32.totalorder %v1166, 1
      %vm1199 = vcmp.eq.s32.totalorder %v1167, 1
      %vm1200 = vcmp.eq.s32.totalorder %v1168, 1
      %vm1201 = vcmp.eq.s32.totalorder %v1169, 1
      %vm1202 = vcmp.eq.s32.totalorder %v1170, 1
      %vm1203 = vcmp.eq.s32.totalorder %v1171, 1
      %vm1204 = vcmp.eq.s32.totalorder %v1172, 1
      %vm1205 = vcmp.eq.s32.totalorder %v1173, 1
      %vm1206 = vcmp.eq.s32.totalorder %v1174, 1
      %vm1207 = vcmp.eq.s32.totalorder %v1175, 1
      %vm1208 = vcmp.eq.s32.totalorder %v1176, 1
      %vm1209 = vcmp.eq.s32.totalorder %v1177, 1
      %vm1210 = vcmp.eq.s32.totalorder %v1178, 1
      %vm1211 = vcmp.eq.s32.totalorder %v1179, 1
      %vm1212 = vcmp.eq.s32.totalorder %v1180, 1
      %vm1213 = vcmp.eq.s32.totalorder %v1181, 1
      %vm1214 = vcmp.eq.s32.totalorder %v1182, 1
      %vm1215 = vcmp.eq.s32.totalorder %v1183, 1
      %vm1216 = vcmp.eq.s32.totalorder %v1184, 1
      %vm1217 = vcmp.eq.s32.totalorder %v1185, 1
      %vm1218 = vcmp.eq.s32.totalorder %v1186, 1
      %vm1219 = vcmp.eq.s32.totalorder %v1187, 1
      %v1220 = vsel %vm1188, 0.0, %v1154
      %v1221 = vsel %vm1189, 0.0, %v1153
      %v1222 = vsel %vm1190, 0.0, %v1152
      %v1223 = vsel %vm1191, 0.0, %v1151
      %v1224 = vsel %vm1192, 0.0, %v1150
      %v1225 = vsel %vm1193, 0.0, %v1149
      %v1226 = vsel %vm1194, 0.0, %v1148
      %v1227 = vsel %vm1195, 0.0, %v1147
      %v1228 = vsel %vm1196, 0.0, %v1146
      %v1229 = vsel %vm1197, 0.0, %v1145
      %v1230 = vsel %vm1198, 0.0, %v1144
      %v1231 = vsel %vm1199, 0.0, %v1143
      %v1232 = vsel %vm1200, 0.0, %v1142
      %v1233 = vsel %vm1201, 0.0, %v1141
      %v1234 = vsel %vm1202, 0.0, %v1140
      %v1235 = vsel %vm1203, 0.0, %v1139
      %v1236 = vsel %vm1204, 0.0, %v1138
      %v1237 = vsel %vm1205, 0.0, %v1137
      %v1238 = vsel %vm1206, 0.0, %v1136
      %v1239 = vsel %vm1207, 0.0, %v1135
      %v1240 = vsel %vm1208, 0.0, %v1134
      %v1241 = vsel %vm1209, 0.0, %v1133
      %v1242 = vsel %vm1210, 0.0, %v1132
      %v1243 = vsel %vm1211, 0.0, %v1131
      %v1244 = vsel %vm1212, 0.0, %v1130
      %v1245 = vsel %vm1213, 0.0, %v1129
      %v1246 = vsel %vm1214, 0.0, %v1128
      %v1247 = vsel %vm1215, 0.0, %v1127
      %v1248 = vsel %vm1216, 0.0, %v1126
      %v1249 = vsel %vm1217, 0.0, %v1125
      %v1250 = vsel %vm1218, 0.0, %v1124
      %v1251 = vsel %vm1219, 0.0, %v1155
      %vm1252 = vcmask 191488
      %1253 = vst.msk [vmem:[#allocation2] sm:$0xf] %vm1252, 0
      %1254 = vst.msk [vmem:[#allocation2 + $0x4] sm:$0xf] %vm1252, 0
      %1255 = vst.msk [vmem:[#allocation2 + $0x88] sm:$0xf] %vm1252, 0
      %1256 = vst.msk [vmem:[#allocation2 + $0x8c] sm:$0xf] %vm1252, 0
      %v1257 = vpack.c.bf16 %v1028, %v1027
      %v1258 = vpack.c.bf16 %v1030, %v1029
      %v1259 = vpack.c.bf16 %v1032, %v1031
      %v1260 = vpack.c.bf16 %v1034, %v1033
      %v1261 = vpack.c.bf16 %v1036, %v1035
      %v1262 = vpack.c.bf16 %v1038, %v1037
      %v1263 = vpack.c.bf16 %v1040, %v1039
      %v1264 = vpack.c.bf16 %v1042, %v1041
      %v1265 = vpack.c.bf16 %v1044, %v1043
      %v1266 = vpack.c.bf16 %v1046, %v1045
      %v1267 = vpack.c.bf16 %v1048, %v1047
      %v1268 = vpack.c.bf16 %v1050, %v1049
      %v1269 = vpack.c.bf16 %v1052, %v1051
      %v1270 = vpack.c.bf16 %v1054, %v1053
      %v1271 = vpack.c.bf16 %v1056, %v1055
      %v1272 = vpack.c.bf16 %v1058, %v1057
      %v1289 = vunpack.c.l.b16 %v1257
      %v1290 = vunpack.c.h.b16 %v1257
      %v1291 = vunpack.c.l.b16 %v1258
      %v1292 = vunpack.c.h.b16 %v1258
      %v1293 = vunpack.c.l.b16 %v1259
      %v1294 = vunpack.c.h.b16 %v1259
      %v1295 = vunpack.c.l.b16 %v1260
      %v1296 = vunpack.c.h.b16 %v1260
      %v1297 = vunpack.c.l.b16 %v1261
      %v1298 = vunpack.c.h.b16 %v1261
      %v1299 = vunpack.c.l.b16 %v1262
      %v1300 = vunpack.c.h.b16 %v1262
      %v1301 = vunpack.c.l.b16 %v1263
      %v1302 = vunpack.c.h.b16 %v1263
      %v1303 = vunpack.c.l.b16 %v1264
      %v1304 = vunpack.c.h.b16 %v1264
      %v1305 = vunpack.c.l.b16 %v1265
      %v1306 = vunpack.c.h.b16 %v1265
      %v1307 = vunpack.c.l.b16 %v1266
      %v1308 = vunpack.c.h.b16 %v1266
      %v1309 = vunpack.c.l.b16 %v1267
      %v1310 = vunpack.c.h.b16 %v1267
      %v1311 = vunpack.c.l.b16 %v1268
      %v1312 = vunpack.c.h.b16 %v1268
      %v1313 = vunpack.c.l.b16 %v1269
      %v1314 = vunpack.c.h.b16 %v1269
      %v1315 = vunpack.c.l.b16 %v1270
      %v1316 = vunpack.c.h.b16 %v1270
      %v1317 = vunpack.c.l.b16 %v1271
      %v1318 = vunpack.c.h.b16 %v1271
      %v1319 = vunpack.c.l.b16 %v1272
      %v1320 = vunpack.c.h.b16 %v1272
      %v1321 = vpack.c.b16 %v1289, %v1289
      %v1322 = vpack.c.b16 %v1290, %v1290
      %v1323 = vpack.c.b16 %v1291, %v1291
      %v1324 = vpack.c.b16 %v1292, %v1292
      %v1325 = vpack.c.b16 %v1293, %v1293
      %v1326 = vpack.c.b16 %v1294, %v1294
      %v1327 = vpack.c.b16 %v1295, %v1295
      %v1328 = vpack.c.b16 %v1296, %v1296
      %v1329 = vpack.c.b16 %v1297, %v1297
      %v1330 = vpack.c.b16 %v1298, %v1298
      %v1331 = vpack.c.b16 %v1299, %v1299
      %v1332 = vpack.c.b16 %v1300, %v1300
      %v1333 = vpack.c.b16 %v1301, %v1301
      %v1334 = vpack.c.b16 %v1302, %v1302
      %v1335 = vpack.c.b16 %v1303, %v1303
      %v1336 = vpack.c.b16 %v1304, %v1304
      %v1337 = vpack.c.b16 %v1305, %v1305
      %v1338 = vpack.c.b16 %v1306, %v1306
      %v1339 = vpack.c.b16 %v1307, %v1307
      %v1340 = vpack.c.b16 %v1308, %v1308
      %v1341 = vpack.c.b16 %v1309, %v1309
      %v1342 = vpack.c.b16 %v1310, %v1310
      %v1343 = vpack.c.b16 %v1311, %v1311
      %v1344 = vpack.c.b16 %v1312, %v1312
      %v1345 = vpack.c.b16 %v1313, %v1313
      %v1346 = vpack.c.b16 %v1314, %v1314
      %v1347 = vpack.c.b16 %v1315, %v1315
      %v1348 = vpack.c.b16 %v1316, %v1316
      %v1349 = vpack.c.b16 %v1317, %v1317
      %v1350 = vpack.c.b16 %v1318, %v1318
      %v1351 = vpack.c.b16 %v1319, %v1319
      %v1352 = vpack.c.b16 %v1320, %v1320
      %vm1385 = vcmask 60416
      %1386 = vst.msk [vmem:[#allocation2 + $0x8] sm:$0xf] %vm1385, %v1321
      %1387 = vst.msk [vmem:[#allocation2 + $0xc] sm:$0xf] %vm1385, %v1322
      %1388 = vst.msk [vmem:[#allocation2 + $0x10] sm:$0xf] %vm1385, %v1323
      %1389 = vst.msk [vmem:[#allocation2 + $0x14] sm:$0xf] %vm1385, %v1324
      %1390 = vst.msk [vmem:[#allocation2 + $0x18] sm:$0xf] %vm1385, %v1325
      %1391 = vst.msk [vmem:[#allocation2 + $0x1c] sm:$0xf] %vm1385, %v1326
      %1392 = vst.msk [vmem:[#allocation2 + $0x20] sm:$0xf] %vm1385, %v1327
      %1393 = vst.msk [vmem:[#allocation2 + $0x24] sm:$0xf] %vm1385, %v1328
      %1394 = vst.msk [vmem:[#allocation2 + $0x28] sm:$0xf] %vm1385, %v1329
      %1395 = vst.msk [vmem:[#allocation2 + $0x2c] sm:$0xf] %vm1385, %v1330
      %1396 = vst.msk [vmem:[#allocation2 + $0x30] sm:$0xf] %vm1385, %v1331
      %1397 = vst.msk [vmem:[#allocation2 + $0x34] sm:$0xf] %vm1385, %v1332
      %1398 = vst.msk [vmem:[#allocation2 + $0x38] sm:$0xf] %vm1385, %v1333
      %1399 = vst.msk [vmem:[#allocation2 + $0x3c] sm:$0xf] %vm1385, %v1334
      %1400 = vst.msk [vmem:[#allocation2 + $0x40] sm:$0xf] %vm1385, %v1335
      %1401 = vst.msk [vmem:[#allocation2 + $0x44] sm:$0xf] %vm1385, %v1336
      %1402 = vst.msk [vmem:[#allocation2 + $0x48] sm:$0xf] %vm1385, %v1337
      %1403 = vst.msk [vmem:[#allocation2 + $0x4c] sm:$0xf] %vm1385, %v1338
      %1404 = vst.msk [vmem:[#allocation2 + $0x50] sm:$0xf] %vm1385, %v1339
      %1405 = vst.msk [vmem:[#allocation2 + $0x54] sm:$0xf] %vm1385, %v1340
      %1406 = vst.msk [vmem:[#allocation2 + $0x58] sm:$0xf] %vm1385, %v1341
      %1407 = vst.msk [vmem:[#allocation2 + $0x5c] sm:$0xf] %vm1385, %v1342
      %1408 = vst.msk [vmem:[#allocation2 + $0x60] sm:$0xf] %vm1385, %v1343
      %1409 = vst.msk [vmem:[#allocation2 + $0x64] sm:$0xf] %vm1385, %v1344
      %1410 = vst.msk [vmem:[#allocation2 + $0x68] sm:$0xf] %vm1385, %v1345
      %1411 = vst.msk [vmem:[#allocation2 + $0x6c] sm:$0xf] %vm1385, %v1346
      %1412 = vst.msk [vmem:[#allocation2 + $0x70] sm:$0xf] %vm1385, %v1347
      %1413 = vst.msk [vmem:[#allocation2 + $0x74] sm:$0xf] %vm1385, %v1348
      %1414 = vst.msk [vmem:[#allocation2 + $0x78] sm:$0xf] %vm1385, %v1349
      %1415 = vst.msk [vmem:[#allocation2 + $0x7c] sm:$0xf] %vm1385, %v1350
      %1416 = vst.msk [vmem:[#allocation2 + $0x80] sm:$0xf] %vm1385, %v1351
      %1417 = vst.msk [vmem:[#allocation2 + $0x84] sm:$0xf] %vm1385, %v1352
      %v1418 = vpack.c.bf16 %v418, %v417
      %v1419 = vpack.c.bf16 %v420, %v419
      %v1420 = vpack.c.bf16 %v422, %v421
      %v1421 = vpack.c.bf16 %v424, %v423
      %v1422 = vpack.c.bf16 %v426, %v425
      %v1423 = vpack.c.bf16 %v428, %v427
      %v1424 = vpack.c.bf16 %v430, %v429
      %v1425 = vpack.c.bf16 %v432, %v431
      %v1426 = vpack.c.bf16 %v434, %v433
      %v1427 = vpack.c.bf16 %v436, %v435
      %v1428 = vpack.c.bf16 %v438, %v437
      %v1429 = vpack.c.bf16 %v440, %v439
      %v1430 = vpack.c.bf16 %v442, %v441
      %v1431 = vpack.c.bf16 %v444, %v443
      %v1432 = vpack.c.bf16 %v446, %v445
      %v1433 = vpack.c.bf16 %v448, %v447
      %v1450 = vunpack.c.l.b16 %v1418
      %v1451 = vunpack.c.h.b16 %v1418
      %v1452 = vunpack.c.l.b16 %v1419
      %v1453 = vunpack.c.h.b16 %v1419
      %v1454 = vunpack.c.l.b16 %v1420
      %v1455 = vunpack.c.h.b16 %v1420
      %v1456 = vunpack.c.l.b16 %v1421
      %v1457 = vunpack.c.h.b16 %v1421
      %v1458 = vunpack.c.l.b16 %v1422
      %v1459 = vunpack.c.h.b16 %v1422
      %v1460 = vunpack.c.l.b16 %v1423
      %v1461 = vunpack.c.h.b16 %v1423
      %v1462 = vunpack.c.l.b16 %v1424
      %v1463 = vunpack.c.h.b16 %v1424
      %v1464 = vunpack.c.l.b16 %v1425
      %v1465 = vunpack.c.h.b16 %v1425
      %v1466 = vunpack.c.l.b16 %v1426
      %v1467 = vunpack.c.h.b16 %v1426
      %v1468 = vunpack.c.l.b16 %v1427
      %v1469 = vunpack.c.h.b16 %v1427
      %v1470 = vunpack.c.l.b16 %v1428
      %v1471 = vunpack.c.h.b16 %v1428
      %v1472 = vunpack.c.l.b16 %v1429
      %v1473 = vunpack.c.h.b16 %v1429
      %v1474 = vunpack.c.l.b16 %v1430
      %v1475 = vunpack.c.h.b16 %v1430
      %v1476 = vunpack.c.l.b16 %v1431
      %v1477 = vunpack.c.h.b16 %v1431
      %v1478 = vunpack.c.l.b16 %v1432
      %v1479 = vunpack.c.h.b16 %v1432
      %v1480 = vunpack.c.l.b16 %v1433
      %v1481 = vunpack.c.h.b16 %v1433
      %v1482 = vpack.c.b16 %v1450, %v1450
      %v1483 = vpack.c.b16 %v1451, %v1451
      %v1484 = vpack.c.b16 %v1452, %v1452
      %v1485 = vpack.c.b16 %v1453, %v1453
      %v1486 = vpack.c.b16 %v1454, %v1454
      %v1487 = vpack.c.b16 %v1455, %v1455
      %v1488 = vpack.c.b16 %v1456, %v1456
      %v1489 = vpack.c.b16 %v1457, %v1457
      %v1490 = vpack.c.b16 %v1458, %v1458
      %v1491 = vpack.c.b16 %v1459, %v1459
      %v1492 = vpack.c.b16 %v1460, %v1460
      %v1493 = vpack.c.b16 %v1461, %v1461
      %v1494 = vpack.c.b16 %v1462, %v1462
      %v1495 = vpack.c.b16 %v1463, %v1463
      %v1496 = vpack.c.b16 %v1464, %v1464
      %v1497 = vpack.c.b16 %v1465, %v1465
      %v1498 = vpack.c.b16 %v1466, %v1466
      %v1499 = vpack.c.b16 %v1467, %v1467
      %v1500 = vpack.c.b16 %v1468, %v1468
      %v1501 = vpack.c.b16 %v1469, %v1469
      %v1502 = vpack.c.b16 %v1470, %v1470
      %v1503 = vpack.c.b16 %v1471, %v1471
      %v1504 = vpack.c.b16 %v1472, %v1472
      %v1505 = vpack.c.b16 %v1473, %v1473
      %v1506 = vpack.c.b16 %v1474, %v1474
      %v1507 = vpack.c.b16 %v1475, %v1475
      %v1508 = vpack.c.b16 %v1476, %v1476
      %v1509 = vpack.c.b16 %v1477, %v1477
      %v1510 = vpack.c.b16 %v1478, %v1478
      %v1511 = vpack.c.b16 %v1479, %v1479
      %v1512 = vpack.c.b16 %v1480, %v1480
      %v1513 = vpack.c.b16 %v1481, %v1481
      %1514 = vrot.lane.b32.xlu0 %v1482, 8
      %v1515 = vpop.permute.xlu0 %1514
      %1516 = vrot.lane.b32.xlu0 %v1483, 8
      %v1517 = vpop.permute.xlu0 %1516
      %1518 = vrot.lane.b32.xlu0 %v1484, 8
      %v1519 = vpop.permute.xlu0 %1518
      %1520 = vrot.lane.b32.xlu0 %v1485, 8
      %v1521 = vpop.permute.xlu0 %1520
      %1522 = vrot.lane.b32.xlu0 %v1486, 8
      %v1523 = vpop.permute.xlu0 %1522
      %1524 = vrot.lane.b32.xlu0 %v1487, 8
      %v1525 = vpop.permute.xlu0 %1524
      %1526 = vrot.lane.b32.xlu0 %v1488, 8
      %v1527 = vpop.permute.xlu0 %1526
      %1528 = vrot.lane.b32.xlu0 %v1489, 8
      %v1529 = vpop.permute.xlu0 %1528
      %1530 = vrot.lane.b32.xlu0 %v1490, 8
      %v1531 = vpop.permute.xlu0 %1530
      %1532 = vrot.lane.b32.xlu0 %v1491, 8
      %v1533 = vpop.permute.xlu0 %1532
      %1534 = vrot.lane.b32.xlu0 %v1492, 8
      %v1535 = vpop.permute.xlu0 %1534
      %1536 = vrot.lane.b32.xlu0 %v1493, 8
      %v1537 = vpop.permute.xlu0 %1536
      %1538 = vrot.lane.b32.xlu0 %v1494, 8
      %v1539 = vpop.permute.xlu0 %1538
      %1540 = vrot.lane.b32.xlu0 %v1495, 8
      %v1541 = vpop.permute.xlu0 %1540
      %1542 = vrot.lane.b32.xlu0 %v1496, 8
      %v1543 = vpop.permute.xlu0 %1542
      %1544 = vrot.lane.b32.xlu0 %v1497, 8
      %v1545 = vpop.permute.xlu0 %1544
      %1546 = vrot.lane.b32.xlu0 %v1498, 8
      %v1547 = vpop.permute.xlu0 %1546
      %1548 = vrot.lane.b32.xlu0 %v1499, 8
      %v1549 = vpop.permute.xlu0 %1548
      %1550 = vrot.lane.b32.xlu0 %v1500, 8
      %v1551 = vpop.permute.xlu0 %1550
      %1552 = vrot.lane.b32.xlu0 %v1501, 8
      %v1553 = vpop.permute.xlu0 %1552
      %1554 = vrot.lane.b32.xlu0 %v1502, 8
      %v1555 = vpop.permute.xlu0 %1554
      %1556 = vrot.lane.b32.xlu0 %v1503, 8
      %v1557 = vpop.permute.xlu0 %1556
      %1558 = vrot.lane.b32.xlu0 %v1504, 8
      %v1559 = vpop.permute.xlu0 %1558
      %1560 = vrot.lane.b32.xlu0 %v1505, 8
      %v1561 = vpop.permute.xlu0 %1560
      %1562 = vrot.lane.b32.xlu0 %v1506, 8
      %v1563 = vpop.permute.xlu0 %1562
      %1564 = vrot.lane.b32.xlu0 %v1507, 8
      %v1565 = vpop.permute.xlu0 %1564
      %1566 = vrot.lane.b32.xlu0 %v1508, 8
      %v1567 = vpop.permute.xlu0 %1566
      %1568 = vrot.lane.b32.xlu0 %v1509, 8
      %v1569 = vpop.permute.xlu0 %1568
      %1570 = vrot.lane.b32.xlu0 %v1510, 8
      %v1571 = vpop.permute.xlu0 %1570
      %1572 = vrot.lane.b32.xlu0 %v1511, 8
      %v1573 = vpop.permute.xlu0 %1572
      %1574 = vrot.lane.b32.xlu0 %v1512, 8
      %v1575 = vpop.permute.xlu0 %1574
      %1576 = vrot.lane.b32.xlu0 %v1513, 8
      %v1577 = vpop.permute.xlu0 %1576
      %vm1610 = vcmask 126016
      %1611 = vst.msk [vmem:[#allocation2 + $0x8] sm:$0xf] %vm1610, %v1515
      %1612 = vst.msk [vmem:[#allocation2 + $0xc] sm:$0xf] %vm1610, %v1517
      %1613 = vst.msk [vmem:[#allocation2 + $0x10] sm:$0xf] %vm1610, %v1519
      %1614 = vst.msk [vmem:[#allocation2 + $0x14] sm:$0xf] %vm1610, %v1521
      %1615 = vst.msk [vmem:[#allocation2 + $0x18] sm:$0xf] %vm1610, %v1523
      %1616 = vst.msk [vmem:[#allocation2 + $0x1c] sm:$0xf] %vm1610, %v1525
      %1617 = vst.msk [vmem:[#allocation2 + $0x20] sm:$0xf] %vm1610, %v1527
      %1618 = vst.msk [vmem:[#allocation2 + $0x24] sm:$0xf] %vm1610, %v1529
      %1619 = vst.msk [vmem:[#allocation2 + $0x28] sm:$0xf] %vm1610, %v1531
      %1620 = vst.msk [vmem:[#allocation2 + $0x2c] sm:$0xf] %vm1610, %v1533
      %1621 = vst.msk [vmem:[#allocation2 + $0x30] sm:$0xf] %vm1610, %v1535
      %1622 = vst.msk [vmem:[#allocation2 + $0x34] sm:$0xf] %vm1610, %v1537
      %1623 = vst.msk [vmem:[#allocation2 + $0x38] sm:$0xf] %vm1610, %v1539
      %1624 = vst.msk [vmem:[#allocation2 + $0x3c] sm:$0xf] %vm1610, %v1541
      %1625 = vst.msk [vmem:[#allocation2 + $0x40] sm:$0xf] %vm1610, %v1543
      %1626 = vst.msk [vmem:[#allocation2 + $0x44] sm:$0xf] %vm1610, %v1545
      %1627 = vst.msk [vmem:[#allocation2 + $0x48] sm:$0xf] %vm1610, %v1547
      %1628 = vst.msk [vmem:[#allocation2 + $0x4c] sm:$0xf] %vm1610, %v1549
      %1629 = vst.msk [vmem:[#allocation2 + $0x50] sm:$0xf] %vm1610, %v1551
      %1630 = vst.msk [vmem:[#allocation2 + $0x54] sm:$0xf] %vm1610, %v1553
      %1631 = vst.msk [vmem:[#allocation2 + $0x58] sm:$0xf] %vm1610, %v1555
      %1632 = vst.msk [vmem:[#allocation2 + $0x5c] sm:$0xf] %vm1610, %v1557
      %1633 = vst.msk [vmem:[#allocation2 + $0x60] sm:$0xf] %vm1610, %v1559
      %1634 = vst.msk [vmem:[#allocation2 + $0x64] sm:$0xf] %vm1610, %v1561
      %1635 = vst.msk [vmem:[#allocation2 + $0x68] sm:$0xf] %vm1610, %v1563
      %1636 = vst.msk [vmem:[#allocation2 + $0x6c] sm:$0xf] %vm1610, %v1565
      %1637 = vst.msk [vmem:[#allocation2 + $0x70] sm:$0xf] %vm1610, %v1567
      %1638 = vst.msk [vmem:[#allocation2 + $0x74] sm:$0xf] %vm1610, %v1569
      %1639 = vst.msk [vmem:[#allocation2 + $0x78] sm:$0xf] %vm1610, %v1571
      %1640 = vst.msk [vmem:[#allocation2 + $0x7c] sm:$0xf] %vm1610, %v1573
      %1641 = vst.msk [vmem:[#allocation2 + $0x80] sm:$0xf] %vm1610, %v1575
      %1642 = vst.msk [vmem:[#allocation2 + $0x84] sm:$0xf] %vm1610, %v1577
      %v1643 = vpack.c.bf16 %v1221, %v1220
      %v1644 = vpack.c.bf16 %v1223, %v1222
      %v1645 = vpack.c.bf16 %v1225, %v1224
      %v1646 = vpack.c.bf16 %v1227, %v1226
      %v1647 = vpack.c.bf16 %v1229, %v1228
      %v1648 = vpack.c.bf16 %v1231, %v1230
      %v1649 = vpack.c.bf16 %v1233, %v1232
      %v1650 = vpack.c.bf16 %v1235, %v1234
      %v1651 = vpack.c.bf16 %v1237, %v1236
      %v1652 = vpack.c.bf16 %v1239, %v1238
      %v1653 = vpack.c.bf16 %v1241, %v1240
      %v1654 = vpack.c.bf16 %v1243, %v1242
      %v1655 = vpack.c.bf16 %v1245, %v1244
      %v1656 = vpack.c.bf16 %v1247, %v1246
      %v1657 = vpack.c.bf16 %v1249, %v1248
      %v1658 = vpack.c.bf16 %v1251, %v1250
      %v1675 = vunpack.c.l.b16 %v1643
      %v1676 = vunpack.c.h.b16 %v1643
      %v1677 = vunpack.c.l.b16 %v1644
      %v1678 = vunpack.c.h.b16 %v1644
      %v1679 = vunpack.c.l.b16 %v1645
      %v1680 = vunpack.c.h.b16 %v1645
      %v1681 = vunpack.c.l.b16 %v1646
      %v1682 = vunpack.c.h.b16 %v1646
      %v1683 = vunpack.c.l.b16 %v1647
      %v1684 = vunpack.c.h.b16 %v1647
      %v1685 = vunpack.c.l.b16 %v1648
      %v1686 = vunpack.c.h.b16 %v1648
      %v1687 = vunpack.c.l.b16 %v1649
      %v1688 = vunpack.c.h.b16 %v1649
      %v1689 = vunpack.c.l.b16 %v1650
      %v1690 = vunpack.c.h.b16 %v1650
      %v1691 = vunpack.c.l.b16 %v1651
      %v1692 = vunpack.c.h.b16 %v1651
      %v1693 = vunpack.c.l.b16 %v1652
      %v1694 = vunpack.c.h.b16 %v1652
      %v1695 = vunpack.c.l.b16 %v1653
      %v1696 = vunpack.c.h.b16 %v1653
      %v1697 = vunpack.c.l.b16 %v1654
      %v1698 = vunpack.c.h.b16 %v1654
      %v1699 = vunpack.c.l.b16 %v1655
      %v1700 = vunpack.c.h.b16 %v1655
      %v1701 = vunpack.c.l.b16 %v1656
      %v1702 = vunpack.c.h.b16 %v1656
      %v1703 = vunpack.c.l.b16 %v1657
      %v1704 = vunpack.c.h.b16 %v1657
      %v1705 = vunpack.c.l.b16 %v1658
      %v1706 = vunpack.c.h.b16 %v1658
      %v1707 = vpack.c.b16 %v1675, %v1675
      %v1708 = vpack.c.b16 %v1676, %v1676
      %v1709 = vpack.c.b16 %v1677, %v1677
      %v1710 = vpack.c.b16 %v1678, %v1678
      %v1711 = vpack.c.b16 %v1679, %v1679
      %v1712 = vpack.c.b16 %v1680, %v1680
      %v1713 = vpack.c.b16 %v1681, %v1681
      %v1714 = vpack.c.b16 %v1682, %v1682
      %v1715 = vpack.c.b16 %v1683, %v1683
      %v1716 = vpack.c.b16 %v1684, %v1684
      %v1717 = vpack.c.b16 %v1685, %v1685
      %v1718 = vpack.c.b16 %v1686, %v1686
      %v1719 = vpack.c.b16 %v1687, %v1687
      %v1720 = vpack.c.b16 %v1688, %v1688
      %v1721 = vpack.c.b16 %v1689, %v1689
      %v1722 = vpack.c.b16 %v1690, %v1690
      %v1723 = vpack.c.b16 %v1691, %v1691
      %v1724 = vpack.c.b16 %v1692, %v1692
      %v1725 = vpack.c.b16 %v1693, %v1693
      %v1726 = vpack.c.b16 %v1694, %v1694
      %v1727 = vpack.c.b16 %v1695, %v1695
      %v1728 = vpack.c.b16 %v1696, %v1696
      %v1729 = vpack.c.b16 %v1697, %v1697
      %v1730 = vpack.c.b16 %v1698, %v1698
      %v1731 = vpack.c.b16 %v1699, %v1699
      %v1732 = vpack.c.b16 %v1700, %v1700
      %v1733 = vpack.c.b16 %v1701, %v1701
      %v1734 = vpack.c.b16 %v1702, %v1702
      %v1735 = vpack.c.b16 %v1703, %v1703
      %v1736 = vpack.c.b16 %v1704, %v1704
      %v1737 = vpack.c.b16 %v1705, %v1705
      %v1738 = vpack.c.b16 %v1706, %v1706
      %1739 = vrot.lane.b32.xlu0 %v1707, 16
      %v1740 = vpop.permute.xlu0 %1739
      %1741 = vrot.lane.b32.xlu0 %v1708, 16
      %v1742 = vpop.permute.xlu0 %1741
      %1743 = vrot.lane.b32.xlu0 %v1709, 16
      %v1744 = vpop.permute.xlu0 %1743
      %1745 = vrot.lane.b32.xlu0 %v1710, 16
      %v1746 = vpop.permute.xlu0 %1745
      %1747 = vrot.lane.b32.xlu0 %v1711, 16
      %v1748 = vpop.permute.xlu0 %1747
      %1749 = vrot.lane.b32.xlu0 %v1712, 16
      %v1750 = vpop.permute.xlu0 %1749
      %1751 = vrot.lane.b32.xlu0 %v1713, 16
      %v1752 = vpop.permute.xlu0 %1751
      %1753 = vrot.lane.b32.xlu0 %v1714, 16
      %v1754 = vpop.permute.xlu0 %1753
      %1755 = vrot.lane.b32.xlu0 %v1715, 16
      %v1756 = vpop.permute.xlu0 %1755
      %1757 = vrot.lane.b32.xlu0 %v1716, 16
      %v1758 = vpop.permute.xlu0 %1757
      %1759 = vrot.lane.b32.xlu0 %v1717, 16
      %v1760 = vpop.permute.xlu0 %1759
      %1761 = vrot.lane.b32.xlu0 %v1718, 16
      %v1762 = vpop.permute.xlu0 %1761
      %1763 = vrot.lane.b32.xlu0 %v1719, 16
      %v1764 = vpop.permute.xlu0 %1763
      %1765 = vrot.lane.b32.xlu0 %v1720, 16
      %v1766 = vpop.permute.xlu0 %1765
      %1767 = vrot.lane.b32.xlu0 %v1721, 16
      %v1768 = vpop.permute.xlu0 %1767
      %1769 = vrot.lane.b32.xlu0 %v1722, 16
      %v1770 = vpop.permute.xlu0 %1769
      %1771 = vrot.lane.b32.xlu0 %v1723, 16
      %v1772 = vpop.permute.xlu0 %1771
      %1773 = vrot.lane.b32.xlu0 %v1724, 16
      %v1774 = vpop.permute.xlu0 %1773
      %1775 = vrot.lane.b32.xlu0 %v1725, 16
      %v1776 = vpop.permute.xlu0 %1775
      %1777 = vrot.lane.b32.xlu0 %v1726, 16
      %v1778 = vpop.permute.xlu0 %1777
      %1779 = vrot.lane.b32.xlu0 %v1727, 16
      %v1780 = vpop.permute.xlu0 %1779
      %1781 = vrot.lane.b32.xlu0 %v1728, 16
      %v1782 = vpop.permute.xlu0 %1781
      %1783 = vrot.lane.b32.xlu0 %v1729, 16
      %v1784 = vpop.permute.xlu0 %1783
      %1785 = vrot.lane.b32.xlu0 %v1730, 16
      %v1786 = vpop.permute.xlu0 %1785
      %1787 = vrot.lane.b32.xlu0 %v1731, 16
      %v1788 = vpop.permute.xlu0 %1787
      %1789 = vrot.lane.b32.xlu0 %v1732, 16
      %v1790 = vpop.permute.xlu0 %1789
      %1791 = vrot.lane.b32.xlu0 %v1733, 16
      %v1792 = vpop.permute.xlu0 %1791
      %1793 = vrot.lane.b32.xlu0 %v1734, 16
      %v1794 = vpop.permute.xlu0 %1793
      %1795 = vrot.lane.b32.xlu0 %v1735, 16
      %v1796 = vpop.permute.xlu0 %1795
      %1797 = vrot.lane.b32.xlu0 %v1736, 16
      %v1798 = vpop.permute.xlu0 %1797
      %1799 = vrot.lane.b32.xlu0 %v1737, 16
      %v1800 = vpop.permute.xlu0 %1799
      %1801 = vrot.lane.b32.xlu0 %v1738, 16
      %v1802 = vpop.permute.xlu0 %1801
      %vm1835 = vcmask 191616
      %1836 = vst.msk [vmem:[#allocation2 + $0x8] sm:$0xf] %vm1835, %v1740
      %1837 = vst.msk [vmem:[#allocation2 + $0xc] sm:$0xf] %vm1835, %v1742
      %1838 = vst.msk [vmem:[#allocation2 + $0x10] sm:$0xf] %vm1835, %v1744
      %1839 = vst.msk [vmem:[#allocation2 + $0x14] sm:$0xf] %vm1835, %v1746
      %1840 = vst.msk [vmem:[#allocation2 + $0x18] sm:$0xf] %vm1835, %v1748
      %1841 = vst.msk [vmem:[#allocation2 + $0x1c] sm:$0xf] %vm1835, %v1750
      %1842 = vst.msk [vmem:[#allocation2 + $0x20] sm:$0xf] %vm1835, %v1752
      %1843 = vst.msk [vmem:[#allocation2 + $0x24] sm:$0xf] %vm1835, %v1754
      %1844 = vst.msk [vmem:[#allocation2 + $0x28] sm:$0xf] %vm1835, %v1756
      %1845 = vst.msk [vmem:[#allocation2 + $0x2c] sm:$0xf] %vm1835, %v1758
      %1846 = vst.msk [vmem:[#allocation2 + $0x30] sm:$0xf] %vm1835, %v1760
      %1847 = vst.msk [vmem:[#allocation2 + $0x34] sm:$0xf] %vm1835, %v1762
      %1848 = vst.msk [vmem:[#allocation2 + $0x38] sm:$0xf] %vm1835, %v1764
      %1849 = vst.msk [vmem:[#allocation2 + $0x3c] sm:$0xf] %vm1835, %v1766
      %1850 = vst.msk [vmem:[#allocation2 + $0x40] sm:$0xf] %vm1835, %v1768
      %1851 = vst.msk [vmem:[#allocation2 + $0x44] sm:$0xf] %vm1835, %v1770
      %1852 = vst.msk [vmem:[#allocation2 + $0x48] sm:$0xf] %vm1835, %v1772
      %1853 = vst.msk [vmem:[#allocation2 + $0x4c] sm:$0xf] %vm1835, %v1774
      %1854 = vst.msk [vmem:[#allocation2 + $0x50] sm:$0xf] %vm1835, %v1776
      %1855 = vst.msk [vmem:[#allocation2 + $0x54] sm:$0xf] %vm1835, %v1778
      %1856 = vst.msk [vmem:[#allocation2 + $0x58] sm:$0xf] %vm1835, %v1780
      %1857 = vst.msk [vmem:[#allocation2 + $0x5c] sm:$0xf] %vm1835, %v1782
      %1858 = vst.msk [vmem:[#allocation2 + $0x60] sm:$0xf] %vm1835, %v1784
      %1859 = vst.msk [vmem:[#allocation2 + $0x64] sm:$0xf] %vm1835, %v1786
      %1860 = vst.msk [vmem:[#allocation2 + $0x68] sm:$0xf] %vm1835, %v1788
      %1861 = vst.msk [vmem:[#allocation2 + $0x6c] sm:$0xf] %vm1835, %v1790
      %1862 = vst.msk [vmem:[#allocation2 + $0x70] sm:$0xf] %vm1835, %v1792
      %1863 = vst.msk [vmem:[#allocation2 + $0x74] sm:$0xf] %vm1835, %v1794
      %1864 = vst.msk [vmem:[#allocation2 + $0x78] sm:$0xf] %vm1835, %v1796
      %1865 = vst.msk [vmem:[#allocation2 + $0x7c] sm:$0xf] %vm1835, %v1798
      %1866 = vst.msk [vmem:[#allocation2 + $0x80] sm:$0xf] %vm1835, %v1800
      %1867 = vst.msk [vmem:[#allocation2 + $0x84] sm:$0xf] %vm1835, %v1802
      %v1868 = vld [vmem:[#allocation2] sm:$0xf]
      %v1869 = vld [vmem:[#allocation2 + $0x4] sm:$0xf]
      %v1870 = vld [vmem:[#allocation2 + $0x8] sm:$0xf]
      %v1871 = vld [vmem:[#allocation2 + $0xc] sm:$0xf]
      %v1872 = vld [vmem:[#allocation2 + $0x10] sm:$0xf]
      %v1873 = vld [vmem:[#allocation2 + $0x14] sm:$0xf]
      %v1874 = vld [vmem:[#allocation2 + $0x18] sm:$0xf]
      %v1875 = vld [vmem:[#allocation2 + $0x1c] sm:$0xf]
      %v1876 = vld [vmem:[#allocation2 + $0x20] sm:$0xf]
      %v1877 = vld [vmem:[#allocation2 + $0x24] sm:$0xf]
      %v1878 = vld [vmem:[#allocation2 + $0x28] sm:$0xf]
      %v1879 = vld [vmem:[#allocation2 + $0x2c] sm:$0xf]
      %v1880 = vld [vmem:[#allocation2 + $0x30] sm:$0xf]
      %v1881 = vld [vmem:[#allocation2 + $0x34] sm:$0xf]
      %v1882 = vld [vmem:[#allocation2 + $0x38] sm:$0xf]
      %v1883 = vld [vmem:[#allocation2 + $0x3c] sm:$0xf]
      %v1884 = vld [vmem:[#allocation2 + $0x40] sm:$0xf]
      %v1885 = vld [vmem:[#allocation2 + $0x44] sm:$0xf]
      %v1886 = vld [vmem:[#allocation2 + $0x48] sm:$0xf]
      %v1887 = vld [vmem:[#allocation2 + $0x4c] sm:$0xf]
      %v1888 = vld [vmem:[#allocation2 + $0x50] sm:$0xf]
      %v1889 = vld [vmem:[#allocation2 + $0x54] sm:$0xf]
      %v1890 = vld [vmem:[#allocation2 + $0x58] sm:$0xf]
      %v1891 = vld [vmem:[#allocation2 + $0x5c] sm:$0xf]
      %v1892 = vld [vmem:[#allocation2 + $0x60] sm:$0xf]
      %v1893 = vld [vmem:[#allocation2 + $0x64] sm:$0xf]
      %v1894 = vld [vmem:[#allocation2 + $0x68] sm:$0xf]
      %v1895 = vld [vmem:[#allocation2 + $0x6c] sm:$0xf]
      %v1896 = vld [vmem:[#allocation2 + $0x70] sm:$0xf]
      %v1897 = vld [vmem:[#allocation2 + $0x74] sm:$0xf]
      %v1898 = vld [vmem:[#allocation2 + $0x78] sm:$0xf]
      %v1899 = vld [vmem:[#allocation2 + $0x7c] sm:$0xf]
      %v1900 = vld [vmem:[%s3] sm:$0xf]
      %v1901 = vld [vmem:[%s3 + $0x4] sm:$0xf]
      %v1902 = vld [vmem:[%s3 + $0x8] sm:$0xf]
      %v1903 = vld [vmem:[#allocation2 + $0x80] sm:$0xf]
      %v1904 = vld [vmem:[#allocation2 + $0x84] sm:$0xf]
      %s1905 = scalar_lea.vmem %s3, 12
      %v1906 = vld [vmem:[%s1905] sm:$0xf]
      %v1907 = vld [vmem:[%s1905 + $0x4] sm:$0xf]
      %v1908 = vld [vmem:[%s1905 + $0x8] sm:$0xf]
      %v1941 = vunpack.c.l.b16 %v1870
      %v1942 = vunpack.c.l.b16 %v1871
      %v1943 = vunpack.c.l.b16 %v1872
      %v1944 = vunpack.c.l.b16 %v1873
      %v1945 = vunpack.c.l.b16 %v1874
      %v1946 = vunpack.c.l.b16 %v1875
      %v1947 = vunpack.c.l.b16 %v1876
      %v1948 = vunpack.c.l.b16 %v1877
      %v1949 = vunpack.c.l.b16 %v1878
      %v1950 = vunpack.c.l.b16 %v1879
      %v1951 = vunpack.c.l.b16 %v1880
      %v1952 = vunpack.c.l.b16 %v1881
      %v1953 = vunpack.c.l.b16 %v1882
      %v1954 = vunpack.c.l.b16 %v1883
      %v1955 = vunpack.c.l.b16 %v1884
      %v1956 = vunpack.c.l.b16 %v1885
      %v1957 = vunpack.c.l.b16 %v1886
      %v1958 = vunpack.c.l.b16 %v1887
      %v1959 = vunpack.c.l.b16 %v1888
      %v1960 = vunpack.c.l.b16 %v1889
      %v1961 = vunpack.c.l.b16 %v1890
      %v1962 = vunpack.c.l.b16 %v1891
      %v1963 = vunpack.c.l.b16 %v1892
      %v1964 = vunpack.c.l.b16 %v1893
      %v1965 = vunpack.c.l.b16 %v1894
      %v1966 = vunpack.c.l.b16 %v1895
      %v1967 = vunpack.c.l.b16 %v1896
      %v1968 = vunpack.c.l.b16 %v1897
      %v1969 = vunpack.c.l.b16 %v1898
      %v1970 = vunpack.c.l.b16 %v1899
      %v1971 = vunpack.c.l.b16 %v1903
      %v1972 = vunpack.c.l.b16 %v1904
      %v1973 = vpack.c.b16 %v1942, %v1941
      %v1974 = vpack.c.b16 %v1944, %v1943
      %v1975 = vpack.c.b16 %v1946, %v1945
      %v1976 = vpack.c.b16 %v1948, %v1947
      %v1977 = vpack.c.b16 %v1950, %v1949
      %v1978 = vpack.c.b16 %v1952, %v1951
      %v1979 = vpack.c.b16 %v1954, %v1953
      %v1980 = vpack.c.b16 %v1956, %v1955
      %v1981 = vpack.c.b16 %v1958, %v1957
      %v1982 = vpack.c.b16 %v1960, %v1959
      %v1983 = vpack.c.b16 %v1962, %v1961
      %v1984 = vpack.c.b16 %v1964, %v1963
      %v1985 = vpack.c.b16 %v1966, %v1965
      %v1986 = vpack.c.b16 %v1968, %v1967
      %v1987 = vpack.c.b16 %v1970, %v1969
      %v1988 = vpack.c.b16 %v1972, %v1971
      %v1992 = vunpack.c.l.b16 %v1906
      %v1993 = vunpack.c.l.b16 %v1907
      %v1994 = vunpack.c.l.b16 %v1908
      %v1995 = vpack.c.b16 %v1993, %v1992
      %v1996 = vpack.c.b16 %v1994, %v1994
      %vm1998 = vcmask 195584
      %v2000 = vsel %vm1998, %v1973, 0
      %v2003 = vsel %vm1998, %v1974, 0
      %v2006 = vsel %vm1998, %v1975, 0
      %v2009 = vsel %vm1998, %v1976, 0
      %v2012 = vsel %vm1998, %v1977, 0
      %v2015 = vsel %vm1998, %v1978, 0
      %v2018 = vsel %vm1998, %v1979, 0
      %v2021 = vsel %vm1998, %v1980, 0
      %v2024 = vsel %vm1998, %v1981, 0
      %v2027 = vsel %vm1998, %v1982, 0
      %v2030 = vsel %vm1998, %v1983, 0
      %v2033 = vsel %vm1998, %v1984, 0
      %v2036 = vsel %vm1998, %v1985, 0
      %v2039 = vsel %vm1998, %v1986, 0
      %v2042 = vsel %vm1998, %v1987, 0
      %v2045 = vsel %vm1998, %v1988, 0
      %vm2047 = vcmask 1043456
      %v2049 = vsel %vm2047, %v1996, 0
      %2051 = vmatprep.subr.bf16.mxu0 0
      %2052 = vmatpush1.bf16.msra.mxu0 0
      %2053 = vmatprep.subr.bf16.mxu0 0
      %2054 = vmatpush1.bf16.msra.mxu0 0
      %2055 = vmatprep.subr.bf16.mxu0 0
      %2056 = vmatpush1.bf16.msra.mxu0 0
      %2057 = vmatprep.subr.bf16.mxu0 0
      %2058 = vmatpush1.bf16.msra.mxu0 0
      %2059 = vmatprep.subr.bf16.mxu0 0
      %2060 = vmatpush1.bf16.msra.mxu0 0
      %2061 = vmatprep.subr.bf16.mxu0 0
      %2062 = vmatpush1.bf16.msra.mxu0 0
      %2063 = vmatprep.subr.bf16.mxu0 0
      %2064 = vmatpush1.bf16.msra.mxu0 %v2049
      %2065 = vmatprep.subr.bf16.mxu0 0
      %2066 = vmatpush1.bf16.msra.mxu0 %v1995
      %2067 = vmatprep.subr.bf16.mxu0 0
      %2068 = vmatpush2.bf16.msra.mxu0 0
      %2069 = vmatprep.subr.bf16.mxu0 0
      %2070 = vmatpush2.bf16.msra.mxu0 0
      %2071 = vmatprep.subr.bf16.mxu0 0
      %2072 = vmatpush2.bf16.msra.mxu0 0
      %2073 = vmatprep.subr.bf16.mxu0 0
      %2074 = vmatpush2.bf16.msra.mxu0 0
      %2075 = vmatprep.subr.bf16.mxu0 0
      %2076 = vmatpush2.bf16.msra.mxu0 0
      %2077 = vmatprep.subr.bf16.mxu0 0
      %2078 = vmatpush2.bf16.msra.mxu0 0
      %2079 = vmatprep.subr.bf16.mxu0 0
      %2080 = vmatpush2.bf16.msra.mxu0 0
      %2081 = vmatprep.subr.bf16.mxu0 0
      %2082 = vmatpush2.bf16.msra.mxu0 0
      %2083 = vmatprep.mubr.bf16.mxu0 0
      %2084 = vmatmul.mubr.bf16.gmra.mxu0 %v2000
      %v2085 = vpop.f32.mrf.mxu0
      %v2086 = vadd.f32 0.0, %v2085
      %v2087 = vpop.f32.mrf.mxu0
      %v2088 = vpop.f32.mrf.mxu0
      %v2089 = vadd.f32 0.0, %v2088
      %v2090 = vpop.f32.mrf.mxu0
      %2091 = vmatprep.mubr.bf16.mxu0 0
      %2092 = vmatmul.mubr.bf16.gmra.mxu0 %v2003
      %v2093 = vpop.f32.mrf.mxu0
      %v2094 = vadd.f32 0.0, %v2093
      %v2095 = vpop.f32.mrf.mxu0
      %v2096 = vpop.f32.mrf.mxu0
      %v2097 = vadd.f32 0.0, %v2096
      %v2098 = vpop.f32.mrf.mxu0
      %2099 = vmatprep.mubr.bf16.mxu0 0
      %2100 = vmatmul.mubr.bf16.gmra.mxu0 %v2006
      %v2101 = vpop.f32.mrf.mxu0
      %v2102 = vadd.f32 0.0, %v2101
      %v2103 = vpop.f32.mrf.mxu0
      %v2104 = vpop.f32.mrf.mxu0
      %v2105 = vadd.f32 0.0, %v2104
      %v2106 = vpop.f32.mrf.mxu0
      %2107 = vmatprep.mubr.bf16.mxu0 0
      %2108 = vmatmul.mubr.bf16.gmra.mxu0 %v2009
      %v2109 = vpop.f32.mrf.mxu0
      %v2110 = vadd.f32 0.0, %v2109
      %v2111 = vpop.f32.mrf.mxu0
      %v2112 = vpop.f32.mrf.mxu0
      %v2113 = vadd.f32 0.0, %v2112
      %v2114 = vpop.f32.mrf.mxu0
      %2115 = vmatprep.mubr.bf16.mxu0 0
      %2116 = vmatmul.mubr.bf16.gmra.mxu0 %v2012
      %v2117 = vpop.f32.mrf.mxu0
      %v2118 = vadd.f32 0.0, %v2117
      %v2119 = vpop.f32.mrf.mxu0
      %v2120 = vpop.f32.mrf.mxu0
      %v2121 = vadd.f32 0.0, %v2120
      %v2122 = vpop.f32.mrf.mxu0
      %2123 = vmatprep.mubr.bf16.mxu0 0
      %2124 = vmatmul.mubr.bf16.gmra.mxu0 %v2015
      %v2125 = vpop.f32.mrf.mxu0
      %v2126 = vadd.f32 0.0, %v2125
      %v2127 = vpop.f32.mrf.mxu0
      %v2128 = vpop.f32.mrf.mxu0
      %v2129 = vadd.f32 0.0, %v2128
      %v2130 = vpop.f32.mrf.mxu0
      %2131 = vmatprep.mubr.bf16.mxu0 0
      %2132 = vmatmul.mubr.bf16.gmra.mxu0 %v2018
      %v2133 = vpop.f32.mrf.mxu0
      %v2134 = vadd.f32 0.0, %v2133
      %v2135 = vpop.f32.mrf.mxu0
      %v2136 = vpop.f32.mrf.mxu0
      %v2137 = vadd.f32 0.0, %v2136
      %v2138 = vpop.f32.mrf.mxu0
      %2139 = vmatprep.mubr.bf16.mxu0 0
      %2140 = vmatmul.mubr.bf16.gmra.mxu0 %v2021
      %v2141 = vpop.f32.mrf.mxu0
      %v2142 = vadd.f32 0.0, %v2141
      %v2143 = vpop.f32.mrf.mxu0
      %v2144 = vpop.f32.mrf.mxu0
      %v2145 = vadd.f32 0.0, %v2144
      %v2146 = vpop.f32.mrf.mxu0
      %2147 = vmatprep.mubr.bf16.mxu0 0
      %2148 = vmatmul.mubr.bf16.gmra.mxu0 %v2024
      %v2149 = vpop.f32.mrf.mxu0
      %v2150 = vadd.f32 0.0, %v2149
      %v2151 = vpop.f32.mrf.mxu0
      %v2152 = vpop.f32.mrf.mxu0
      %v2153 = vadd.f32 0.0, %v2152
      %v2154 = vpop.f32.mrf.mxu0
      %2155 = vmatprep.mubr.bf16.mxu0 0
      %2156 = vmatmul.mubr.bf16.gmra.mxu0 %v2027
      %v2157 = vpop.f32.mrf.mxu0
      %v2158 = vadd.f32 0.0, %v2157
      %v2159 = vpop.f32.mrf.mxu0
      %v2160 = vpop.f32.mrf.mxu0
      %v2161 = vadd.f32 0.0, %v2160
      %v2162 = vpop.f32.mrf.mxu0
      %2163 = vmatprep.mubr.bf16.mxu0 0
      %2164 = vmatmul.mubr.bf16.gmra.mxu0 %v2030
      %v2165 = vpop.f32.mrf.mxu0
      %v2166 = vadd.f32 0.0, %v2165
      %v2167 = vpop.f32.mrf.mxu0
      %v2168 = vpop.f32.mrf.mxu0
      %v2169 = vadd.f32 0.0, %v2168
      %v2170 = vpop.f32.mrf.mxu0
      %2171 = vmatprep.mubr.bf16.mxu0 0
      %2172 = vmatmul.mubr.bf16.gmra.mxu0 %v2033
      %v2173 = vpop.f32.mrf.mxu0
      %v2174 = vadd.f32 0.0, %v2173
      %v2175 = vpop.f32.mrf.mxu0
      %v2176 = vpop.f32.mrf.mxu0
      %v2177 = vadd.f32 0.0, %v2176
      %v2178 = vpop.f32.mrf.mxu0
      %2179 = vmatprep.mubr.bf16.mxu0 0
      %2180 = vmatmul.mubr.bf16.gmra.mxu0 %v2036
      %v2181 = vpop.f32.mrf.mxu0
      %v2182 = vadd.f32 0.0, %v2181
      %v2183 = vpop.f32.mrf.mxu0
      %v2184 = vpop.f32.mrf.mxu0
      %v2185 = vadd.f32 0.0, %v2184
      %v2186 = vpop.f32.mrf.mxu0
      %2187 = vmatprep.mubr.bf16.mxu0 0
      %2188 = vmatmul.mubr.bf16.gmra.mxu0 %v2039
      %v2189 = vpop.f32.mrf.mxu0
      %v2190 = vadd.f32 0.0, %v2189
      %v2191 = vpop.f32.mrf.mxu0
      %v2192 = vpop.f32.mrf.mxu0
      %v2193 = vadd.f32 0.0, %v2192
      %v2194 = vpop.f32.mrf.mxu0
      %2195 = vmatprep.mubr.bf16.mxu0 0
      %2196 = vmatmul.mubr.bf16.gmra.mxu0 %v2042
      %v2197 = vpop.f32.mrf.mxu0
      %v2198 = vadd.f32 0.0, %v2197
      %v2199 = vpop.f32.mrf.mxu0
      %v2200 = vpop.f32.mrf.mxu0
      %v2201 = vadd.f32 0.0, %v2200
      %v2202 = vpop.f32.mrf.mxu0
      %2203 = vmatprep.mubr.bf16.mxu0 0
      %2204 = vmatmul.mubr.bf16.gmra.mxu0 %v2045
      %v2205 = vpop.f32.mrf.mxu0
      %v2206 = vadd.f32 0.0, %v2205
      %v2207 = vpop.f32.mrf.mxu0
      %v2208 = vpop.f32.mrf.mxu0
      %v2209 = vadd.f32 0.0, %v2208
      %v2210 = vpop.f32.mrf.mxu0
      %2211 = vdwg.mxu0
      %v2214 = vunpack.c.l.b16 %v1868
      %v2215 = vunpack.c.l.b16 %v1869
      %v2216 = vpack.c.b16 %v2215, %v2214
      %v2220 = vunpack.c.l.b16 %v1900
      %v2221 = vunpack.c.l.b16 %v1901
      %v2222 = vunpack.c.l.b16 %v1902
      %v2223 = vpack.c.b16 %v2221, %v2220
      %v2224 = vpack.c.b16 %v2222, %v2222
      %v2227 = vsel %vm1998, %v2216, 0
      %v2230 = vsel %vm2047, %v2224, 0
      %2232 = vmatprep.subr.bf16.mxu0 0
      %2233 = vmatpush1.bf16.msra.mxu0 0
      %2234 = vmatprep.subr.bf16.mxu0 0
      %2235 = vmatpush1.bf16.msra.mxu0 0
      %2236 = vmatprep.subr.bf16.mxu0 0
      %2237 = vmatpush1.bf16.msra.mxu0 0
      %2238 = vmatprep.subr.bf16.mxu0 0
      %2239 = vmatpush1.bf16.msra.mxu0 0
      %2240 = vmatprep.subr.bf16.mxu0 0
      %2241 = vmatpush1.bf16.msra.mxu0 0
      %2242 = vmatprep.subr.bf16.mxu0 0
      %2243 = vmatpush1.bf16.msra.mxu0 0
      %2244 = vmatprep.subr.bf16.mxu0 0
      %2245 = vmatpush1.bf16.msra.mxu0 %v2230
      %2246 = vmatprep.subr.bf16.mxu0 0
      %2247 = vmatpush1.bf16.msra.mxu0 %v2223
      %2248 = vmatprep.subr.bf16.mxu0 0
      %2249 = vmatpush2.bf16.msra.mxu0 0
      %2250 = vmatprep.subr.bf16.mxu0 0
      %2251 = vmatpush2.bf16.msra.mxu0 0
      %2252 = vmatprep.subr.bf16.mxu0 0
      %2253 = vmatpush2.bf16.msra.mxu0 0
      %2254 = vmatprep.subr.bf16.mxu0 0
      %2255 = vmatpush2.bf16.msra.mxu0 0
      %2256 = vmatprep.subr.bf16.mxu0 0
      %2257 = vmatpush2.bf16.msra.mxu0 0
      %2258 = vmatprep.subr.bf16.mxu0 0
      %2259 = vmatpush2.bf16.msra.mxu0 0
      %2260 = vmatprep.subr.bf16.mxu0 0
      %2261 = vmatpush2.bf16.msra.mxu0 0
      %2262 = vmatprep.subr.bf16.mxu0 0
      %2263 = vmatpush2.bf16.msra.mxu0 0
      %2264 = vmatprep.mubr.bf16.mxu0 0
      %2265 = vmatmul.mubr.bf16.gmra.mxu0 %v2227
      %v2266 = vpop.f32.mrf.mxu0
      %v2267 = vadd.f32 %v2086, %v2266
      %v2268 = vpop.f32.mrf.mxu0
      %v2269 = vpop.f32.mrf.mxu0
      %v2270 = vadd.f32 %v2089, %v2269
      %v2271 = vpop.f32.mrf.mxu0
      %2272 = vmatprep.mubr.bf16.mxu0 0
      %2273 = vmatmul.mubr.bf16.gmra.mxu0 %v2000
      %v2274 = vpop.f32.mrf.mxu0
      %v2275 = vadd.f32 %v2094, %v2274
      %v2276 = vpop.f32.mrf.mxu0
      %v2277 = vpop.f32.mrf.mxu0
      %v2278 = vadd.f32 %v2097, %v2277
      %v2279 = vpop.f32.mrf.mxu0
      %2280 = vmatprep.mubr.bf16.mxu0 0
      %2281 = vmatmul.mubr.bf16.gmra.mxu0 %v2003
      %v2282 = vpop.f32.mrf.mxu0
      %v2283 = vadd.f32 %v2102, %v2282
      %v2284 = vpop.f32.mrf.mxu0
      %v2285 = vpop.f32.mrf.mxu0
      %v2286 = vadd.f32 %v2105, %v2285
      %v2287 = vpop.f32.mrf.mxu0
      %2288 = vmatprep.mubr.bf16.mxu0 0
      %2289 = vmatmul.mubr.bf16.gmra.mxu0 %v2006
      %v2290 = vpop.f32.mrf.mxu0
      %v2291 = vadd.f32 %v2110, %v2290
      %v2292 = vpop.f32.mrf.mxu0
      %v2293 = vpop.f32.mrf.mxu0
      %v2294 = vadd.f32 %v2113, %v2293
      %v2295 = vpop.f32.mrf.mxu0
      %2296 = vmatprep.mubr.bf16.mxu0 0
      %2297 = vmatmul.mubr.bf16.gmra.mxu0 %v2009
      %v2298 = vpop.f32.mrf.mxu0
      %v2299 = vadd.f32 %v2118, %v2298
      %v2300 = vpop.f32.mrf.mxu0
      %v2301 = vpop.f32.mrf.mxu0
      %v2302 = vadd.f32 %v2121, %v2301
      %v2303 = vpop.f32.mrf.mxu0
      %2304 = vmatprep.mubr.bf16.mxu0 0
      %2305 = vmatmul.mubr.bf16.gmra.mxu0 %v2012
      %v2306 = vpop.f32.mrf.mxu0
      %v2307 = vadd.f32 %v2126, %v2306
      %v2308 = vpop.f32.mrf.mxu0
      %v2309 = vpop.f32.mrf.mxu0
      %v2310 = vadd.f32 %v2129, %v2309
      %v2311 = vpop.f32.mrf.mxu0
      %2312 = vmatprep.mubr.bf16.mxu0 0
      %2313 = vmatmul.mubr.bf16.gmra.mxu0 %v2015
      %v2314 = vpop.f32.mrf.mxu0
      %v2315 = vadd.f32 %v2134, %v2314
      %v2316 = vpop.f32.mrf.mxu0
      %v2317 = vpop.f32.mrf.mxu0
      %v2318 = vadd.f32 %v2137, %v2317
      %v2319 = vpop.f32.mrf.mxu0
      %2320 = vmatprep.mubr.bf16.mxu0 0
      %2321 = vmatmul.mubr.bf16.gmra.mxu0 %v2018
      %v2322 = vpop.f32.mrf.mxu0
      %v2323 = vadd.f32 %v2142, %v2322
      %v2324 = vpop.f32.mrf.mxu0
      %v2325 = vpop.f32.mrf.mxu0
      %v2326 = vadd.f32 %v2145, %v2325
      %v2327 = vpop.f32.mrf.mxu0
      %2328 = vmatprep.mubr.bf16.mxu0 0
      %2329 = vmatmul.mubr.bf16.gmra.mxu0 %v2021
      %v2330 = vpop.f32.mrf.mxu0
      %v2331 = vadd.f32 %v2150, %v2330
      %v2332 = vpop.f32.mrf.mxu0
      %v2333 = vpop.f32.mrf.mxu0
      %v2334 = vadd.f32 %v2153, %v2333
      %v2335 = vpop.f32.mrf.mxu0
      %2336 = vmatprep.mubr.bf16.mxu0 0
      %2337 = vmatmul.mubr.bf16.gmra.mxu0 %v2024
      %v2338 = vpop.f32.mrf.mxu0
      %v2339 = vadd.f32 %v2158, %v2338
      %v2340 = vpop.f32.mrf.mxu0
      %v2341 = vpop.f32.mrf.mxu0
      %v2342 = vadd.f32 %v2161, %v2341
      %v2343 = vpop.f32.mrf.mxu0
      %2344 = vmatprep.mubr.bf16.mxu0 0
      %2345 = vmatmul.mubr.bf16.gmra.mxu0 %v2027
      %v2346 = vpop.f32.mrf.mxu0
      %v2347 = vadd.f32 %v2166, %v2346
      %v2348 = vpop.f32.mrf.mxu0
      %v2349 = vpop.f32.mrf.mxu0
      %v2350 = vadd.f32 %v2169, %v2349
      %v2351 = vpop.f32.mrf.mxu0
      %2352 = vmatprep.mubr.bf16.mxu0 0
      %2353 = vmatmul.mubr.bf16.gmra.mxu0 %v2030
      %v2354 = vpop.f32.mrf.mxu0
      %v2355 = vadd.f32 %v2174, %v2354
      %v2356 = vpop.f32.mrf.mxu0
      %v2357 = vpop.f32.mrf.mxu0
      %v2358 = vadd.f32 %v2177, %v2357
      %v2359 = vpop.f32.mrf.mxu0
      %2360 = vmatprep.mubr.bf16.mxu0 0
      %2361 = vmatmul.mubr.bf16.gmra.mxu0 %v2033
      %v2362 = vpop.f32.mrf.mxu0
      %v2363 = vadd.f32 %v2182, %v2362
      %v2364 = vpop.f32.mrf.mxu0
      %v2365 = vpop.f32.mrf.mxu0
      %v2366 = vadd.f32 %v2185, %v2365
      %v2367 = vpop.f32.mrf.mxu0
      %2368 = vmatprep.mubr.bf16.mxu0 0
      %2369 = vmatmul.mubr.bf16.gmra.mxu0 %v2036
      %v2370 = vpop.f32.mrf.mxu0
      %v2371 = vadd.f32 %v2190, %v2370
      %v2372 = vpop.f32.mrf.mxu0
      %v2373 = vpop.f32.mrf.mxu0
      %v2374 = vadd.f32 %v2193, %v2373
      %v2375 = vpop.f32.mrf.mxu0
      %2376 = vmatprep.mubr.bf16.mxu0 0
      %2377 = vmatmul.mubr.bf16.gmra.mxu0 %v2039
      %v2378 = vpop.f32.mrf.mxu0
      %v2379 = vadd.f32 %v2198, %v2378
      %v2380 = vpop.f32.mrf.mxu0
      %v2381 = vpop.f32.mrf.mxu0
      %v2382 = vadd.f32 %v2201, %v2381
      %v2383 = vpop.f32.mrf.mxu0
      %2384 = vmatprep.mubr.bf16.mxu0 0
      %2385 = vmatmul.mubr.bf16.gmra.mxu0 %v2042
      %v2386 = vpop.f32.mrf.mxu0
      %v2387 = vadd.f32 %v2206, %v2386
      %v2388 = vpop.f32.mrf.mxu0
      %v2389 = vpop.f32.mrf.mxu0
      %v2390 = vadd.f32 %v2209, %v2389
      %v2391 = vpop.f32.mrf.mxu0
      %2392 = vdwg.mxu0
      %v2393 = vld [vmem:[#allocation2 + $0x10] sm:$0xf]
      %v2394 = vld [vmem:[#allocation2 + $0x14] sm:$0xf]
      %v2395 = vld [vmem:[#allocation2 + $0x18] sm:$0xf]
      %v2396 = vld [vmem:[#allocation2 + $0x1c] sm:$0xf]
      %v2397 = vld [vmem:[#allocation2 + $0x20] sm:$0xf]
      %v2398 = vld [vmem:[#allocation2 + $0x24] sm:$0xf]
      %v2399 = vld [vmem:[#allocation2 + $0x28] sm:$0xf]
      %v2400 = vld [vmem:[#allocation2 + $0x2c] sm:$0xf]
      %v2401 = vld [vmem:[#allocation2 + $0x30] sm:$0xf]
      %v2402 = vld [vmem:[#allocation2 + $0x34] sm:$0xf]
      %v2403 = vld [vmem:[#allocation2 + $0x38] sm:$0xf]
      %v2404 = vld [vmem:[#allocation2 + $0x3c] sm:$0xf]
      %v2405 = vld [vmem:[#allocation2 + $0x40] sm:$0xf]
      %v2406 = vld [vmem:[#allocation2 + $0x44] sm:$0xf]
      %v2407 = vld [vmem:[#allocation2 + $0x48] sm:$0xf]
      %v2408 = vld [vmem:[#allocation2 + $0x4c] sm:$0xf]
      %v2409 = vld [vmem:[#allocation2 + $0x50] sm:$0xf]
      %v2410 = vld [vmem:[#allocation2 + $0x54] sm:$0xf]
      %v2411 = vld [vmem:[#allocation2 + $0x58] sm:$0xf]
      %v2412 = vld [vmem:[#allocation2 + $0x5c] sm:$0xf]
      %v2413 = vld [vmem:[#allocation2 + $0x60] sm:$0xf]
      %v2414 = vld [vmem:[#allocation2 + $0x64] sm:$0xf]
      %v2415 = vld [vmem:[#allocation2 + $0x68] sm:$0xf]
      %v2416 = vld [vmem:[#allocation2 + $0x6c] sm:$0xf]
      %v2417 = vld [vmem:[#allocation2 + $0x70] sm:$0xf]
      %v2418 = vld [vmem:[#allocation2 + $0x74] sm:$0xf]
      %v2419 = vld [vmem:[#allocation2 + $0x78] sm:$0xf]
      %v2420 = vld [vmem:[#allocation2 + $0x7c] sm:$0xf]
      %v2421 = vld [vmem:[#allocation2 + $0x80] sm:$0xf]
      %v2422 = vld [vmem:[#allocation2 + $0x84] sm:$0xf]
      %v2423 = vld [vmem:[#allocation2 + $0x88] sm:$0xf]
      %v2424 = vld [vmem:[#allocation2 + $0x8c] sm:$0xf]
      %s2425 = scalar_lea.vmem %s3, 24
      %v2426 = vld [vmem:[%s2425] sm:$0xf]
      %v2427 = vld [vmem:[%s2425 + $0x4] sm:$0xf]
      %v2428 = vld [vmem:[%s2425 + $0x8] sm:$0xf]
      %v2461 = vunpack.c.l.b16 %v2393
      %v2462 = vunpack.c.l.b16 %v2394
      %v2463 = vunpack.c.l.b16 %v2395
      %v2464 = vunpack.c.l.b16 %v2396
      %v2465 = vunpack.c.l.b16 %v2397
      %v2466 = vunpack.c.l.b16 %v2398
      %v2467 = vunpack.c.l.b16 %v2399
      %v2468 = vunpack.c.l.b16 %v2400
      %v2469 = vunpack.c.l.b16 %v2401
      %v2470 = vunpack.c.l.b16 %v2402
      %v2471 = vunpack.c.l.b16 %v2403
      %v2472 = vunpack.c.l.b16 %v2404
      %v2473 = vunpack.c.l.b16 %v2405
      %v2474 = vunpack.c.l.b16 %v2406
      %v2475 = vunpack.c.l.b16 %v2407
      %v2476 = vunpack.c.l.b16 %v2408
      %v2477 = vunpack.c.l.b16 %v2409
      %v2478 = vunpack.c.l.b16 %v2410
      %v2479 = vunpack.c.l.b16 %v2411
      %v2480 = vunpack.c.l.b16 %v2412
      %v2481 = vunpack.c.l.b16 %v2413
      %v2482 = vunpack.c.l.b16 %v2414
      %v2483 = vunpack.c.l.b16 %v2415
      %v2484 = vunpack.c.l.b16 %v2416
      %v2485 = vunpack.c.l.b16 %v2417
      %v2486 = vunpack.c.l.b16 %v2418
      %v2487 = vunpack.c.l.b16 %v2419
      %v2488 = vunpack.c.l.b16 %v2420
      %v2489 = vunpack.c.l.b16 %v2421
      %v2490 = vunpack.c.l.b16 %v2422
      %v2491 = vunpack.c.l.b16 %v2423
      %v2492 = vunpack.c.l.b16 %v2424
      %v2493 = vpack.c.b16 %v2462, %v2461
      %v2494 = vpack.c.b16 %v2464, %v2463
      %v2495 = vpack.c.b16 %v2466, %v2465
      %v2496 = vpack.c.b16 %v2468, %v2467
      %v2497 = vpack.c.b16 %v2470, %v2469
      %v2498 = vpack.c.b16 %v2472, %v2471
      %v2499 = vpack.c.b16 %v2474, %v2473
      %v2500 = vpack.c.b16 %v2476, %v2475
      %v2501 = vpack.c.b16 %v2478, %v2477
      %v2502 = vpack.c.b16 %v2480, %v2479
      %v2503 = vpack.c.b16 %v2482, %v2481
      %v2504 = vpack.c.b16 %v2484, %v2483
      %v2505 = vpack.c.b16 %v2486, %v2485
      %v2506 = vpack.c.b16 %v2488, %v2487
      %v2507 = vpack.c.b16 %v2490, %v2489
      %v2508 = vpack.c.b16 %v2492, %v2491
      %v2512 = vunpack.c.l.b16 %v2426
      %v2513 = vunpack.c.l.b16 %v2427
      %v2514 = vunpack.c.l.b16 %v2428
      %v2515 = vpack.c.b16 %v2513, %v2512
      %v2516 = vpack.c.b16 %v2514, %v2514
      %v2519 = vsel %vm1998, %v2493, 0
      %v2522 = vsel %vm1998, %v2494, 0
      %v2525 = vsel %vm1998, %v2495, 0
      %v2528 = vsel %vm1998, %v2496, 0
      %v2531 = vsel %vm1998, %v2497, 0
      %v2534 = vsel %vm1998, %v2498, 0
      %v2537 = vsel %vm1998, %v2499, 0
      %v2540 = vsel %vm1998, %v2500, 0
      %v2543 = vsel %vm1998, %v2501, 0
      %v2546 = vsel %vm1998, %v2502, 0
      %v2549 = vsel %vm1998, %v2503, 0
      %v2552 = vsel %vm1998, %v2504, 0
      %v2555 = vsel %vm1998, %v2505, 0
      %v2558 = vsel %vm1998, %v2506, 0
      %v2561 = vsel %vm1998, %v2507, 0
      %v2564 = vsel %vm1998, %v2508, 0
      %v2567 = vsel %vm2047, %v2516, 0
      %2569 = vmatprep.subr.bf16.mxu0 0
      %2570 = vmatpush1.bf16.msra.mxu0 0
      %2571 = vmatprep.subr.bf16.mxu0 0
      %2572 = vmatpush1.bf16.msra.mxu0 0
      %2573 = vmatprep.subr.bf16.mxu0 0
      %2574 = vmatpush1.bf16.msra.mxu0 0
      %2575 = vmatprep.subr.bf16.mxu0 0
      %2576 = vmatpush1.bf16.msra.mxu0 0
      %2577 = vmatprep.subr.bf16.mxu0 0
      %2578 = vmatpush1.bf16.msra.mxu0 0
      %2579 = vmatprep.subr.bf16.mxu0 0
      %2580 = vmatpush1.bf16.msra.mxu0 0
      %2581 = vmatprep.subr.bf16.mxu0 0
      %2582 = vmatpush1.bf16.msra.mxu0 %v2567
      %2583 = vmatprep.subr.bf16.mxu0 0
      %2584 = vmatpush1.bf16.msra.mxu0 %v2515
      %2585 = vmatprep.subr.bf16.mxu0 0
      %2586 = vmatpush2.bf16.msra.mxu0 0
      %2587 = vmatprep.subr.bf16.mxu0 0
      %2588 = vmatpush2.bf16.msra.mxu0 0
      %2589 = vmatprep.subr.bf16.mxu0 0
      %2590 = vmatpush2.bf16.msra.mxu0 0
      %2591 = vmatprep.subr.bf16.mxu0 0
      %2592 = vmatpush2.bf16.msra.mxu0 0
      %2593 = vmatprep.subr.bf16.mxu0 0
      %2594 = vmatpush2.bf16.msra.mxu0 0
      %2595 = vmatprep.subr.bf16.mxu0 0
      %2596 = vmatpush2.bf16.msra.mxu0 0
      %2597 = vmatprep.subr.bf16.mxu0 0
      %2598 = vmatpush2.bf16.msra.mxu0 0
      %2599 = vmatprep.subr.bf16.mxu0 0
      %2600 = vmatpush2.bf16.msra.mxu0 0
      %2601 = vmatprep.mubr.bf16.mxu0 0
      %2602 = vmatmul.mubr.bf16.gmra.mxu0 %v2519
      %v2603 = vpop.f32.mrf.mxu0
      %v2604 = vadd.f32 0.0, %v2603
      %v2605 = vpop.f32.mrf.mxu0
      %v2606 = vpop.f32.mrf.mxu0
      %v2607 = vadd.f32 0.0, %v2606
      %v2608 = vpop.f32.mrf.mxu0
      %2609 = vmatprep.mubr.bf16.mxu0 0
      %2610 = vmatmul.mubr.bf16.gmra.mxu0 %v2522
      %v2611 = vpop.f32.mrf.mxu0
      %v2612 = vadd.f32 0.0, %v2611
      %v2613 = vpop.f32.mrf.mxu0
      %v2614 = vpop.f32.mrf.mxu0
      %v2615 = vadd.f32 0.0, %v2614
      %v2616 = vpop.f32.mrf.mxu0
      %2617 = vmatprep.mubr.bf16.mxu0 0
      %2618 = vmatmul.mubr.bf16.gmra.mxu0 %v2525
      %v2619 = vpop.f32.mrf.mxu0
      %v2620 = vadd.f32 0.0, %v2619
      %v2621 = vpop.f32.mrf.mxu0
      %v2622 = vpop.f32.mrf.mxu0
      %v2623 = vadd.f32 0.0, %v2622
      %v2624 = vpop.f32.mrf.mxu0
      %2625 = vmatprep.mubr.bf16.mxu0 0
      %2626 = vmatmul.mubr.bf16.gmra.mxu0 %v2528
      %v2627 = vpop.f32.mrf.mxu0
      %v2628 = vadd.f32 0.0, %v2627
      %v2629 = vpop.f32.mrf.mxu0
      %v2630 = vpop.f32.mrf.mxu0
      %v2631 = vadd.f32 0.0, %v2630
      %v2632 = vpop.f32.mrf.mxu0
      %2633 = vmatprep.mubr.bf16.mxu0 0
      %2634 = vmatmul.mubr.bf16.gmra.mxu0 %v2531
      %v2635 = vpop.f32.mrf.mxu0
      %v2636 = vadd.f32 0.0, %v2635
      %v2637 = vpop.f32.mrf.mxu0
      %v2638 = vpop.f32.mrf.mxu0
      %v2639 = vadd.f32 0.0, %v2638
      %v2640 = vpop.f32.mrf.mxu0
      %2641 = vmatprep.mubr.bf16.mxu0 0
      %2642 = vmatmul.mubr.bf16.gmra.mxu0 %v2534
      %v2643 = vpop.f32.mrf.mxu0
      %v2644 = vadd.f32 0.0, %v2643
      %v2645 = vpop.f32.mrf.mxu0
      %v2646 = vpop.f32.mrf.mxu0
      %v2647 = vadd.f32 0.0, %v2646
      %v2648 = vpop.f32.mrf.mxu0
      %2649 = vmatprep.mubr.bf16.mxu0 0
      %2650 = vmatmul.mubr.bf16.gmra.mxu0 %v2537
      %v2651 = vpop.f32.mrf.mxu0
      %v2652 = vadd.f32 0.0, %v2651
      %v2653 = vpop.f32.mrf.mxu0
      %v2654 = vpop.f32.mrf.mxu0
      %v2655 = vadd.f32 0.0, %v2654
      %v2656 = vpop.f32.mrf.mxu0
      %2657 = vmatprep.mubr.bf16.mxu0 0
      %2658 = vmatmul.mubr.bf16.gmra.mxu0 %v2540
      %v2659 = vpop.f32.mrf.mxu0
      %v2660 = vadd.f32 0.0, %v2659
      %v2661 = vpop.f32.mrf.mxu0
      %v2662 = vpop.f32.mrf.mxu0
      %v2663 = vadd.f32 0.0, %v2662
      %v2664 = vpop.f32.mrf.mxu0
      %2665 = vmatprep.mubr.bf16.mxu0 0
      %2666 = vmatmul.mubr.bf16.gmra.mxu0 %v2543
      %v2667 = vpop.f32.mrf.mxu0
      %v2668 = vadd.f32 0.0, %v2667
      %v2669 = vpop.f32.mrf.mxu0
      %v2670 = vpop.f32.mrf.mxu0
      %v2671 = vadd.f32 0.0, %v2670
      %v2672 = vpop.f32.mrf.mxu0
      %2673 = vmatprep.mubr.bf16.mxu0 0
      %2674 = vmatmul.mubr.bf16.gmra.mxu0 %v2546
      %v2675 = vpop.f32.mrf.mxu0
      %v2676 = vadd.f32 0.0, %v2675
      %v2677 = vpop.f32.mrf.mxu0
      %v2678 = vpop.f32.mrf.mxu0
      %v2679 = vadd.f32 0.0, %v2678
      %v2680 = vpop.f32.mrf.mxu0
      %2681 = vmatprep.mubr.bf16.mxu0 0
      %2682 = vmatmul.mubr.bf16.gmra.mxu0 %v2549
      %v2683 = vpop.f32.mrf.mxu0
      %v2684 = vadd.f32 0.0, %v2683
      %v2685 = vpop.f32.mrf.mxu0
      %v2686 = vpop.f32.mrf.mxu0
      %v2687 = vadd.f32 0.0, %v2686
      %v2688 = vpop.f32.mrf.mxu0
      %2689 = vmatprep.mubr.bf16.mxu0 0
      %2690 = vmatmul.mubr.bf16.gmra.mxu0 %v2552
      %v2691 = vpop.f32.mrf.mxu0
      %v2692 = vadd.f32 0.0, %v2691
      %v2693 = vpop.f32.mrf.mxu0
      %v2694 = vpop.f32.mrf.mxu0
      %v2695 = vadd.f32 0.0, %v2694
      %v2696 = vpop.f32.mrf.mxu0
      %2697 = vmatprep.mubr.bf16.mxu0 0
      %2698 = vmatmul.mubr.bf16.gmra.mxu0 %v2555
      %v2699 = vpop.f32.mrf.mxu0
      %v2700 = vadd.f32 0.0, %v2699
      %v2701 = vpop.f32.mrf.mxu0
      %v2702 = vpop.f32.mrf.mxu0
      %v2703 = vadd.f32 0.0, %v2702
      %v2704 = vpop.f32.mrf.mxu0
      %2705 = vmatprep.mubr.bf16.mxu0 0
      %2706 = vmatmul.mubr.bf16.gmra.mxu0 %v2558
      %v2707 = vpop.f32.mrf.mxu0
      %v2708 = vadd.f32 0.0, %v2707
      %v2709 = vpop.f32.mrf.mxu0
      %v2710 = vpop.f32.mrf.mxu0
      %v2711 = vadd.f32 0.0, %v2710
      %v2712 = vpop.f32.mrf.mxu0
      %2713 = vmatprep.mubr.bf16.mxu0 0
      %2714 = vmatmul.mubr.bf16.gmra.mxu0 %v2561
      %v2715 = vpop.f32.mrf.mxu0
      %v2716 = vadd.f32 0.0, %v2715
      %v2717 = vpop.f32.mrf.mxu0
      %v2718 = vpop.f32.mrf.mxu0
      %v2719 = vadd.f32 0.0, %v2718
      %v2720 = vpop.f32.mrf.mxu0
      %2721 = vmatprep.mubr.bf16.mxu0 0
      %2722 = vmatmul.mubr.bf16.gmra.mxu0 %v2564
      %v2723 = vpop.f32.mrf.mxu0
      %v2724 = vadd.f32 0.0, %v2723
      %v2725 = vpop.f32.mrf.mxu0
      %v2726 = vpop.f32.mrf.mxu0
      %v2727 = vadd.f32 0.0, %v2726
      %v2728 = vpop.f32.mrf.mxu0
      %2729 = vdwg.mxu0
      %v2730 = vadd.f32 %v2267, %v2604
      %v2731 = vadd.f32 %v2270, %v2607
      %v2732 = vadd.f32 %v2275, %v2612
      %v2733 = vadd.f32 %v2278, %v2615
      %v2734 = vadd.f32 %v2283, %v2620
      %v2735 = vadd.f32 %v2286, %v2623
      %v2736 = vadd.f32 %v2291, %v2628
      %v2737 = vadd.f32 %v2294, %v2631
      %v2738 = vadd.f32 %v2299, %v2636
      %v2739 = vadd.f32 %v2302, %v2639
      %v2740 = vadd.f32 %v2307, %v2644
      %v2741 = vadd.f32 %v2310, %v2647
      %v2742 = vadd.f32 %v2315, %v2652
      %v2743 = vadd.f32 %v2318, %v2655
      %v2744 = vadd.f32 %v2323, %v2660
      %v2745 = vadd.f32 %v2326, %v2663
      %v2746 = vadd.f32 %v2331, %v2668
      %v2747 = vadd.f32 %v2334, %v2671
      %v2748 = vadd.f32 %v2339, %v2676
      %v2749 = vadd.f32 %v2342, %v2679
      %v2750 = vadd.f32 %v2347, %v2684
      %v2751 = vadd.f32 %v2350, %v2687
      %v2752 = vadd.f32 %v2355, %v2692
      %v2753 = vadd.f32 %v2358, %v2695
      %v2754 = vadd.f32 %v2363, %v2700
      %v2755 = vadd.f32 %v2366, %v2703
      %v2756 = vadd.f32 %v2371, %v2708
      %v2757 = vadd.f32 %v2374, %v2711
      %v2758 = vadd.f32 %v2379, %v2716
      %v2759 = vadd.f32 %v2382, %v2719
      %v2760 = vadd.f32 %v2387, %v2724
      %v2761 = vadd.f32 %v2390, %v2727
      %v2762 = vld [vmem:[%s4] sm:$0x1]
      %v2764 = vlaneseq
      %v2765 = vshrl.u32 %v2764, 7
      %v2766 = vsub.s32 0, %v2765
      %v2767 = vrot.slane %v2762, %v2766
      %v2769 = vmul.f32 %v2730, %v2767
      %v2770 = vmul.f32 %v2731, %v2767
      %v2771 = vmul.f32 %v2732, %v2767
      %v2772 = vmul.f32 %v2733, %v2767
      %v2773 = vmul.f32 %v2734, %v2767
      %v2774 = vmul.f32 %v2735, %v2767
      %v2775 = vmul.f32 %v2736, %v2767
      %v2776 = vmul.f32 %v2737, %v2767
      %v2777 = vmul.f32 %v2738, %v2767
      %v2778 = vmul.f32 %v2739, %v2767
      %v2779 = vmul.f32 %v2740, %v2767
      %v2780 = vmul.f32 %v2741, %v2767
      %v2781 = vmul.f32 %v2742, %v2767
      %v2782 = vmul.f32 %v2743, %v2767
      %v2783 = vmul.f32 %v2744, %v2767
      %v2784 = vmul.f32 %v2745, %v2767
      %v2785 = vmul.f32 %v2746, %v2767
      %v2786 = vmul.f32 %v2747, %v2767
      %v2787 = vmul.f32 %v2748, %v2767
      %v2788 = vmul.f32 %v2749, %v2767
      %v2789 = vmul.f32 %v2750, %v2767
      %v2790 = vmul.f32 %v2751, %v2767
      %v2791 = vmul.f32 %v2752, %v2767
      %v2792 = vmul.f32 %v2753, %v2767
      %v2793 = vmul.f32 %v2754, %v2767
      %v2794 = vmul.f32 %v2755, %v2767
      %v2795 = vmul.f32 %v2756, %v2767
      %v2796 = vmul.f32 %v2757, %v2767
      %v2797 = vmul.f32 %v2758, %v2767
      %v2798 = vmul.f32 %v2759, %v2767
      %v2799 = vmul.f32 %v2760, %v2767
      %v2800 = vmul.f32 %v2761, %v2767
      %v2801 = vld [vmem:[%s5] sm:$0x1]
      %v2803 = vlaneseq
      %v2804 = vshrl.u32 %v2803, 7
      %v2805 = vsub.s32 0, %v2804
      %v2806 = vrot.slane %v2801, %v2805
      %v2808 = vadd.f32 %v2769, %v2806
      %v2809 = vadd.f32 %v2770, %v2806
      %v2810 = vadd.f32 %v2771, %v2806
      %v2811 = vadd.f32 %v2772, %v2806
      %v2812 = vadd.f32 %v2773, %v2806
      %v2813 = vadd.f32 %v2774, %v2806
      %v2814 = vadd.f32 %v2775, %v2806
      %v2815 = vadd.f32 %v2776, %v2806
      %v2816 = vadd.f32 %v2777, %v2806
      %v2817 = vadd.f32 %v2778, %v2806
      %v2818 = vadd.f32 %v2779, %v2806
      %v2819 = vadd.f32 %v2780, %v2806
      %v2820 = vadd.f32 %v2781, %v2806
      %v2821 = vadd.f32 %v2782, %v2806
      %v2822 = vadd.f32 %v2783, %v2806
      %v2823 = vadd.f32 %v2784, %v2806
      %v2824 = vadd.f32 %v2785, %v2806
      %v2825 = vadd.f32 %v2786, %v2806
      %v2826 = vadd.f32 %v2787, %v2806
      %v2827 = vadd.f32 %v2788, %v2806
      %v2828 = vadd.f32 %v2789, %v2806
      %v2829 = vadd.f32 %v2790, %v2806
      %v2830 = vadd.f32 %v2791, %v2806
      %v2831 = vadd.f32 %v2792, %v2806
      %v2832 = vadd.f32 %v2793, %v2806
      %v2833 = vadd.f32 %v2794, %v2806
      %v2834 = vadd.f32 %v2795, %v2806
      %v2835 = vadd.f32 %v2796, %v2806
      %v2836 = vadd.f32 %v2797, %v2806
      %v2837 = vadd.f32 %v2798, %v2806
      %v2838 = vadd.f32 %v2799, %v2806
      %v2839 = vadd.f32 %v2800, %v2806
      %v2840 = vmax.f32 %v2808, 0.0
      %v2841 = vmax.f32 %v2809, 0.0
      %v2842 = vmax.f32 %v2810, 0.0
      %v2843 = vmax.f32 %v2811, 0.0
      %v2844 = vmax.f32 %v2812, 0.0
      %v2845 = vmax.f32 %v2813, 0.0
      %v2846 = vmax.f32 %v2814, 0.0
      %v2847 = vmax.f32 %v2815, 0.0
      %v2848 = vmax.f32 %v2816, 0.0
      %v2849 = vmax.f32 %v2817, 0.0
      %v2850 = vmax.f32 %v2818, 0.0
      %v2851 = vmax.f32 %v2819, 0.0
      %v2852 = vmax.f32 %v2820, 0.0
      %v2853 = vmax.f32 %v2821, 0.0
      %v2854 = vmax.f32 %v2822, 0.0
      %v2855 = vmax.f32 %v2823, 0.0
      %v2856 = vmax.f32 %v2824, 0.0
      %v2857 = vmax.f32 %v2825, 0.0
      %v2858 = vmax.f32 %v2826, 0.0
      %v2859 = vmax.f32 %v2827, 0.0
      %v2860 = vmax.f32 %v2828, 0.0
      %v2861 = vmax.f32 %v2829, 0.0
      %v2862 = vmax.f32 %v2830, 0.0
      %v2863 = vmax.f32 %v2831, 0.0
      %v2864 = vmax.f32 %v2832, 0.0
      %v2865 = vmax.f32 %v2833, 0.0
      %v2866 = vmax.f32 %v2834, 0.0
      %v2867 = vmax.f32 %v2835, 0.0
      %v2868 = vmax.f32 %v2836, 0.0
      %v2869 = vmax.f32 %v2837, 0.0
      %v2870 = vmax.f32 %v2838, 0.0
      %v2871 = vmax.f32 %v2839, 0.0
      %v2872 = vrot.slane %v2840, 7
      %v2873 = vrot.slane %v2841, 7
      %v2874 = vrot.slane %v2842, 7
      %v2875 = vrot.slane %v2843, 7
      %v2876 = vrot.slane %v2844, 7
      %v2877 = vrot.slane %v2845, 7
      %v2878 = vrot.slane %v2846, 7
      %v2879 = vrot.slane %v2847, 7
      %v2880 = vrot.slane %v2848, 7
      %v2881 = vrot.slane %v2849, 7
      %v2882 = vrot.slane %v2850, 7
      %v2883 = vrot.slane %v2851, 7
      %v2884 = vrot.slane %v2852, 7
      %v2885 = vrot.slane %v2853, 7
      %v2886 = vrot.slane %v2854, 7
      %v2887 = vrot.slane %v2855, 7
      %v2888 = vrot.slane %v2856, 7
      %v2889 = vrot.slane %v2857, 7
      %v2890 = vrot.slane %v2858, 7
      %v2891 = vrot.slane %v2859, 7
      %v2892 = vrot.slane %v2860, 7
      %v2893 = vrot.slane %v2861, 7
      %v2894 = vrot.slane %v2862, 7
      %v2895 = vrot.slane %v2863, 7
      %v2896 = vrot.slane %v2864, 7
      %v2897 = vrot.slane %v2865, 7
      %v2898 = vrot.slane %v2866, 7
      %v2899 = vrot.slane %v2867, 7
      %v2900 = vrot.slane %v2868, 7
      %v2901 = vrot.slane %v2869, 7
      %v2902 = vrot.slane %v2870, 7
      %v2903 = vrot.slane %v2871, 7
      %v2904 = vsel %vm930, %v2902, %v2903
      %v2905 = vsel %vm930, %v2901, %v2902
      %v2906 = vsel %vm930, %v2900, %v2901
      %v2907 = vsel %vm930, %v2899, %v2900
      %v2908 = vsel %vm930, %v2898, %v2899
      %v2909 = vsel %vm930, %v2897, %v2898
      %v2910 = vsel %vm930, %v2896, %v2897
      %v2911 = vsel %vm930, %v2895, %v2896
      %v2912 = vsel %vm930, %v2894, %v2895
      %v2913 = vsel %vm930, %v2893, %v2894
      %v2914 = vsel %vm930, %v2892, %v2893
      %v2915 = vsel %vm930, %v2891, %v2892
      %v2916 = vsel %vm930, %v2890, %v2891
      %v2917 = vsel %vm930, %v2889, %v2890
      %v2918 = vsel %vm930, %v2888, %v2889
      %v2919 = vsel %vm930, %v2887, %v2888
      %v2920 = vsel %vm930, %v2886, %v2887
      %v2921 = vsel %vm930, %v2885, %v2886
      %v2922 = vsel %vm930, %v2884, %v2885
      %v2923 = vsel %vm930, %v2883, %v2884
      %v2924 = vsel %vm930, %v2882, %v2883
      %v2925 = vsel %vm930, %v2881, %v2882
      %v2926 = vsel %vm930, %v2880, %v2881
      %v2927 = vsel %vm930, %v2879, %v2880
      %v2928 = vsel %vm930, %v2878, %v2879
      %v2929 = vsel %vm930, %v2877, %v2878
      %v2930 = vsel %vm930, %v2876, %v2877
      %v2931 = vsel %vm930, %v2875, %v2876
      %v2932 = vsel %vm930, %v2874, %v2875
      %v2933 = vsel %vm930, %v2873, %v2874
      %v2934 = vsel %vm930, %v2872, %v2873
      %v2935 = vsel %vm930, %v2903, %v2872
      %v2936 = vsel %vm995, 0.0, %v2935
      %v2937 = vsel %vm996, 0.0, %v2934
      %v2938 = vsel %vm997, 0.0, %v2933
      %v2939 = vsel %vm998, 0.0, %v2932
      %v2940 = vsel %vm999, 0.0, %v2931
      %v2941 = vsel %vm1000, 0.0, %v2930
      %v2942 = vsel %vm1001, 0.0, %v2929
      %v2943 = vsel %vm1002, 0.0, %v2928
      %v2944 = vsel %vm1003, 0.0, %v2927
      %v2945 = vsel %vm1004, 0.0, %v2926
      %v2946 = vsel %vm1005, 0.0, %v2925
      %v2947 = vsel %vm1006, 0.0, %v2924
      %v2948 = vsel %vm1007, 0.0, %v2923
      %v2949 = vsel %vm1008, 0.0, %v2922
      %v2950 = vsel %vm1009, 0.0, %v2921
      %v2951 = vsel %vm1010, 0.0, %v2920
      %v2952 = vsel %vm1011, 0.0, %v2919
      %v2953 = vsel %vm1012, 0.0, %v2918
      %v2954 = vsel %vm1013, 0.0, %v2917
      %v2955 = vsel %vm1014, 0.0, %v2916
      %v2956 = vsel %vm1015, 0.0, %v2915
      %v2957 = vsel %vm1016, 0.0, %v2914
      %v2958 = vsel %vm1017, 0.0, %v2913
      %v2959 = vsel %vm1018, 0.0, %v2912
      %v2960 = vsel %vm1019, 0.0, %v2911
      %v2961 = vsel %vm1020, 0.0, %v2910
      %v2962 = vsel %vm1021, 0.0, %v2909
      %v2963 = vsel %vm1022, 0.0, %v2908
      %v2964 = vsel %vm1023, 0.0, %v2907
      %v2965 = vsel %vm1024, 0.0, %v2906
      %v2966 = vsel %vm1025, 0.0, %v2905
      %v2967 = vsel %vm1026, 0.0, %v2904
      %v2968 = vrot.slane %v2840, 1
      %v2969 = vrot.slane %v2841, 1
      %v2970 = vrot.slane %v2842, 1
      %v2971 = vrot.slane %v2843, 1
      %v2972 = vrot.slane %v2844, 1
      %v2973 = vrot.slane %v2845, 1
      %v2974 = vrot.slane %v2846, 1
      %v2975 = vrot.slane %v2847, 1
      %v2976 = vrot.slane %v2848, 1
      %v2977 = vrot.slane %v2849, 1
      %v2978 = vrot.slane %v2850, 1
      %v2979 = vrot.slane %v2851, 1
      %v2980 = vrot.slane %v2852, 1
      %v2981 = vrot.slane %v2853, 1
      %v2982 = vrot.slane %v2854, 1
      %v2983 = vrot.slane %v2855, 1
      %v2984 = vrot.slane %v2856, 1
      %v2985 = vrot.slane %v2857, 1
      %v2986 = vrot.slane %v2858, 1
      %v2987 = vrot.slane %v2859, 1
      %v2988 = vrot.slane %v2860, 1
      %v2989 = vrot.slane %v2861, 1
      %v2990 = vrot.slane %v2862, 1
      %v2991 = vrot.slane %v2863, 1
      %v2992 = vrot.slane %v2864, 1
      %v2993 = vrot.slane %v2865, 1
      %v2994 = vrot.slane %v2866, 1
      %v2995 = vrot.slane %v2867, 1
      %v2996 = vrot.slane %v2868, 1
      %v2997 = vrot.slane %v2869, 1
      %v2998 = vrot.slane %v2870, 1
      %v2999 = vrot.slane %v2871, 1
      %v3000 = vsel %vm1123, %v2998, %v2999
      %v3001 = vsel %vm1123, %v2997, %v2998
      %v3002 = vsel %vm1123, %v2996, %v2997
      %v3003 = vsel %vm1123, %v2995, %v2996
      %v3004 = vsel %vm1123, %v2994, %v2995
      %v3005 = vsel %vm1123, %v2993, %v2994
      %v3006 = vsel %vm1123, %v2992, %v2993
      %v3007 = vsel %vm1123, %v2991, %v2992
      %v3008 = vsel %vm1123, %v2990, %v2991
      %v3009 = vsel %vm1123, %v2989, %v2990
      %v3010 = vsel %vm1123, %v2988, %v2989
      %v3011 = vsel %vm1123, %v2987, %v2988
      %v3012 = vsel %vm1123, %v2986, %v2987
      %v3013 = vsel %vm1123, %v2985, %v2986
      %v3014 = vsel %vm1123, %v2984, %v2985
      %v3015 = vsel %vm1123, %v2983, %v2984
      %v3016 = vsel %vm1123, %v2982, %v2983
      %v3017 = vsel %vm1123, %v2981, %v2982
      %v3018 = vsel %vm1123, %v2980, %v2981
      %v3019 = vsel %vm1123, %v2979, %v2980
      %v3020 = vsel %vm1123, %v2978, %v2979
      %v3021 = vsel %vm1123, %v2977, %v2978
      %v3022 = vsel %vm1123, %v2976, %v2977
      %v3023 = vsel %vm1123, %v2975, %v2976
      %v3024 = vsel %vm1123, %v2974, %v2975
      %v3025 = vsel %vm1123, %v2973, %v2974
      %v3026 = vsel %vm1123, %v2972, %v2973
      %v3027 = vsel %vm1123, %v2971, %v2972
      %v3028 = vsel %vm1123, %v2970, %v2971
      %v3029 = vsel %vm1123, %v2969, %v2970
      %v3030 = vsel %vm1123, %v2968, %v2969
      %v3031 = vsel %vm1123, %v2999, %v2968
      %v3032 = vsel %vm1188, 0.0, %v3030
      %v3033 = vsel %vm1189, 0.0, %v3029
      %v3034 = vsel %vm1190, 0.0, %v3028
      %v3035 = vsel %vm1191, 0.0, %v3027
      %v3036 = vsel %vm1192, 0.0, %v3026
      %v3037 = vsel %vm1193, 0.0, %v3025
      %v3038 = vsel %vm1194, 0.0, %v3024
      %v3039 = vsel %vm1195, 0.0, %v3023
      %v3040 = vsel %vm1196, 0.0, %v3022
      %v3041 = vsel %vm1197, 0.0, %v3021
      %v3042 = vsel %vm1198, 0.0, %v3020
      %v3043 = vsel %vm1199, 0.0, %v3019
      %v3044 = vsel %vm1200, 0.0, %v3018
      %v3045 = vsel %vm1201, 0.0, %v3017
      %v3046 = vsel %vm1202, 0.0, %v3016
      %v3047 = vsel %vm1203, 0.0, %v3015
      %v3048 = vsel %vm1204, 0.0, %v3014
      %v3049 = vsel %vm1205, 0.0, %v3013
      %v3050 = vsel %vm1206, 0.0, %v3012
      %v3051 = vsel %vm1207, 0.0, %v3011
      %v3052 = vsel %vm1208, 0.0, %v3010
      %v3053 = vsel %vm1209, 0.0, %v3009
      %v3054 = vsel %vm1210, 0.0, %v3008
      %v3055 = vsel %vm1211, 0.0, %v3007
      %v3056 = vsel %vm1212, 0.0, %v3006
      %v3057 = vsel %vm1213, 0.0, %v3005
      %v3058 = vsel %vm1214, 0.0, %v3004
      %v3059 = vsel %vm1215, 0.0, %v3003
      %v3060 = vsel %vm1216, 0.0, %v3002
      %v3061 = vsel %vm1217, 0.0, %v3001
      %v3062 = vsel %vm1218, 0.0, %v3000
      %v3063 = vsel %vm1219, 0.0, %v3031
      %vm3064 = vcmask 388096
      %3065 = vst.msk [vmem:[#allocation3] sm:$0xf] %vm3064, 0
      %3066 = vst.msk [vmem:[#allocation3 + $0x4] sm:$0xf] %vm3064, 0
      %3067 = vst.msk [vmem:[#allocation3 + $0x88] sm:$0xf] %vm3064, 0
      %3068 = vst.msk [vmem:[#allocation3 + $0x8c] sm:$0xf] %vm3064, 0
      %v3069 = vpack.c.bf16 %v2937, %v2936
      %v3070 = vpack.c.bf16 %v2939, %v2938
      %v3071 = vpack.c.bf16 %v2941, %v2940
      %v3072 = vpack.c.bf16 %v2943, %v2942
      %v3073 = vpack.c.bf16 %v2945, %v2944
      %v3074 = vpack.c.bf16 %v2947, %v2946
      %v3075 = vpack.c.bf16 %v2949, %v2948
      %v3076 = vpack.c.bf16 %v2951, %v2950
      %v3077 = vpack.c.bf16 %v2953, %v2952
      %v3078 = vpack.c.bf16 %v2955, %v2954
      %v3079 = vpack.c.bf16 %v2957, %v2956
      %v3080 = vpack.c.bf16 %v2959, %v2958
      %v3081 = vpack.c.bf16 %v2961, %v2960
      %v3082 = vpack.c.bf16 %v2963, %v2962
      %v3083 = vpack.c.bf16 %v2965, %v2964
      %v3084 = vpack.c.bf16 %v2967, %v2966
      %v3101 = vunpack.c.l.b16 %v3069
      %v3102 = vunpack.c.h.b16 %v3069
      %v3103 = vunpack.c.l.b16 %v3070
      %v3104 = vunpack.c.h.b16 %v3070
      %v3105 = vunpack.c.l.b16 %v3071
      %v3106 = vunpack.c.h.b16 %v3071
      %v3107 = vunpack.c.l.b16 %v3072
      %v3108 = vunpack.c.h.b16 %v3072
      %v3109 = vunpack.c.l.b16 %v3073
      %v3110 = vunpack.c.h.b16 %v3073
      %v3111 = vunpack.c.l.b16 %v3074
      %v3112 = vunpack.c.h.b16 %v3074
      %v3113 = vunpack.c.l.b16 %v3075
      %v3114 = vunpack.c.h.b16 %v3075
      %v3115 = vunpack.c.l.b16 %v3076
      %v3116 = vunpack.c.h.b16 %v3076
      %v3117 = vunpack.c.l.b16 %v3077
      %v3118 = vunpack.c.h.b16 %v3077
      %v3119 = vunpack.c.l.b16 %v3078
      %v3120 = vunpack.c.h.b16 %v3078
      %v3121 = vunpack.c.l.b16 %v3079
      %v3122 = vunpack.c.h.b16 %v3079
      %v3123 = vunpack.c.l.b16 %v3080
      %v3124 = vunpack.c.h.b16 %v3080
      %v3125 = vunpack.c.l.b16 %v3081
      %v3126 = vunpack.c.h.b16 %v3081
      %v3127 = vunpack.c.l.b16 %v3082
      %v3128 = vunpack.c.h.b16 %v3082
      %v3129 = vunpack.c.l.b16 %v3083
      %v3130 = vunpack.c.h.b16 %v3083
      %v3131 = vunpack.c.l.b16 %v3084
      %v3132 = vunpack.c.h.b16 %v3084
      %v3133 = vpack.c.b16 %v3101, %v3101
      %v3134 = vpack.c.b16 %v3102, %v3102
      %v3135 = vpack.c.b16 %v3103, %v3103
      %v3136 = vpack.c.b16 %v3104, %v3104
      %v3137 = vpack.c.b16 %v3105, %v3105
      %v3138 = vpack.c.b16 %v3106, %v3106
      %v3139 = vpack.c.b16 %v3107, %v3107
      %v3140 = vpack.c.b16 %v3108, %v3108
      %v3141 = vpack.c.b16 %v3109, %v3109
      %v3142 = vpack.c.b16 %v3110, %v3110
      %v3143 = vpack.c.b16 %v3111, %v3111
      %v3144 = vpack.c.b16 %v3112, %v3112
      %v3145 = vpack.c.b16 %v3113, %v3113
      %v3146 = vpack.c.b16 %v3114, %v3114
      %v3147 = vpack.c.b16 %v3115, %v3115
      %v3148 = vpack.c.b16 %v3116, %v3116
      %v3149 = vpack.c.b16 %v3117, %v3117
      %v3150 = vpack.c.b16 %v3118, %v3118
      %v3151 = vpack.c.b16 %v3119, %v3119
      %v3152 = vpack.c.b16 %v3120, %v3120
      %v3153 = vpack.c.b16 %v3121, %v3121
      %v3154 = vpack.c.b16 %v3122, %v3122
      %v3155 = vpack.c.b16 %v3123, %v3123
      %v3156 = vpack.c.b16 %v3124, %v3124
      %v3157 = vpack.c.b16 %v3125, %v3125
      %v3158 = vpack.c.b16 %v3126, %v3126
      %v3159 = vpack.c.b16 %v3127, %v3127
      %v3160 = vpack.c.b16 %v3128, %v3128
      %v3161 = vpack.c.b16 %v3129, %v3129
      %v3162 = vpack.c.b16 %v3130, %v3130
      %v3163 = vpack.c.b16 %v3131, %v3131
      %v3164 = vpack.c.b16 %v3132, %v3132
      %vm3197 = vcmask 125952
      %3198 = vst.msk [vmem:[#allocation3 + $0x8] sm:$0xf] %vm3197, %v3133
      %3199 = vst.msk [vmem:[#allocation3 + $0xc] sm:$0xf] %vm3197, %v3134
      %3200 = vst.msk [vmem:[#allocation3 + $0x10] sm:$0xf] %vm3197, %v3135
      %3201 = vst.msk [vmem:[#allocation3 + $0x14] sm:$0xf] %vm3197, %v3136
      %3202 = vst.msk [vmem:[#allocation3 + $0x18] sm:$0xf] %vm3197, %v3137
      %3203 = vst.msk [vmem:[#allocation3 + $0x1c] sm:$0xf] %vm3197, %v3138
      %3204 = vst.msk [vmem:[#allocation3 + $0x20] sm:$0xf] %vm3197, %v3139
      %3205 = vst.msk [vmem:[#allocation3 + $0x24] sm:$0xf] %vm3197, %v3140
      %3206 = vst.msk [vmem:[#allocation3 + $0x28] sm:$0xf] %vm3197, %v3141
      %3207 = vst.msk [vmem:[#allocation3 + $0x2c] sm:$0xf] %vm3197, %v3142
      %3208 = vst.msk [vmem:[#allocation3 + $0x30] sm:$0xf] %vm3197, %v3143
      %3209 = vst.msk [vmem:[#allocation3 + $0x34] sm:$0xf] %vm3197, %v3144
      %3210 = vst.msk [vmem:[#allocation3 + $0x38] sm:$0xf] %vm3197, %v3145
      %3211 = vst.msk [vmem:[#allocation3 + $0x3c] sm:$0xf] %vm3197, %v3146
      %3212 = vst.msk [vmem:[#allocation3 + $0x40] sm:$0xf] %vm3197, %v3147
      %3213 = vst.msk [vmem:[#allocation3 + $0x44] sm:$0xf] %vm3197, %v3148
      %3214 = vst.msk [vmem:[#allocation3 + $0x48] sm:$0xf] %vm3197, %v3149
      %3215 = vst.msk [vmem:[#allocation3 + $0x4c] sm:$0xf] %vm3197, %v3150
      %3216 = vst.msk [vmem:[#allocation3 + $0x50] sm:$0xf] %vm3197, %v3151
      %3217 = vst.msk [vmem:[#allocation3 + $0x54] sm:$0xf] %vm3197, %v3152
      %3218 = vst.msk [vmem:[#allocation3 + $0x58] sm:$0xf] %vm3197, %v3153
      %3219 = vst.msk [vmem:[#allocation3 + $0x5c] sm:$0xf] %vm3197, %v3154
      %3220 = vst.msk [vmem:[#allocation3 + $0x60] sm:$0xf] %vm3197, %v3155
      %3221 = vst.msk [vmem:[#allocation3 + $0x64] sm:$0xf] %vm3197, %v3156
      %3222 = vst.msk [vmem:[#allocation3 + $0x68] sm:$0xf] %vm3197, %v3157
      %3223 = vst.msk [vmem:[#allocation3 + $0x6c] sm:$0xf] %vm3197, %v3158
      %3224 = vst.msk [vmem:[#allocation3 + $0x70] sm:$0xf] %vm3197, %v3159
      %3225 = vst.msk [vmem:[#allocation3 + $0x74] sm:$0xf] %vm3197, %v3160
      %3226 = vst.msk [vmem:[#allocation3 + $0x78] sm:$0xf] %vm3197, %v3161
      %3227 = vst.msk [vmem:[#allocation3 + $0x7c] sm:$0xf] %vm3197, %v3162
      %3228 = vst.msk [vmem:[#allocation3 + $0x80] sm:$0xf] %vm3197, %v3163
      %3229 = vst.msk [vmem:[#allocation3 + $0x84] sm:$0xf] %vm3197, %v3164
      %v3230 = vpack.c.bf16 %v2841, %v2840
      %v3231 = vpack.c.bf16 %v2843, %v2842
      %v3232 = vpack.c.bf16 %v2845, %v2844
      %v3233 = vpack.c.bf16 %v2847, %v2846
      %v3234 = vpack.c.bf16 %v2849, %v2848
      %v3235 = vpack.c.bf16 %v2851, %v2850
      %v3236 = vpack.c.bf16 %v2853, %v2852
      %v3237 = vpack.c.bf16 %v2855, %v2854
      %v3238 = vpack.c.bf16 %v2857, %v2856
      %v3239 = vpack.c.bf16 %v2859, %v2858
      %v3240 = vpack.c.bf16 %v2861, %v2860
      %v3241 = vpack.c.bf16 %v2863, %v2862
      %v3242 = vpack.c.bf16 %v2865, %v2864
      %v3243 = vpack.c.bf16 %v2867, %v2866
      %v3244 = vpack.c.bf16 %v2869, %v2868
      %v3245 = vpack.c.bf16 %v2871, %v2870
      %v3262 = vunpack.c.l.b16 %v3230
      %v3263 = vunpack.c.h.b16 %v3230
      %v3264 = vunpack.c.l.b16 %v3231
      %v3265 = vunpack.c.h.b16 %v3231
      %v3266 = vunpack.c.l.b16 %v3232
      %v3267 = vunpack.c.h.b16 %v3232
      %v3268 = vunpack.c.l.b16 %v3233
      %v3269 = vunpack.c.h.b16 %v3233
      %v3270 = vunpack.c.l.b16 %v3234
      %v3271 = vunpack.c.h.b16 %v3234
      %v3272 = vunpack.c.l.b16 %v3235
      %v3273 = vunpack.c.h.b16 %v3235
      %v3274 = vunpack.c.l.b16 %v3236
      %v3275 = vunpack.c.h.b16 %v3236
      %v3276 = vunpack.c.l.b16 %v3237
      %v3277 = vunpack.c.h.b16 %v3237
      %v3278 = vunpack.c.l.b16 %v3238
      %v3279 = vunpack.c.h.b16 %v3238
      %v3280 = vunpack.c.l.b16 %v3239
      %v3281 = vunpack.c.h.b16 %v3239
      %v3282 = vunpack.c.l.b16 %v3240
      %v3283 = vunpack.c.h.b16 %v3240
      %v3284 = vunpack.c.l.b16 %v3241
      %v3285 = vunpack.c.h.b16 %v3241
      %v3286 = vunpack.c.l.b16 %v3242
      %v3287 = vunpack.c.h.b16 %v3242
      %v3288 = vunpack.c.l.b16 %v3243
      %v3289 = vunpack.c.h.b16 %v3243
      %v3290 = vunpack.c.l.b16 %v3244
      %v3291 = vunpack.c.h.b16 %v3244
      %v3292 = vunpack.c.l.b16 %v3245
      %v3293 = vunpack.c.h.b16 %v3245
      %v3294 = vpack.c.b16 %v3262, %v3262
      %v3295 = vpack.c.b16 %v3263, %v3263
      %v3296 = vpack.c.b16 %v3264, %v3264
      %v3297 = vpack.c.b16 %v3265, %v3265
      %v3298 = vpack.c.b16 %v3266, %v3266
      %v3299 = vpack.c.b16 %v3267, %v3267
      %v3300 = vpack.c.b16 %v3268, %v3268
      %v3301 = vpack.c.b16 %v3269, %v3269
      %v3302 = vpack.c.b16 %v3270, %v3270
      %v3303 = vpack.c.b16 %v3271, %v3271
      %v3304 = vpack.c.b16 %v3272, %v3272
      %v3305 = vpack.c.b16 %v3273, %v3273
      %v3306 = vpack.c.b16 %v3274, %v3274
      %v3307 = vpack.c.b16 %v3275, %v3275
      %v3308 = vpack.c.b16 %v3276, %v3276
      %v3309 = vpack.c.b16 %v3277, %v3277
      %v3310 = vpack.c.b16 %v3278, %v3278
      %v3311 = vpack.c.b16 %v3279, %v3279
      %v3312 = vpack.c.b16 %v3280, %v3280
      %v3313 = vpack.c.b16 %v3281, %v3281
      %v3314 = vpack.c.b16 %v3282, %v3282
      %v3315 = vpack.c.b16 %v3283, %v3283
      %v3316 = vpack.c.b16 %v3284, %v3284
      %v3317 = vpack.c.b16 %v3285, %v3285
      %v3318 = vpack.c.b16 %v3286, %v3286
      %v3319 = vpack.c.b16 %v3287, %v3287
      %v3320 = vpack.c.b16 %v3288, %v3288
      %v3321 = vpack.c.b16 %v3289, %v3289
      %v3322 = vpack.c.b16 %v3290, %v3290
      %v3323 = vpack.c.b16 %v3291, %v3291
      %v3324 = vpack.c.b16 %v3292, %v3292
      %v3325 = vpack.c.b16 %v3293, %v3293
      %3326 = vrot.lane.b32.xlu0 %v3294, 16
      %v3327 = vpop.permute.xlu0 %3326
      %3328 = vrot.lane.b32.xlu0 %v3295, 16
      %v3329 = vpop.permute.xlu0 %3328
      %3330 = vrot.lane.b32.xlu0 %v3296, 16
      %v3331 = vpop.permute.xlu0 %3330
      %3332 = vrot.lane.b32.xlu0 %v3297, 16
      %v3333 = vpop.permute.xlu0 %3332
      %3334 = vrot.lane.b32.xlu0 %v3298, 16
      %v3335 = vpop.permute.xlu0 %3334
      %3336 = vrot.lane.b32.xlu0 %v3299, 16
      %v3337 = vpop.permute.xlu0 %3336
      %3338 = vrot.lane.b32.xlu0 %v3300, 16
      %v3339 = vpop.permute.xlu0 %3338
      %3340 = vrot.lane.b32.xlu0 %v3301, 16
      %v3341 = vpop.permute.xlu0 %3340
      %3342 = vrot.lane.b32.xlu0 %v3302, 16
      %v3343 = vpop.permute.xlu0 %3342
      %3344 = vrot.lane.b32.xlu0 %v3303, 16
      %v3345 = vpop.permute.xlu0 %3344
      %3346 = vrot.lane.b32.xlu0 %v3304, 16
      %v3347 = vpop.permute.xlu0 %3346
      %3348 = vrot.lane.b32.xlu0 %v3305, 16
      %v3349 = vpop.permute.xlu0 %3348
      %3350 = vrot.lane.b32.xlu0 %v3306, 16
      %v3351 = vpop.permute.xlu0 %3350
      %3352 = vrot.lane.b32.xlu0 %v3307, 16
      %v3353 = vpop.permute.xlu0 %3352
      %3354 = vrot.lane.b32.xlu0 %v3308, 16
      %v3355 = vpop.permute.xlu0 %3354
      %3356 = vrot.lane.b32.xlu0 %v3309, 16
      %v3357 = vpop.permute.xlu0 %3356
      %3358 = vrot.lane.b32.xlu0 %v3310, 16
      %v3359 = vpop.permute.xlu0 %3358
      %3360 = vrot.lane.b32.xlu0 %v3311, 16
      %v3361 = vpop.permute.xlu0 %3360
      %3362 = vrot.lane.b32.xlu0 %v3312, 16
      %v3363 = vpop.permute.xlu0 %3362
      %3364 = vrot.lane.b32.xlu0 %v3313, 16
      %v3365 = vpop.permute.xlu0 %3364
      %3366 = vrot.lane.b32.xlu0 %v3314, 16
      %v3367 = vpop.permute.xlu0 %3366
      %3368 = vrot.lane.b32.xlu0 %v3315, 16
      %v3369 = vpop.permute.xlu0 %3368
      %3370 = vrot.lane.b32.xlu0 %v3316, 16
      %v3371 = vpop.permute.xlu0 %3370
      %3372 = vrot.lane.b32.xlu0 %v3317, 16
      %v3373 = vpop.permute.xlu0 %3372
      %3374 = vrot.lane.b32.xlu0 %v3318, 16
      %v3375 = vpop.permute.xlu0 %3374
      %3376 = vrot.lane.b32.xlu0 %v3319, 16
      %v3377 = vpop.permute.xlu0 %3376
      %3378 = vrot.lane.b32.xlu0 %v3320, 16
      %v3379 = vpop.permute.xlu0 %3378
      %3380 = vrot.lane.b32.xlu0 %v3321, 16
      %v3381 = vpop.permute.xlu0 %3380
      %3382 = vrot.lane.b32.xlu0 %v3322, 16
      %v3383 = vpop.permute.xlu0 %3382
      %3384 = vrot.lane.b32.xlu0 %v3323, 16
      %v3385 = vpop.permute.xlu0 %3384
      %3386 = vrot.lane.b32.xlu0 %v3324, 16
      %v3387 = vpop.permute.xlu0 %3386
      %3388 = vrot.lane.b32.xlu0 %v3325, 16
      %v3389 = vpop.permute.xlu0 %3388
      %vm3422 = vcmask 257152
      %3423 = vst.msk [vmem:[#allocation3 + $0x8] sm:$0xf] %vm3422, %v3327
      %3424 = vst.msk [vmem:[#allocation3 + $0xc] sm:$0xf] %vm3422, %v3329
      %3425 = vst.msk [vmem:[#allocation3 + $0x10] sm:$0xf] %vm3422, %v3331
      %3426 = vst.msk [vmem:[#allocation3 + $0x14] sm:$0xf] %vm3422, %v3333
      %3427 = vst.msk [vmem:[#allocation3 + $0x18] sm:$0xf] %vm3422, %v3335
      %3428 = vst.msk [vmem:[#allocation3 + $0x1c] sm:$0xf] %vm3422, %v3337
      %3429 = vst.msk [vmem:[#allocation3 + $0x20] sm:$0xf] %vm3422, %v3339
      %3430 = vst.msk [vmem:[#allocation3 + $0x24] sm:$0xf] %vm3422, %v3341
      %3431 = vst.msk [vmem:[#allocation3 + $0x28] sm:$0xf] %vm3422, %v3343
      %3432 = vst.msk [vmem:[#allocation3 + $0x2c] sm:$0xf] %vm3422, %v3345
      %3433 = vst.msk [vmem:[#allocation3 + $0x30] sm:$0xf] %vm3422, %v3347
      %3434 = vst.msk [vmem:[#allocation3 + $0x34] sm:$0xf] %vm3422, %v3349
      %3435 = vst.msk [vmem:[#allocation3 + $0x38] sm:$0xf] %vm3422, %v3351
      %3436 = vst.msk [vmem:[#allocation3 + $0x3c] sm:$0xf] %vm3422, %v3353
      %3437 = vst.msk [vmem:[#allocation3 + $0x40] sm:$0xf] %vm3422, %v3355
      %3438 = vst.msk [vmem:[#allocation3 + $0x44] sm:$0xf] %vm3422, %v3357
      %3439 = vst.msk [vmem:[#allocation3 + $0x48] sm:$0xf] %vm3422, %v3359
      %3440 = vst.msk [vmem:[#allocation3 + $0x4c] sm:$0xf] %vm3422, %v3361
      %3441 = vst.msk [vmem:[#allocation3 + $0x50] sm:$0xf] %vm3422, %v3363
      %3442 = vst.msk [vmem:[#allocation3 + $0x54] sm:$0xf] %vm3422, %v3365
      %3443 = vst.msk [vmem:[#allocation3 + $0x58] sm:$0xf] %vm3422, %v3367
      %3444 = vst.msk [vmem:[#allocation3 + $0x5c] sm:$0xf] %vm3422, %v3369
      %3445 = vst.msk [vmem:[#allocation3 + $0x60] sm:$0xf] %vm3422, %v3371
      %3446 = vst.msk [vmem:[#allocation3 + $0x64] sm:$0xf] %vm3422, %v3373
      %3447 = vst.msk [vmem:[#allocation3 + $0x68] sm:$0xf] %vm3422, %v3375
      %3448 = vst.msk [vmem:[#allocation3 + $0x6c] sm:$0xf] %vm3422, %v3377
      %3449 = vst.msk [vmem:[#allocation3 + $0x70] sm:$0xf] %vm3422, %v3379
      %3450 = vst.msk [vmem:[#allocation3 + $0x74] sm:$0xf] %vm3422, %v3381
      %3451 = vst.msk [vmem:[#allocation3 + $0x78] sm:$0xf] %vm3422, %v3383
      %3452 = vst.msk [vmem:[#allocation3 + $0x7c] sm:$0xf] %vm3422, %v3385
      %3453 = vst.msk [vmem:[#allocation3 + $0x80] sm:$0xf] %vm3422, %v3387
      %3454 = vst.msk [vmem:[#allocation3 + $0x84] sm:$0xf] %vm3422, %v3389
      %v3455 = vpack.c.bf16 %v3033, %v3032
      %v3456 = vpack.c.bf16 %v3035, %v3034
      %v3457 = vpack.c.bf16 %v3037, %v3036
      %v3458 = vpack.c.bf16 %v3039, %v3038
      %v3459 = vpack.c.bf16 %v3041, %v3040
      %v3460 = vpack.c.bf16 %v3043, %v3042
      %v3461 = vpack.c.bf16 %v3045, %v3044
      %v3462 = vpack.c.bf16 %v3047, %v3046
      %v3463 = vpack.c.bf16 %v3049, %v3048
      %v3464 = vpack.c.bf16 %v3051, %v3050
      %v3465 = vpack.c.bf16 %v3053, %v3052
      %v3466 = vpack.c.bf16 %v3055, %v3054
      %v3467 = vpack.c.bf16 %v3057, %v3056
      %v3468 = vpack.c.bf16 %v3059, %v3058
      %v3469 = vpack.c.bf16 %v3061, %v3060
      %v3470 = vpack.c.bf16 %v3063, %v3062
      %v3487 = vunpack.c.l.b16 %v3455
      %v3488 = vunpack.c.h.b16 %v3455
      %v3489 = vunpack.c.l.b16 %v3456
      %v3490 = vunpack.c.h.b16 %v3456
      %v3491 = vunpack.c.l.b16 %v3457
      %v3492 = vunpack.c.h.b16 %v3457
      %v3493 = vunpack.c.l.b16 %v3458
      %v3494 = vunpack.c.h.b16 %v3458
      %v3495 = vunpack.c.l.b16 %v3459
      %v3496 = vunpack.c.h.b16 %v3459
      %v3497 = vunpack.c.l.b16 %v3460
      %v3498 = vunpack.c.h.b16 %v3460
      %v3499 = vunpack.c.l.b16 %v3461
      %v3500 = vunpack.c.h.b16 %v3461
      %v3501 = vunpack.c.l.b16 %v3462
      %v3502 = vunpack.c.h.b16 %v3462
      %v3503 = vunpack.c.l.b16 %v3463
      %v3504 = vunpack.c.h.b16 %v3463
      %v3505 = vunpack.c.l.b16 %v3464
      %v3506 = vunpack.c.h.b16 %v3464
      %v3507 = vunpack.c.l.b16 %v3465
      %v3508 = vunpack.c.h.b16 %v3465
      %v3509 = vunpack.c.l.b16 %v3466
      %v3510 = vunpack.c.h.b16 %v3466
      %v3511 = vunpack.c.l.b16 %v3467
      %v3512 = vunpack.c.h.b16 %v3467
      %v3513 = vunpack.c.l.b16 %v3468
      %v3514 = vunpack.c.h.b16 %v3468
      %v3515 = vunpack.c.l.b16 %v3469
      %v3516 = vunpack.c.h.b16 %v3469
      %v3517 = vunpack.c.l.b16 %v3470
      %v3518 = vunpack.c.h.b16 %v3470
      %v3519 = vpack.c.b16 %v3487, %v3487
      %v3520 = vpack.c.b16 %v3488, %v3488
      %v3521 = vpack.c.b16 %v3489, %v3489
      %v3522 = vpack.c.b16 %v3490, %v3490
      %v3523 = vpack.c.b16 %v3491, %v3491
      %v3524 = vpack.c.b16 %v3492, %v3492
      %v3525 = vpack.c.b16 %v3493, %v3493
      %v3526 = vpack.c.b16 %v3494, %v3494
      %v3527 = vpack.c.b16 %v3495, %v3495
      %v3528 = vpack.c.b16 %v3496, %v3496
      %v3529 = vpack.c.b16 %v3497, %v3497
      %v3530 = vpack.c.b16 %v3498, %v3498
      %v3531 = vpack.c.b16 %v3499, %v3499
      %v3532 = vpack.c.b16 %v3500, %v3500
      %v3533 = vpack.c.b16 %v3501, %v3501
      %v3534 = vpack.c.b16 %v3502, %v3502
      %v3535 = vpack.c.b16 %v3503, %v3503
      %v3536 = vpack.c.b16 %v3504, %v3504
      %v3537 = vpack.c.b16 %v3505, %v3505
      %v3538 = vpack.c.b16 %v3506, %v3506
      %v3539 = vpack.c.b16 %v3507, %v3507
      %v3540 = vpack.c.b16 %v3508, %v3508
      %v3541 = vpack.c.b16 %v3509, %v3509
      %v3542 = vpack.c.b16 %v3510, %v3510
      %v3543 = vpack.c.b16 %v3511, %v3511
      %v3544 = vpack.c.b16 %v3512, %v3512
      %v3545 = vpack.c.b16 %v3513, %v3513
      %v3546 = vpack.c.b16 %v3514, %v3514
      %v3547 = vpack.c.b16 %v3515, %v3515
      %v3548 = vpack.c.b16 %v3516, %v3516
      %v3549 = vpack.c.b16 %v3517, %v3517
      %v3550 = vpack.c.b16 %v3518, %v3518
      %3551 = vrot.lane.b32.xlu0 %v3519, 32
      %v3552 = vpop.permute.xlu0 %3551
      %3553 = vrot.lane.b32.xlu0 %v3520, 32
      %v3554 = vpop.permute.xlu0 %3553
      %3555 = vrot.lane.b32.xlu0 %v3521, 32
      %v3556 = vpop.permute.xlu0 %3555
      %3557 = vrot.lane.b32.xlu0 %v3522, 32
      %v3558 = vpop.permute.xlu0 %3557
      %3559 = vrot.lane.b32.xlu0 %v3523, 32
      %v3560 = vpop.permute.xlu0 %3559
      %3561 = vrot.lane.b32.xlu0 %v3524, 32
      %v3562 = vpop.permute.xlu0 %3561
      %3563 = vrot.lane.b32.xlu0 %v3525, 32
      %v3564 = vpop.permute.xlu0 %3563
      %3565 = vrot.lane.b32.xlu0 %v3526, 32
      %v3566 = vpop.permute.xlu0 %3565
      %3567 = vrot.lane.b32.xlu0 %v3527, 32
      %v3568 = vpop.permute.xlu0 %3567
      %3569 = vrot.lane.b32.xlu0 %v3528, 32
      %v3570 = vpop.permute.xlu0 %3569
      %3571 = vrot.lane.b32.xlu0 %v3529, 32
      %v3572 = vpop.permute.xlu0 %3571
      %3573 = vrot.lane.b32.xlu0 %v3530, 32
      %v3574 = vpop.permute.xlu0 %3573
      %3575 = vrot.lane.b32.xlu0 %v3531, 32
      %v3576 = vpop.permute.xlu0 %3575
      %3577 = vrot.lane.b32.xlu0 %v3532, 32
      %v3578 = vpop.permute.xlu0 %3577
      %3579 = vrot.lane.b32.xlu0 %v3533, 32
      %v3580 = vpop.permute.xlu0 %3579
      %3581 = vrot.lane.b32.xlu0 %v3534, 32
      %v3582 = vpop.permute.xlu0 %3581
      %3583 = vrot.lane.b32.xlu0 %v3535, 32
      %v3584 = vpop.permute.xlu0 %3583
      %3585 = vrot.lane.b32.xlu0 %v3536, 32
      %v3586 = vpop.permute.xlu0 %3585
      %3587 = vrot.lane.b32.xlu0 %v3537, 32
      %v3588 = vpop.permute.xlu0 %3587
      %3589 = vrot.lane.b32.xlu0 %v3538, 32
      %v3590 = vpop.permute.xlu0 %3589
      %3591 = vrot.lane.b32.xlu0 %v3539, 32
      %v3592 = vpop.permute.xlu0 %3591
      %3593 = vrot.lane.b32.xlu0 %v3540, 32
      %v3594 = vpop.permute.xlu0 %3593
      %3595 = vrot.lane.b32.xlu0 %v3541, 32
      %v3596 = vpop.permute.xlu0 %3595
      %3597 = vrot.lane.b32.xlu0 %v3542, 32
      %v3598 = vpop.permute.xlu0 %3597
      %3599 = vrot.lane.b32.xlu0 %v3543, 32
      %v3600 = vpop.permute.xlu0 %3599
      %3601 = vrot.lane.b32.xlu0 %v3544, 32
      %v3602 = vpop.permute.xlu0 %3601
      %3603 = vrot.lane.b32.xlu0 %v3545, 32
      %v3604 = vpop.permute.xlu0 %3603
      %3605 = vrot.lane.b32.xlu0 %v3546, 32
      %v3606 = vpop.permute.xlu0 %3605
      %3607 = vrot.lane.b32.xlu0 %v3547, 32
      %v3608 = vpop.permute.xlu0 %3607
      %3609 = vrot.lane.b32.xlu0 %v3548, 32
      %v3610 = vpop.permute.xlu0 %3609
      %3611 = vrot.lane.b32.xlu0 %v3549, 32
      %v3612 = vpop.permute.xlu0 %3611
      %3613 = vrot.lane.b32.xlu0 %v3550, 32
      %v3614 = vpop.permute.xlu0 %3613
      %vm3647 = vcmask 388352
      %3648 = vst.msk [vmem:[#allocation3 + $0x8] sm:$0xf] %vm3647, %v3552
      %3649 = vst.msk [vmem:[#allocation3 + $0xc] sm:$0xf] %vm3647, %v3554
      %3650 = vst.msk [vmem:[#allocation3 + $0x10] sm:$0xf] %vm3647, %v3556
      %3651 = vst.msk [vmem:[#allocation3 + $0x14] sm:$0xf] %vm3647, %v3558
      %3652 = vst.msk [vmem:[#allocation3 + $0x18] sm:$0xf] %vm3647, %v3560
      %3653 = vst.msk [vmem:[#allocation3 + $0x1c] sm:$0xf] %vm3647, %v3562
      %3654 = vst.msk [vmem:[#allocation3 + $0x20] sm:$0xf] %vm3647, %v3564
      %3655 = vst.msk [vmem:[#allocation3 + $0x24] sm:$0xf] %vm3647, %v3566
      %3656 = vst.msk [vmem:[#allocation3 + $0x28] sm:$0xf] %vm3647, %v3568
      %3657 = vst.msk [vmem:[#allocation3 + $0x2c] sm:$0xf] %vm3647, %v3570
      %3658 = vst.msk [vmem:[#allocation3 + $0x30] sm:$0xf] %vm3647, %v3572
      %3659 = vst.msk [vmem:[#allocation3 + $0x34] sm:$0xf] %vm3647, %v3574
      %3660 = vst.msk [vmem:[#allocation3 + $0x38] sm:$0xf] %vm3647, %v3576
      %3661 = vst.msk [vmem:[#allocation3 + $0x3c] sm:$0xf] %vm3647, %v3578
      %3662 = vst.msk [vmem:[#allocation3 + $0x40] sm:$0xf] %vm3647, %v3580
      %3663 = vst.msk [vmem:[#allocation3 + $0x44] sm:$0xf] %vm3647, %v3582
      %3664 = vst.msk [vmem:[#allocation3 + $0x48] sm:$0xf] %vm3647, %v3584
      %3665 = vst.msk [vmem:[#allocation3 + $0x4c] sm:$0xf] %vm3647, %v3586
      %3666 = vst.msk [vmem:[#allocation3 + $0x50] sm:$0xf] %vm3647, %v3588
      %3667 = vst.msk [vmem:[#allocation3 + $0x54] sm:$0xf] %vm3647, %v3590
      %3668 = vst.msk [vmem:[#allocation3 + $0x58] sm:$0xf] %vm3647, %v3592
      %3669 = vst.msk [vmem:[#allocation3 + $0x5c] sm:$0xf] %vm3647, %v3594
      %3670 = vst.msk [vmem:[#allocation3 + $0x60] sm:$0xf] %vm3647, %v3596
      %3671 = vst.msk [vmem:[#allocation3 + $0x64] sm:$0xf] %vm3647, %v3598
      %3672 = vst.msk [vmem:[#allocation3 + $0x68] sm:$0xf] %vm3647, %v3600
      %3673 = vst.msk [vmem:[#allocation3 + $0x6c] sm:$0xf] %vm3647, %v3602
      %3674 = vst.msk [vmem:[#allocation3 + $0x70] sm:$0xf] %vm3647, %v3604
      %3675 = vst.msk [vmem:[#allocation3 + $0x74] sm:$0xf] %vm3647, %v3606
      %3676 = vst.msk [vmem:[#allocation3 + $0x78] sm:$0xf] %vm3647, %v3608
      %3677 = vst.msk [vmem:[#allocation3 + $0x7c] sm:$0xf] %vm3647, %v3610
      %3678 = vst.msk [vmem:[#allocation3 + $0x80] sm:$0xf] %vm3647, %v3612
      %3679 = vst.msk [vmem:[#allocation3 + $0x84] sm:$0xf] %vm3647, %v3614
      %v3680 = vld [vmem:[#allocation3] sm:$0xf]
      %v3681 = vld [vmem:[#allocation3 + $0x4] sm:$0xf]
      %v3682 = vld [vmem:[#allocation3 + $0x8] sm:$0xf]
      %v3683 = vld [vmem:[#allocation3 + $0xc] sm:$0xf]
      %v3684 = vld [vmem:[#allocation3 + $0x10] sm:$0xf]
      %v3685 = vld [vmem:[#allocation3 + $0x14] sm:$0xf]
      %v3686 = vld [vmem:[#allocation3 + $0x18] sm:$0xf]
      %v3687 = vld [vmem:[#allocation3 + $0x1c] sm:$0xf]
      %v3688 = vld [vmem:[#allocation3 + $0x20] sm:$0xf]
      %v3689 = vld [vmem:[#allocation3 + $0x24] sm:$0xf]
      %v3690 = vld [vmem:[#allocation3 + $0x28] sm:$0xf]
      %v3691 = vld [vmem:[#allocation3 + $0x2c] sm:$0xf]
      %v3692 = vld [vmem:[#allocation3 + $0x30] sm:$0xf]
      %v3693 = vld [vmem:[#allocation3 + $0x34] sm:$0xf]
      %v3694 = vld [vmem:[#allocation3 + $0x38] sm:$0xf]
      %v3695 = vld [vmem:[#allocation3 + $0x3c] sm:$0xf]
      %v3696 = vld [vmem:[#allocation3 + $0x40] sm:$0xf]
      %v3697 = vld [vmem:[#allocation3 + $0x44] sm:$0xf]
      %v3698 = vld [vmem:[#allocation3 + $0x48] sm:$0xf]
      %v3699 = vld [vmem:[#allocation3 + $0x4c] sm:$0xf]
      %v3700 = vld [vmem:[#allocation3 + $0x50] sm:$0xf]
      %v3701 = vld [vmem:[#allocation3 + $0x54] sm:$0xf]
      %v3702 = vld [vmem:[#allocation3 + $0x58] sm:$0xf]
      %v3703 = vld [vmem:[#allocation3 + $0x5c] sm:$0xf]
      %v3704 = vld [vmem:[#allocation3 + $0x60] sm:$0xf]
      %v3705 = vld [vmem:[#allocation3 + $0x64] sm:$0xf]
      %v3706 = vld [vmem:[#allocation3 + $0x68] sm:$0xf]
      %v3707 = vld [vmem:[#allocation3 + $0x6c] sm:$0xf]
      %v3708 = vld [vmem:[#allocation3 + $0x70] sm:$0xf]
      %v3709 = vld [vmem:[#allocation3 + $0x74] sm:$0xf]
      %v3710 = vld [vmem:[#allocation3 + $0x78] sm:$0xf]
      %v3711 = vld [vmem:[#allocation3 + $0x7c] sm:$0xf]
      %v3712 = vld [vmem:[%s6] sm:$0xf]
      %v3713 = vld [vmem:[%s6 + $0x4] sm:$0xf]
      %v3714 = vld [vmem:[%s6 + $0x8] sm:$0xf]
      %v3715 = vld [vmem:[%s6 + $0xc] sm:$0xf]
      %v3716 = vld [vmem:[%s6 + $0x10] sm:$0xf]
      %v3717 = vld [vmem:[%s6 + $0x14] sm:$0xf]
      %v3718 = vld [vmem:[#allocation3 + $0x80] sm:$0xf]
      %v3719 = vld [vmem:[#allocation3 + $0x84] sm:$0xf]
      %s3720 = scalar_lea.vmem %s6, 24
      %v3721 = vld [vmem:[%s3720] sm:$0xf]
      %v3722 = vld [vmem:[%s3720 + $0x4] sm:$0xf]
      %v3723 = vld [vmem:[%s3720 + $0x8] sm:$0xf]
      %v3724 = vld [vmem:[%s3720 + $0xc] sm:$0xf]
      %v3725 = vld [vmem:[%s3720 + $0x10] sm:$0xf]
      %v3726 = vld [vmem:[%s3720 + $0x14] sm:$0xf]
      %v3759 = vunpack.c.l.b16 %v3682
      %v3760 = vunpack.c.l.b16 %v3683
      %v3761 = vunpack.c.l.b16 %v3684
      %v3762 = vunpack.c.l.b16 %v3685
      %v3763 = vunpack.c.l.b16 %v3686
      %v3764 = vunpack.c.l.b16 %v3687
      %v3765 = vunpack.c.l.b16 %v3688
      %v3766 = vunpack.c.l.b16 %v3689
      %v3767 = vunpack.c.l.b16 %v3690
      %v3768 = vunpack.c.l.b16 %v3691
      %v3769 = vunpack.c.l.b16 %v3692
      %v3770 = vunpack.c.l.b16 %v3693
      %v3771 = vunpack.c.l.b16 %v3694
      %v3772 = vunpack.c.l.b16 %v3695
      %v3773 = vunpack.c.l.b16 %v3696
      %v3774 = vunpack.c.l.b16 %v3697
      %v3775 = vunpack.c.l.b16 %v3698
      %v3776 = vunpack.c.l.b16 %v3699
      %v3777 = vunpack.c.l.b16 %v3700
      %v3778 = vunpack.c.l.b16 %v3701
      %v3779 = vunpack.c.l.b16 %v3702
      %v3780 = vunpack.c.l.b16 %v3703
      %v3781 = vunpack.c.l.b16 %v3704
      %v3782 = vunpack.c.l.b16 %v3705
      %v3783 = vunpack.c.l.b16 %v3706
      %v3784 = vunpack.c.l.b16 %v3707
      %v3785 = vunpack.c.l.b16 %v3708
      %v3786 = vunpack.c.l.b16 %v3709
      %v3787 = vunpack.c.l.b16 %v3710
      %v3788 = vunpack.c.l.b16 %v3711
      %v3789 = vunpack.c.l.b16 %v3718
      %v3790 = vunpack.c.l.b16 %v3719
      %v3791 = vpack.c.b16 %v3760, %v3759
      %v3792 = vpack.c.b16 %v3762, %v3761
      %v3793 = vpack.c.b16 %v3764, %v3763
      %v3794 = vpack.c.b16 %v3766, %v3765
      %v3795 = vpack.c.b16 %v3768, %v3767
      %v3796 = vpack.c.b16 %v3770, %v3769
      %v3797 = vpack.c.b16 %v3772, %v3771
      %v3798 = vpack.c.b16 %v3774, %v3773
      %v3799 = vpack.c.b16 %v3776, %v3775
      %v3800 = vpack.c.b16 %v3778, %v3777
      %v3801 = vpack.c.b16 %v3780, %v3779
      %v3802 = vpack.c.b16 %v3782, %v3781
      %v3803 = vpack.c.b16 %v3784, %v3783
      %v3804 = vpack.c.b16 %v3786, %v3785
      %v3805 = vpack.c.b16 %v3788, %v3787
      %v3806 = vpack.c.b16 %v3790, %v3789
      %v3813 = vunpack.c.l.b16 %v3721
      %v3814 = vunpack.c.l.b16 %v3722
      %v3815 = vunpack.c.l.b16 %v3723
      %v3816 = vunpack.c.l.b16 %v3724
      %v3817 = vunpack.c.l.b16 %v3725
      %v3818 = vunpack.c.l.b16 %v3726
      %v3819 = vpack.c.b16 %v3814, %v3813
      %v3820 = vpack.c.b16 %v3816, %v3815
      %v3821 = vpack.c.b16 %v3818, %v3817
      %vm3825 = vcmask 392192
      %v3827 = vsel %vm3825, %v3791, 0
      %v3830 = vsel %vm3825, %v3792, 0
      %v3833 = vsel %vm3825, %v3793, 0
      %v3836 = vsel %vm3825, %v3794, 0
      %v3839 = vsel %vm3825, %v3795, 0
      %v3842 = vsel %vm3825, %v3796, 0
      %v3845 = vsel %vm3825, %v3797, 0
      %v3848 = vsel %vm3825, %v3798, 0
      %v3851 = vsel %vm3825, %v3799, 0
      %v3854 = vsel %vm3825, %v3800, 0
      %v3857 = vsel %vm3825, %v3801, 0
      %v3860 = vsel %vm3825, %v3802, 0
      %v3863 = vsel %vm3825, %v3803, 0
      %v3866 = vsel %vm3825, %v3804, 0
      %v3869 = vsel %vm3825, %v3805, 0
      %v3872 = vsel %vm3825, %v3806, 0
      %3874 = vmatprep.subr.bf16.mxu0 0
      %3875 = vmatpush1.bf16.msra.mxu0 0
      %3876 = vmatprep.subr.bf16.mxu0 0
      %3877 = vmatpush1.bf16.msra.mxu0 0
      %3878 = vmatprep.subr.bf16.mxu0 0
      %3879 = vmatpush1.bf16.msra.mxu0 0
      %3880 = vmatprep.subr.bf16.mxu0 0
      %3881 = vmatpush1.bf16.msra.mxu0 0
      %3882 = vmatprep.subr.bf16.mxu0 0
      %3883 = vmatpush1.bf16.msra.mxu0 0
      %3884 = vmatprep.subr.bf16.mxu0 0
      %3885 = vmatpush1.bf16.msra.mxu0 %v3821
      %3886 = vmatprep.subr.bf16.mxu0 0
      %3887 = vmatpush1.bf16.msra.mxu0 %v3820
      %3888 = vmatprep.subr.bf16.mxu0 0
      %3889 = vmatpush1.bf16.msra.mxu0 %v3819
      %3890 = vmatprep.subr.bf16.mxu0 0
      %3891 = vmatpush2.bf16.msra.mxu0 0
      %3892 = vmatprep.subr.bf16.mxu0 0
      %3893 = vmatpush2.bf16.msra.mxu0 0
      %3894 = vmatprep.subr.bf16.mxu0 0
      %3895 = vmatpush2.bf16.msra.mxu0 0
      %3896 = vmatprep.subr.bf16.mxu0 0
      %3897 = vmatpush2.bf16.msra.mxu0 0
      %3898 = vmatprep.subr.bf16.mxu0 0
      %3899 = vmatpush2.bf16.msra.mxu0 0
      %3900 = vmatprep.subr.bf16.mxu0 0
      %3901 = vmatpush2.bf16.msra.mxu0 0
      %3902 = vmatprep.subr.bf16.mxu0 0
      %3903 = vmatpush2.bf16.msra.mxu0 0
      %3904 = vmatprep.subr.bf16.mxu0 0
      %3905 = vmatpush2.bf16.msra.mxu0 0
      %3906 = vmatprep.mubr.bf16.mxu0 0
      %3907 = vmatmul.mubr.bf16.gmra.mxu0 %v3827
      %v3908 = vpop.f32.mrf.mxu0
      %v3909 = vadd.f32 0.0, %v3908
      %v3910 = vpop.f32.mrf.mxu0
      %v3911 = vpop.f32.mrf.mxu0
      %v3912 = vadd.f32 0.0, %v3911
      %v3913 = vpop.f32.mrf.mxu0
      %3914 = vmatprep.mubr.bf16.mxu0 0
      %3915 = vmatmul.mubr.bf16.gmra.mxu0 %v3830
      %v3916 = vpop.f32.mrf.mxu0
      %v3917 = vadd.f32 0.0, %v3916
      %v3918 = vpop.f32.mrf.mxu0
      %v3919 = vpop.f32.mrf.mxu0
      %v3920 = vadd.f32 0.0, %v3919
      %v3921 = vpop.f32.mrf.mxu0
      %3922 = vmatprep.mubr.bf16.mxu0 0
      %3923 = vmatmul.mubr.bf16.gmra.mxu0 %v3833
      %v3924 = vpop.f32.mrf.mxu0
      %v3925 = vadd.f32 0.0, %v3924
      %v3926 = vpop.f32.mrf.mxu0
      %v3927 = vpop.f32.mrf.mxu0
      %v3928 = vadd.f32 0.0, %v3927
      %v3929 = vpop.f32.mrf.mxu0
      %3930 = vmatprep.mubr.bf16.mxu0 0
      %3931 = vmatmul.mubr.bf16.gmra.mxu0 %v3836
      %v3932 = vpop.f32.mrf.mxu0
      %v3933 = vadd.f32 0.0, %v3932
      %v3934 = vpop.f32.mrf.mxu0
      %v3935 = vpop.f32.mrf.mxu0
      %v3936 = vadd.f32 0.0, %v3935
      %v3937 = vpop.f32.mrf.mxu0
      %3938 = vmatprep.mubr.bf16.mxu0 0
      %3939 = vmatmul.mubr.bf16.gmra.mxu0 %v3839
      %v3940 = vpop.f32.mrf.mxu0
      %v3941 = vadd.f32 0.0, %v3940
      %v3942 = vpop.f32.mrf.mxu0
      %v3943 = vpop.f32.mrf.mxu0
      %v3944 = vadd.f32 0.0, %v3943
      %v3945 = vpop.f32.mrf.mxu0
      %3946 = vmatprep.mubr.bf16.mxu0 0
      %3947 = vmatmul.mubr.bf16.gmra.mxu0 %v3842
      %v3948 = vpop.f32.mrf.mxu0
      %v3949 = vadd.f32 0.0, %v3948
      %v3950 = vpop.f32.mrf.mxu0
      %v3951 = vpop.f32.mrf.mxu0
      %v3952 = vadd.f32 0.0, %v3951
      %v3953 = vpop.f32.mrf.mxu0
      %3954 = vmatprep.mubr.bf16.mxu0 0
      %3955 = vmatmul.mubr.bf16.gmra.mxu0 %v3845
      %v3956 = vpop.f32.mrf.mxu0
      %v3957 = vadd.f32 0.0, %v3956
      %v3958 = vpop.f32.mrf.mxu0
      %v3959 = vpop.f32.mrf.mxu0
      %v3960 = vadd.f32 0.0, %v3959
      %v3961 = vpop.f32.mrf.mxu0
      %3962 = vmatprep.mubr.bf16.mxu0 0
      %3963 = vmatmul.mubr.bf16.gmra.mxu0 %v3848
      %v3964 = vpop.f32.mrf.mxu0
      %v3965 = vadd.f32 0.0, %v3964
      %v3966 = vpop.f32.mrf.mxu0
      %v3967 = vpop.f32.mrf.mxu0
      %v3968 = vadd.f32 0.0, %v3967
      %v3969 = vpop.f32.mrf.mxu0
      %3970 = vmatprep.mubr.bf16.mxu0 0
      %3971 = vmatmul.mubr.bf16.gmra.mxu0 %v3851
      %v3972 = vpop.f32.mrf.mxu0
      %v3973 = vadd.f32 0.0, %v3972
      %v3974 = vpop.f32.mrf.mxu0
      %v3975 = vpop.f32.mrf.mxu0
      %v3976 = vadd.f32 0.0, %v3975
      %v3977 = vpop.f32.mrf.mxu0
      %3978 = vmatprep.mubr.bf16.mxu0 0
      %3979 = vmatmul.mubr.bf16.gmra.mxu0 %v3854
      %v3980 = vpop.f32.mrf.mxu0
      %v3981 = vadd.f32 0.0, %v3980
      %v3982 = vpop.f32.mrf.mxu0
      %v3983 = vpop.f32.mrf.mxu0
      %v3984 = vadd.f32 0.0, %v3983
      %v3985 = vpop.f32.mrf.mxu0
      %3986 = vmatprep.mubr.bf16.mxu0 0
      %3987 = vmatmul.mubr.bf16.gmra.mxu0 %v3857
      %v3988 = vpop.f32.mrf.mxu0
      %v3989 = vadd.f32 0.0, %v3988
      %v3990 = vpop.f32.mrf.mxu0
      %v3991 = vpop.f32.mrf.mxu0
      %v3992 = vadd.f32 0.0, %v3991
      %v3993 = vpop.f32.mrf.mxu0
      %3994 = vmatprep.mubr.bf16.mxu0 0
      %3995 = vmatmul.mubr.bf16.gmra.mxu0 %v3860
      %v3996 = vpop.f32.mrf.mxu0
      %v3997 = vadd.f32 0.0, %v3996
      %v3998 = vpop.f32.mrf.mxu0
      %v3999 = vpop.f32.mrf.mxu0
      %v4000 = vadd.f32 0.0, %v3999
      %v4001 = vpop.f32.mrf.mxu0
      %4002 = vmatprep.mubr.bf16.mxu0 0
      %4003 = vmatmul.mubr.bf16.gmra.mxu0 %v3863
      %v4004 = vpop.f32.mrf.mxu0
      %v4005 = vadd.f32 0.0, %v4004
      %v4006 = vpop.f32.mrf.mxu0
      %v4007 = vpop.f32.mrf.mxu0
      %v4008 = vadd.f32 0.0, %v4007
      %v4009 = vpop.f32.mrf.mxu0
      %4010 = vmatprep.mubr.bf16.mxu0 0
      %4011 = vmatmul.mubr.bf16.gmra.mxu0 %v3866
      %v4012 = vpop.f32.mrf.mxu0
      %v4013 = vadd.f32 0.0, %v4012
      %v4014 = vpop.f32.mrf.mxu0
      %v4015 = vpop.f32.mrf.mxu0
      %v4016 = vadd.f32 0.0, %v4015
      %v4017 = vpop.f32.mrf.mxu0
      %4018 = vmatprep.mubr.bf16.mxu0 0
      %4019 = vmatmul.mubr.bf16.gmra.mxu0 %v3869
      %v4020 = vpop.f32.mrf.mxu0
      %v4021 = vadd.f32 0.0, %v4020
      %v4022 = vpop.f32.mrf.mxu0
      %v4023 = vpop.f32.mrf.mxu0
      %v4024 = vadd.f32 0.0, %v4023
      %v4025 = vpop.f32.mrf.mxu0
      %4026 = vmatprep.mubr.bf16.mxu0 0
      %4027 = vmatmul.mubr.bf16.gmra.mxu0 %v3872
      %v4028 = vpop.f32.mrf.mxu0
      %v4029 = vadd.f32 0.0, %v4028
      %v4030 = vpop.f32.mrf.mxu0
      %v4031 = vpop.f32.mrf.mxu0
      %v4032 = vadd.f32 0.0, %v4031
      %v4033 = vpop.f32.mrf.mxu0
      %4034 = vdwg.mxu0
      %v4037 = vunpack.c.l.b16 %v3680
      %v4038 = vunpack.c.l.b16 %v3681
      %v4039 = vpack.c.b16 %v4038, %v4037
      %v4046 = vunpack.c.l.b16 %v3712
      %v4047 = vunpack.c.l.b16 %v3713
      %v4048 = vunpack.c.l.b16 %v3714
      %v4049 = vunpack.c.l.b16 %v3715
      %v4050 = vunpack.c.l.b16 %v3716
      %v4051 = vunpack.c.l.b16 %v3717
      %v4052 = vpack.c.b16 %v4047, %v4046
      %v4053 = vpack.c.b16 %v4049, %v4048
      %v4054 = vpack.c.b16 %v4051, %v4050
      %v4059 = vsel %vm3825, %v4039, 0
      %4061 = vmatprep.subr.bf16.mxu0 0
      %4062 = vmatpush1.bf16.msra.mxu0 0
      %4063 = vmatprep.subr.bf16.mxu0 0
      %4064 = vmatpush1.bf16.msra.mxu0 0
      %4065 = vmatprep.subr.bf16.mxu0 0
      %4066 = vmatpush1.bf16.msra.mxu0 0
      %4067 = vmatprep.subr.bf16.mxu0 0
      %4068 = vmatpush1.bf16.msra.mxu0 0
      %4069 = vmatprep.subr.bf16.mxu0 0
      %4070 = vmatpush1.bf16.msra.mxu0 0
      %4071 = vmatprep.subr.bf16.mxu0 0
      %4072 = vmatpush1.bf16.msra.mxu0 %v4054
      %4073 = vmatprep.subr.bf16.mxu0 0
      %4074 = vmatpush1.bf16.msra.mxu0 %v4053
      %4075 = vmatprep.subr.bf16.mxu0 0
      %4076 = vmatpush1.bf16.msra.mxu0 %v4052
      %4077 = vmatprep.subr.bf16.mxu0 0
      %4078 = vmatpush2.bf16.msra.mxu0 0
      %4079 = vmatprep.subr.bf16.mxu0 0
      %4080 = vmatpush2.bf16.msra.mxu0 0
      %4081 = vmatprep.subr.bf16.mxu0 0
      %4082 = vmatpush2.bf16.msra.mxu0 0
      %4083 = vmatprep.subr.bf16.mxu0 0
      %4084 = vmatpush2.bf16.msra.mxu0 0
      %4085 = vmatprep.subr.bf16.mxu0 0
      %4086 = vmatpush2.bf16.msra.mxu0 0
      %4087 = vmatprep.subr.bf16.mxu0 0
      %4088 = vmatpush2.bf16.msra.mxu0 0
      %4089 = vmatprep.subr.bf16.mxu0 0
      %4090 = vmatpush2.bf16.msra.mxu0 0
      %4091 = vmatprep.subr.bf16.mxu0 0
      %4092 = vmatpush2.bf16.msra.mxu0 0
      %4093 = vmatprep.mubr.bf16.mxu0 0
      %4094 = vmatmul.mubr.bf16.gmra.mxu0 %v4059
      %v4095 = vpop.f32.mrf.mxu0
      %v4096 = vadd.f32 %v3909, %v4095
      %v4097 = vpop.f32.mrf.mxu0
      %v4098 = vpop.f32.mrf.mxu0
      %v4099 = vadd.f32 %v3912, %v4098
      %v4100 = vpop.f32.mrf.mxu0
      %4101 = vmatprep.mubr.bf16.mxu0 0
      %4102 = vmatmul.mubr.bf16.gmra.mxu0 %v3827
      %v4103 = vpop.f32.mrf.mxu0
      %v4104 = vadd.f32 %v3917, %v4103
      %v4105 = vpop.f32.mrf.mxu0
      %v4106 = vpop.f32.mrf.mxu0
      %v4107 = vadd.f32 %v3920, %v4106
      %v4108 = vpop.f32.mrf.mxu0
      %4109 = vmatprep.mubr.bf16.mxu0 0
      %4110 = vmatmul.mubr.bf16.gmra.mxu0 %v3830
      %v4111 = vpop.f32.mrf.mxu0
      %v4112 = vadd.f32 %v3925, %v4111
      %v4113 = vpop.f32.mrf.mxu0
      %v4114 = vpop.f32.mrf.mxu0
      %v4115 = vadd.f32 %v3928, %v4114
      %v4116 = vpop.f32.mrf.mxu0
      %4117 = vmatprep.mubr.bf16.mxu0 0
      %4118 = vmatmul.mubr.bf16.gmra.mxu0 %v3833
      %v4119 = vpop.f32.mrf.mxu0
      %v4120 = vadd.f32 %v3933, %v4119
      %v4121 = vpop.f32.mrf.mxu0
      %v4122 = vpop.f32.mrf.mxu0
      %v4123 = vadd.f32 %v3936, %v4122
      %v4124 = vpop.f32.mrf.mxu0
      %4125 = vmatprep.mubr.bf16.mxu0 0
      %4126 = vmatmul.mubr.bf16.gmra.mxu0 %v3836
      %v4127 = vpop.f32.mrf.mxu0
      %v4128 = vadd.f32 %v3941, %v4127
      %v4129 = vpop.f32.mrf.mxu0
      %v4130 = vpop.f32.mrf.mxu0
      %v4131 = vadd.f32 %v3944, %v4130
      %v4132 = vpop.f32.mrf.mxu0
      %4133 = vmatprep.mubr.bf16.mxu0 0
      %4134 = vmatmul.mubr.bf16.gmra.mxu0 %v3839
      %v4135 = vpop.f32.mrf.mxu0
      %v4136 = vadd.f32 %v3949, %v4135
      %v4137 = vpop.f32.mrf.mxu0
      %v4138 = vpop.f32.mrf.mxu0
      %v4139 = vadd.f32 %v3952, %v4138
      %v4140 = vpop.f32.mrf.mxu0
      %4141 = vmatprep.mubr.bf16.mxu0 0
      %4142 = vmatmul.mubr.bf16.gmra.mxu0 %v3842
      %v4143 = vpop.f32.mrf.mxu0
      %v4144 = vadd.f32 %v3957, %v4143
      %v4145 = vpop.f32.mrf.mxu0
      %v4146 = vpop.f32.mrf.mxu0
      %v4147 = vadd.f32 %v3960, %v4146
      %v4148 = vpop.f32.mrf.mxu0
      %4149 = vmatprep.mubr.bf16.mxu0 0
      %4150 = vmatmul.mubr.bf16.gmra.mxu0 %v3845
      %v4151 = vpop.f32.mrf.mxu0
      %v4152 = vadd.f32 %v3965, %v4151
      %v4153 = vpop.f32.mrf.mxu0
      %v4154 = vpop.f32.mrf.mxu0
      %v4155 = vadd.f32 %v3968, %v4154
      %v4156 = vpop.f32.mrf.mxu0
      %4157 = vmatprep.mubr.bf16.mxu0 0
      %4158 = vmatmul.mubr.bf16.gmra.mxu0 %v3848
      %v4159 = vpop.f32.mrf.mxu0
      %v4160 = vadd.f32 %v3973, %v4159
      %v4161 = vpop.f32.mrf.mxu0
      %v4162 = vpop.f32.mrf.mxu0
      %v4163 = vadd.f32 %v3976, %v4162
      %v4164 = vpop.f32.mrf.mxu0
      %4165 = vmatprep.mubr.bf16.mxu0 0
      %4166 = vmatmul.mubr.bf16.gmra.mxu0 %v3851
      %v4167 = vpop.f32.mrf.mxu0
      %v4168 = vadd.f32 %v3981, %v4167
      %v4169 = vpop.f32.mrf.mxu0
      %v4170 = vpop.f32.mrf.mxu0
      %v4171 = vadd.f32 %v3984, %v4170
      %v4172 = vpop.f32.mrf.mxu0
      %4173 = vmatprep.mubr.bf16.mxu0 0
      %4174 = vmatmul.mubr.bf16.gmra.mxu0 %v3854
      %v4175 = vpop.f32.mrf.mxu0
      %v4176 = vadd.f32 %v3989, %v4175
      %v4177 = vpop.f32.mrf.mxu0
      %v4178 = vpop.f32.mrf.mxu0
      %v4179 = vadd.f32 %v3992, %v4178
      %v4180 = vpop.f32.mrf.mxu0
      %4181 = vmatprep.mubr.bf16.mxu0 0
      %4182 = vmatmul.mubr.bf16.gmra.mxu0 %v3857
      %v4183 = vpop.f32.mrf.mxu0
      %v4184 = vadd.f32 %v3997, %v4183
      %v4185 = vpop.f32.mrf.mxu0
      %v4186 = vpop.f32.mrf.mxu0
      %v4187 = vadd.f32 %v4000, %v4186
      %v4188 = vpop.f32.mrf.mxu0
      %4189 = vmatprep.mubr.bf16.mxu0 0
      %4190 = vmatmul.mubr.bf16.gmra.mxu0 %v3860
      %v4191 = vpop.f32.mrf.mxu0
      %v4192 = vadd.f32 %v4005, %v4191
      %v4193 = vpop.f32.mrf.mxu0
      %v4194 = vpop.f32.mrf.mxu0
      %v4195 = vadd.f32 %v4008, %v4194
      %v4196 = vpop.f32.mrf.mxu0
      %4197 = vmatprep.mubr.bf16.mxu0 0
      %4198 = vmatmul.mubr.bf16.gmra.mxu0 %v3863
      %v4199 = vpop.f32.mrf.mxu0
      %v4200 = vadd.f32 %v4013, %v4199
      %v4201 = vpop.f32.mrf.mxu0
      %v4202 = vpop.f32.mrf.mxu0
      %v4203 = vadd.f32 %v4016, %v4202
      %v4204 = vpop.f32.mrf.mxu0
      %4205 = vmatprep.mubr.bf16.mxu0 0
      %4206 = vmatmul.mubr.bf16.gmra.mxu0 %v3866
      %v4207 = vpop.f32.mrf.mxu0
      %v4208 = vadd.f32 %v4021, %v4207
      %v4209 = vpop.f32.mrf.mxu0
      %v4210 = vpop.f32.mrf.mxu0
      %v4211 = vadd.f32 %v4024, %v4210
      %v4212 = vpop.f32.mrf.mxu0
      %4213 = vmatprep.mubr.bf16.mxu0 0
      %4214 = vmatmul.mubr.bf16.gmra.mxu0 %v3869
      %v4215 = vpop.f32.mrf.mxu0
      %v4216 = vadd.f32 %v4029, %v4215
      %v4217 = vpop.f32.mrf.mxu0
      %v4218 = vpop.f32.mrf.mxu0
      %v4219 = vadd.f32 %v4032, %v4218
      %v4220 = vpop.f32.mrf.mxu0
      %4221 = vdwg.mxu0
      %v4222 = vld [vmem:[#allocation3 + $0x10] sm:$0xf]
      %v4223 = vld [vmem:[#allocation3 + $0x14] sm:$0xf]
      %v4224 = vld [vmem:[#allocation3 + $0x18] sm:$0xf]
      %v4225 = vld [vmem:[#allocation3 + $0x1c] sm:$0xf]
      %v4226 = vld [vmem:[#allocation3 + $0x20] sm:$0xf]
      %v4227 = vld [vmem:[#allocation3 + $0x24] sm:$0xf]
      %v4228 = vld [vmem:[#allocation3 + $0x28] sm:$0xf]
      %v4229 = vld [vmem:[#allocation3 + $0x2c] sm:$0xf]
      %v4230 = vld [vmem:[#allocation3 + $0x30] sm:$0xf]
      %v4231 = vld [vmem:[#allocation3 + $0x34] sm:$0xf]
      %v4232 = vld [vmem:[#allocation3 + $0x38] sm:$0xf]
      %v4233 = vld [vmem:[#allocation3 + $0x3c] sm:$0xf]
      %v4234 = vld [vmem:[#allocation3 + $0x40] sm:$0xf]
      %v4235 = vld [vmem:[#allocation3 + $0x44] sm:$0xf]
      %v4236 = vld [vmem:[#allocation3 + $0x48] sm:$0xf]
      %v4237 = vld [vmem:[#allocation3 + $0x4c] sm:$0xf]
      %v4238 = vld [vmem:[#allocation3 + $0x50] sm:$0xf]
      %v4239 = vld [vmem:[#allocation3 + $0x54] sm:$0xf]
      %v4240 = vld [vmem:[#allocation3 + $0x58] sm:$0xf]
      %v4241 = vld [vmem:[#allocation3 + $0x5c] sm:$0xf]
      %v4242 = vld [vmem:[#allocation3 + $0x60] sm:$0xf]
      %v4243 = vld [vmem:[#allocation3 + $0x64] sm:$0xf]
      %v4244 = vld [vmem:[#allocation3 + $0x68] sm:$0xf]
      %v4245 = vld [vmem:[#allocation3 + $0x6c] sm:$0xf]
      %v4246 = vld [vmem:[#allocation3 + $0x70] sm:$0xf]
      %v4247 = vld [vmem:[#allocation3 + $0x74] sm:$0xf]
      %v4248 = vld [vmem:[#allocation3 + $0x78] sm:$0xf]
      %v4249 = vld [vmem:[#allocation3 + $0x7c] sm:$0xf]
      %v4250 = vld [vmem:[#allocation3 + $0x80] sm:$0xf]
      %v4251 = vld [vmem:[#allocation3 + $0x84] sm:$0xf]
      %v4252 = vld [vmem:[#allocation3 + $0x88] sm:$0xf]
      %v4253 = vld [vmem:[#allocation3 + $0x8c] sm:$0xf]
      %s4254 = scalar_lea.vmem %s6, 48
      %v4255 = vld [vmem:[%s4254] sm:$0xf]
      %v4256 = vld [vmem:[%s4254 + $0x4] sm:$0xf]
      %v4257 = vld [vmem:[%s4254 + $0x8] sm:$0xf]
      %v4258 = vld [vmem:[%s4254 + $0xc] sm:$0xf]
      %v4259 = vld [vmem:[%s4254 + $0x10] sm:$0xf]
      %v4260 = vld [vmem:[%s4254 + $0x14] sm:$0xf]
      %v4293 = vunpack.c.l.b16 %v4222
      %v4294 = vunpack.c.l.b16 %v4223
      %v4295 = vunpack.c.l.b16 %v4224
      %v4296 = vunpack.c.l.b16 %v4225
      %v4297 = vunpack.c.l.b16 %v4226
      %v4298 = vunpack.c.l.b16 %v4227
      %v4299 = vunpack.c.l.b16 %v4228
      %v4300 = vunpack.c.l.b16 %v4229
      %v4301 = vunpack.c.l.b16 %v4230
      %v4302 = vunpack.c.l.b16 %v4231
      %v4303 = vunpack.c.l.b16 %v4232
      %v4304 = vunpack.c.l.b16 %v4233
      %v4305 = vunpack.c.l.b16 %v4234
      %v4306 = vunpack.c.l.b16 %v4235
      %v4307 = vunpack.c.l.b16 %v4236
      %v4308 = vunpack.c.l.b16 %v4237
      %v4309 = vunpack.c.l.b16 %v4238
      %v4310 = vunpack.c.l.b16 %v4239
      %v4311 = vunpack.c.l.b16 %v4240
      %v4312 = vunpack.c.l.b16 %v4241
      %v4313 = vunpack.c.l.b16 %v4242
      %v4314 = vunpack.c.l.b16 %v4243
      %v4315 = vunpack.c.l.b16 %v4244
      %v4316 = vunpack.c.l.b16 %v4245
      %v4317 = vunpack.c.l.b16 %v4246
      %v4318 = vunpack.c.l.b16 %v4247
      %v4319 = vunpack.c.l.b16 %v4248
      %v4320 = vunpack.c.l.b16 %v4249
      %v4321 = vunpack.c.l.b16 %v4250
      %v4322 = vunpack.c.l.b16 %v4251
      %v4323 = vunpack.c.l.b16 %v4252
      %v4324 = vunpack.c.l.b16 %v4253
      %v4325 = vpack.c.b16 %v4294, %v4293
      %v4326 = vpack.c.b16 %v4296, %v4295
      %v4327 = vpack.c.b16 %v4298, %v4297
      %v4328 = vpack.c.b16 %v4300, %v4299
      %v4329 = vpack.c.b16 %v4302, %v4301
      %v4330 = vpack.c.b16 %v4304, %v4303
      %v4331 = vpack.c.b16 %v4306, %v4305
      %v4332 = vpack.c.b16 %v4308, %v4307
      %v4333 = vpack.c.b16 %v4310, %v4309
      %v4334 = vpack.c.b16 %v4312, %v4311
      %v4335 = vpack.c.b16 %v4314, %v4313
      %v4336 = vpack.c.b16 %v4316, %v4315
      %v4337 = vpack.c.b16 %v4318, %v4317
      %v4338 = vpack.c.b16 %v4320, %v4319
      %v4339 = vpack.c.b16 %v4322, %v4321
      %v4340 = vpack.c.b16 %v4324, %v4323
      %v4347 = vunpack.c.l.b16 %v4255
      %v4348 = vunpack.c.l.b16 %v4256
      %v4349 = vunpack.c.l.b16 %v4257
      %v4350 = vunpack.c.l.b16 %v4258
      %v4351 = vunpack.c.l.b16 %v4259
      %v4352 = vunpack.c.l.b16 %v4260
      %v4353 = vpack.c.b16 %v4348, %v4347
      %v4354 = vpack.c.b16 %v4350, %v4349
      %v4355 = vpack.c.b16 %v4352, %v4351
      %v4360 = vsel %vm3825, %v4325, 0
      %v4363 = vsel %vm3825, %v4326, 0
      %v4366 = vsel %vm3825, %v4327, 0
      %v4369 = vsel %vm3825, %v4328, 0
      %v4372 = vsel %vm3825, %v4329, 0
      %v4375 = vsel %vm3825, %v4330, 0
      %v4378 = vsel %vm3825, %v4331, 0
      %v4381 = vsel %vm3825, %v4332, 0
      %v4384 = vsel %vm3825, %v4333, 0
      %v4387 = vsel %vm3825, %v4334, 0
      %v4390 = vsel %vm3825, %v4335, 0
      %v4393 = vsel %vm3825, %v4336, 0
      %v4396 = vsel %vm3825, %v4337, 0
      %v4399 = vsel %vm3825, %v4338, 0
      %v4402 = vsel %vm3825, %v4339, 0
      %v4405 = vsel %vm3825, %v4340, 0
      %4407 = vmatprep.subr.bf16.mxu0 0
      %4408 = vmatpush1.bf16.msra.mxu0 0
      %4409 = vmatprep.subr.bf16.mxu0 0
      %4410 = vmatpush1.bf16.msra.mxu0 0
      %4411 = vmatprep.subr.bf16.mxu0 0
      %4412 = vmatpush1.bf16.msra.mxu0 0
      %4413 = vmatprep.subr.bf16.mxu0 0
      %4414 = vmatpush1.bf16.msra.mxu0 0
      %4415 = vmatprep.subr.bf16.mxu0 0
      %4416 = vmatpush1.bf16.msra.mxu0 0
      %4417 = vmatprep.subr.bf16.mxu0 0
      %4418 = vmatpush1.bf16.msra.mxu0 %v4355
      %4419 = vmatprep.subr.bf16.mxu0 0
      %4420 = vmatpush1.bf16.msra.mxu0 %v4354
      %4421 = vmatprep.subr.bf16.mxu0 0
      %4422 = vmatpush1.bf16.msra.mxu0 %v4353
      %4423 = vmatprep.subr.bf16.mxu0 0
      %4424 = vmatpush2.bf16.msra.mxu0 0
      %4425 = vmatprep.subr.bf16.mxu0 0
      %4426 = vmatpush2.bf16.msra.mxu0 0
      %4427 = vmatprep.subr.bf16.mxu0 0
      %4428 = vmatpush2.bf16.msra.mxu0 0
      %4429 = vmatprep.subr.bf16.mxu0 0
      %4430 = vmatpush2.bf16.msra.mxu0 0
      %4431 = vmatprep.subr.bf16.mxu0 0
      %4432 = vmatpush2.bf16.msra.mxu0 0
      %4433 = vmatprep.subr.bf16.mxu0 0
      %4434 = vmatpush2.bf16.msra.mxu0 0
      %4435 = vmatprep.subr.bf16.mxu0 0
      %4436 = vmatpush2.bf16.msra.mxu0 0
      %4437 = vmatprep.subr.bf16.mxu0 0
      %4438 = vmatpush2.bf16.msra.mxu0 0
      %4439 = vmatprep.mubr.bf16.mxu0 0
      %4440 = vmatmul.mubr.bf16.gmra.mxu0 %v4360
      %v4441 = vpop.f32.mrf.mxu0
      %v4442 = vadd.f32 0.0, %v4441
      %v4443 = vpop.f32.mrf.mxu0
      %v4444 = vpop.f32.mrf.mxu0
      %v4445 = vadd.f32 0.0, %v4444
      %v4446 = vpop.f32.mrf.mxu0
      %4447 = vmatprep.mubr.bf16.mxu0 0
      %4448 = vmatmul.mubr.bf16.gmra.mxu0 %v4363
      %v4449 = vpop.f32.mrf.mxu0
      %v4450 = vadd.f32 0.0, %v4449
      %v4451 = vpop.f32.mrf.mxu0
      %v4452 = vpop.f32.mrf.mxu0
      %v4453 = vadd.f32 0.0, %v4452
      %v4454 = vpop.f32.mrf.mxu0
      %4455 = vmatprep.mubr.bf16.mxu0 0
      %4456 = vmatmul.mubr.bf16.gmra.mxu0 %v4366
      %v4457 = vpop.f32.mrf.mxu0
      %v4458 = vadd.f32 0.0, %v4457
      %v4459 = vpop.f32.mrf.mxu0
      %v4460 = vpop.f32.mrf.mxu0
      %v4461 = vadd.f32 0.0, %v4460
      %v4462 = vpop.f32.mrf.mxu0
      %4463 = vmatprep.mubr.bf16.mxu0 0
      %4464 = vmatmul.mubr.bf16.gmra.mxu0 %v4369
      %v4465 = vpop.f32.mrf.mxu0
      %v4466 = vadd.f32 0.0, %v4465
      %v4467 = vpop.f32.mrf.mxu0
      %v4468 = vpop.f32.mrf.mxu0
      %v4469 = vadd.f32 0.0, %v4468
      %v4470 = vpop.f32.mrf.mxu0
      %4471 = vmatprep.mubr.bf16.mxu0 0
      %4472 = vmatmul.mubr.bf16.gmra.mxu0 %v4372
      %v4473 = vpop.f32.mrf.mxu0
      %v4474 = vadd.f32 0.0, %v4473
      %v4475 = vpop.f32.mrf.mxu0
      %v4476 = vpop.f32.mrf.mxu0
      %v4477 = vadd.f32 0.0, %v4476
      %v4478 = vpop.f32.mrf.mxu0
      %4479 = vmatprep.mubr.bf16.mxu0 0
      %4480 = vmatmul.mubr.bf16.gmra.mxu0 %v4375
      %v4481 = vpop.f32.mrf.mxu0
      %v4482 = vadd.f32 0.0, %v4481
      %v4483 = vpop.f32.mrf.mxu0
      %v4484 = vpop.f32.mrf.mxu0
      %v4485 = vadd.f32 0.0, %v4484
      %v4486 = vpop.f32.mrf.mxu0
      %4487 = vmatprep.mubr.bf16.mxu0 0
      %4488 = vmatmul.mubr.bf16.gmra.mxu0 %v4378
      %v4489 = vpop.f32.mrf.mxu0
      %v4490 = vadd.f32 0.0, %v4489
      %v4491 = vpop.f32.mrf.mxu0
      %v4492 = vpop.f32.mrf.mxu0
      %v4493 = vadd.f32 0.0, %v4492
      %v4494 = vpop.f32.mrf.mxu0
      %4495 = vmatprep.mubr.bf16.mxu0 0
      %4496 = vmatmul.mubr.bf16.gmra.mxu0 %v4381
      %v4497 = vpop.f32.mrf.mxu0
      %v4498 = vadd.f32 0.0, %v4497
      %v4499 = vpop.f32.mrf.mxu0
      %v4500 = vpop.f32.mrf.mxu0
      %v4501 = vadd.f32 0.0, %v4500
      %v4502 = vpop.f32.mrf.mxu0
      %4503 = vmatprep.mubr.bf16.mxu0 0
      %4504 = vmatmul.mubr.bf16.gmra.mxu0 %v4384
      %v4505 = vpop.f32.mrf.mxu0
      %v4506 = vadd.f32 0.0, %v4505
      %v4507 = vpop.f32.mrf.mxu0
      %v4508 = vpop.f32.mrf.mxu0
      %v4509 = vadd.f32 0.0, %v4508
      %v4510 = vpop.f32.mrf.mxu0
      %4511 = vmatprep.mubr.bf16.mxu0 0
      %4512 = vmatmul.mubr.bf16.gmra.mxu0 %v4387
      %v4513 = vpop.f32.mrf.mxu0
      %v4514 = vadd.f32 0.0, %v4513
      %v4515 = vpop.f32.mrf.mxu0
      %v4516 = vpop.f32.mrf.mxu0
      %v4517 = vadd.f32 0.0, %v4516
      %v4518 = vpop.f32.mrf.mxu0
      %4519 = vmatprep.mubr.bf16.mxu0 0
      %4520 = vmatmul.mubr.bf16.gmra.mxu0 %v4390
      %v4521 = vpop.f32.mrf.mxu0
      %v4522 = vadd.f32 0.0, %v4521
      %v4523 = vpop.f32.mrf.mxu0
      %v4524 = vpop.f32.mrf.mxu0
      %v4525 = vadd.f32 0.0, %v4524
      %v4526 = vpop.f32.mrf.mxu0
      %4527 = vmatprep.mubr.bf16.mxu0 0
      %4528 = vmatmul.mubr.bf16.gmra.mxu0 %v4393
      %v4529 = vpop.f32.mrf.mxu0
      %v4530 = vadd.f32 0.0, %v4529
      %v4531 = vpop.f32.mrf.mxu0
      %v4532 = vpop.f32.mrf.mxu0
      %v4533 = vadd.f32 0.0, %v4532
      %v4534 = vpop.f32.mrf.mxu0
      %4535 = vmatprep.mubr.bf16.mxu0 0
      %4536 = vmatmul.mubr.bf16.gmra.mxu0 %v4396
      %v4537 = vpop.f32.mrf.mxu0
      %v4538 = vadd.f32 0.0, %v4537
      %v4539 = vpop.f32.mrf.mxu0
      %v4540 = vpop.f32.mrf.mxu0
      %v4541 = vadd.f32 0.0, %v4540
      %v4542 = vpop.f32.mrf.mxu0
      %4543 = vmatprep.mubr.bf16.mxu0 0
      %4544 = vmatmul.mubr.bf16.gmra.mxu0 %v4399
      %v4545 = vpop.f32.mrf.mxu0
      %v4546 = vadd.f32 0.0, %v4545
      %v4547 = vpop.f32.mrf.mxu0
      %v4548 = vpop.f32.mrf.mxu0
      %v4549 = vadd.f32 0.0, %v4548
      %v4550 = vpop.f32.mrf.mxu0
      %4551 = vmatprep.mubr.bf16.mxu0 0
      %4552 = vmatmul.mubr.bf16.gmra.mxu0 %v4402
      %v4553 = vpop.f32.mrf.mxu0
      %v4554 = vadd.f32 0.0, %v4553
      %v4555 = vpop.f32.mrf.mxu0
      %v4556 = vpop.f32.mrf.mxu0
      %v4557 = vadd.f32 0.0, %v4556
      %v4558 = vpop.f32.mrf.mxu0
      %4559 = vmatprep.mubr.bf16.mxu0 0
      %4560 = vmatmul.mubr.bf16.gmra.mxu0 %v4405
      %v4561 = vpop.f32.mrf.mxu0
      %v4562 = vadd.f32 0.0, %v4561
      %v4563 = vpop.f32.mrf.mxu0
      %v4564 = vpop.f32.mrf.mxu0
      %v4565 = vadd.f32 0.0, %v4564
      %v4566 = vpop.f32.mrf.mxu0
      %4567 = vdwg.mxu0
      %v4568 = vadd.f32 %v4096, %v4442
      %v4569 = vadd.f32 %v4099, %v4445
      %v4570 = vadd.f32 %v4104, %v4450
      %v4571 = vadd.f32 %v4107, %v4453
      %v4572 = vadd.f32 %v4112, %v4458
      %v4573 = vadd.f32 %v4115, %v4461
      %v4574 = vadd.f32 %v4120, %v4466
      %v4575 = vadd.f32 %v4123, %v4469
      %v4576 = vadd.f32 %v4128, %v4474
      %v4577 = vadd.f32 %v4131, %v4477
      %v4578 = vadd.f32 %v4136, %v4482
      %v4579 = vadd.f32 %v4139, %v4485
      %v4580 = vadd.f32 %v4144, %v4490
      %v4581 = vadd.f32 %v4147, %v4493
      %v4582 = vadd.f32 %v4152, %v4498
      %v4583 = vadd.f32 %v4155, %v4501
      %v4584 = vadd.f32 %v4160, %v4506
      %v4585 = vadd.f32 %v4163, %v4509
      %v4586 = vadd.f32 %v4168, %v4514
      %v4587 = vadd.f32 %v4171, %v4517
      %v4588 = vadd.f32 %v4176, %v4522
      %v4589 = vadd.f32 %v4179, %v4525
      %v4590 = vadd.f32 %v4184, %v4530
      %v4591 = vadd.f32 %v4187, %v4533
      %v4592 = vadd.f32 %v4192, %v4538
      %v4593 = vadd.f32 %v4195, %v4541
      %v4594 = vadd.f32 %v4200, %v4546
      %v4595 = vadd.f32 %v4203, %v4549
      %v4596 = vadd.f32 %v4208, %v4554
      %v4597 = vadd.f32 %v4211, %v4557
      %v4598 = vadd.f32 %v4216, %v4562
      %v4599 = vadd.f32 %v4219, %v4565
      %v4600 = vld [vmem:[%s7] sm:$0xf]
      %vm4601 = vcmask 64512
      %v4603 = vsel %vm4601, %v1418, 0
      %v4606 = vsel %vm4601, %v1419, 0
      %v4609 = vsel %vm4601, %v1420, 0
      %v4612 = vsel %vm4601, %v1421, 0
      %v4615 = vsel %vm4601, %v1422, 0
      %v4618 = vsel %vm4601, %v1423, 0
      %v4621 = vsel %vm4601, %v1424, 0
      %v4624 = vsel %vm4601, %v1425, 0
      %v4627 = vsel %vm4601, %v1426, 0
      %v4630 = vsel %vm4601, %v1427, 0
      %v4633 = vsel %vm4601, %v1428, 0
      %v4636 = vsel %vm4601, %v1429, 0
      %v4639 = vsel %vm4601, %v1430, 0
      %v4642 = vsel %vm4601, %v1431, 0
      %v4645 = vsel %vm4601, %v1432, 0
      %v4648 = vsel %vm4601, %v1433, 0
      %v4651 = vsel %vm2047, %v4600, 0
      %4653 = vmatprep.subr.bf16.mxu0 0
      %4654 = vmatpush1.bf16.msra.mxu0 0
      %4655 = vmatprep.subr.bf16.mxu0 0
      %4656 = vmatpush1.bf16.msra.mxu0 0
      %4657 = vmatprep.subr.bf16.mxu0 0
      %4658 = vmatpush1.bf16.msra.mxu0 0
      %4659 = vmatprep.subr.bf16.mxu0 0
      %4660 = vmatpush1.bf16.msra.mxu0 0
      %4661 = vmatprep.subr.bf16.mxu0 0
      %4662 = vmatpush1.bf16.msra.mxu0 0
      %4663 = vmatprep.subr.bf16.mxu0 0
      %4664 = vmatpush1.bf16.msra.mxu0 0
      %4665 = vmatprep.subr.bf16.mxu0 0
      %4666 = vmatpush1.bf16.msra.mxu0 0
      %4667 = vmatprep.subr.bf16.mxu0 0
      %4668 = vmatpush1.bf16.msra.mxu0 %v4651
      %4669 = vmatprep.subr.bf16.mxu0 0
      %4670 = vmatpush2.bf16.msra.mxu0 0
      %4671 = vmatprep.subr.bf16.mxu0 0
      %4672 = vmatpush2.bf16.msra.mxu0 0
      %4673 = vmatprep.subr.bf16.mxu0 0
      %4674 = vmatpush2.bf16.msra.mxu0 0
      %4675 = vmatprep.subr.bf16.mxu0 0
      %4676 = vmatpush2.bf16.msra.mxu0 0
      %4677 = vmatprep.subr.bf16.mxu0 0
      %4678 = vmatpush2.bf16.msra.mxu0 0
      %4679 = vmatprep.subr.bf16.mxu0 0
      %4680 = vmatpush2.bf16.msra.mxu0 0
      %4681 = vmatprep.subr.bf16.mxu0 0
      %4682 = vmatpush2.bf16.msra.mxu0 0
      %4683 = vmatprep.subr.bf16.mxu0 0
      %4684 = vmatpush2.bf16.msra.mxu0 0
      %4685 = vmatprep.mubr.bf16.mxu0 0
      %4686 = vmatmul.mubr.bf16.gmra.mxu0 %v4603
      %v4687 = vpop.f32.mrf.mxu0
      %v4688 = vadd.f32 0.0, %v4687
      %v4689 = vpop.f32.mrf.mxu0
      %v4690 = vpop.f32.mrf.mxu0
      %v4691 = vadd.f32 0.0, %v4690
      %v4692 = vpop.f32.mrf.mxu0
      %4693 = vmatprep.mubr.bf16.mxu0 0
      %4694 = vmatmul.mubr.bf16.gmra.mxu0 %v4606
      %v4695 = vpop.f32.mrf.mxu0
      %v4696 = vadd.f32 0.0, %v4695
      %v4697 = vpop.f32.mrf.mxu0
      %v4698 = vpop.f32.mrf.mxu0
      %v4699 = vadd.f32 0.0, %v4698
      %v4700 = vpop.f32.mrf.mxu0
      %4701 = vmatprep.mubr.bf16.mxu0 0
      %4702 = vmatmul.mubr.bf16.gmra.mxu0 %v4609
      %v4703 = vpop.f32.mrf.mxu0
      %v4704 = vadd.f32 0.0, %v4703
      %v4705 = vpop.f32.mrf.mxu0
      %v4706 = vpop.f32.mrf.mxu0
      %v4707 = vadd.f32 0.0, %v4706
      %v4708 = vpop.f32.mrf.mxu0
      %4709 = vmatprep.mubr.bf16.mxu0 0
      %4710 = vmatmul.mubr.bf16.gmra.mxu0 %v4612
      %v4711 = vpop.f32.mrf.mxu0
      %v4712 = vadd.f32 0.0, %v4711
      %v4713 = vpop.f32.mrf.mxu0
      %v4714 = vpop.f32.mrf.mxu0
      %v4715 = vadd.f32 0.0, %v4714
      %v4716 = vpop.f32.mrf.mxu0
      %4717 = vmatprep.mubr.bf16.mxu0 0
      %4718 = vmatmul.mubr.bf16.gmra.mxu0 %v4615
      %v4719 = vpop.f32.mrf.mxu0
      %v4720 = vadd.f32 0.0, %v4719
      %v4721 = vpop.f32.mrf.mxu0
      %v4722 = vpop.f32.mrf.mxu0
      %v4723 = vadd.f32 0.0, %v4722
      %v4724 = vpop.f32.mrf.mxu0
      %4725 = vmatprep.mubr.bf16.mxu0 0
      %4726 = vmatmul.mubr.bf16.gmra.mxu0 %v4618
      %v4727 = vpop.f32.mrf.mxu0
      %v4728 = vadd.f32 0.0, %v4727
      %v4729 = vpop.f32.mrf.mxu0
      %v4730 = vpop.f32.mrf.mxu0
      %v4731 = vadd.f32 0.0, %v4730
      %v4732 = vpop.f32.mrf.mxu0
      %4733 = vmatprep.mubr.bf16.mxu0 0
      %4734 = vmatmul.mubr.bf16.gmra.mxu0 %v4621
      %v4735 = vpop.f32.mrf.mxu0
      %v4736 = vadd.f32 0.0, %v4735
      %v4737 = vpop.f32.mrf.mxu0
      %v4738 = vpop.f32.mrf.mxu0
      %v4739 = vadd.f32 0.0, %v4738
      %v4740 = vpop.f32.mrf.mxu0
      %4741 = vmatprep.mubr.bf16.mxu0 0
      %4742 = vmatmul.mubr.bf16.gmra.mxu0 %v4624
      %v4743 = vpop.f32.mrf.mxu0
      %v4744 = vadd.f32 0.0, %v4743
      %v4745 = vpop.f32.mrf.mxu0
      %v4746 = vpop.f32.mrf.mxu0
      %v4747 = vadd.f32 0.0, %v4746
      %v4748 = vpop.f32.mrf.mxu0
      %4749 = vmatprep.mubr.bf16.mxu0 0
      %4750 = vmatmul.mubr.bf16.gmra.mxu0 %v4627
      %v4751 = vpop.f32.mrf.mxu0
      %v4752 = vadd.f32 0.0, %v4751
      %v4753 = vpop.f32.mrf.mxu0
      %v4754 = vpop.f32.mrf.mxu0
      %v4755 = vadd.f32 0.0, %v4754
      %v4756 = vpop.f32.mrf.mxu0
      %4757 = vmatprep.mubr.bf16.mxu0 0
      %4758 = vmatmul.mubr.bf16.gmra.mxu0 %v4630
      %v4759 = vpop.f32.mrf.mxu0
      %v4760 = vadd.f32 0.0, %v4759
      %v4761 = vpop.f32.mrf.mxu0
      %v4762 = vpop.f32.mrf.mxu0
      %v4763 = vadd.f32 0.0, %v4762
      %v4764 = vpop.f32.mrf.mxu0
      %4765 = vmatprep.mubr.bf16.mxu0 0
      %4766 = vmatmul.mubr.bf16.gmra.mxu0 %v4633
      %v4767 = vpop.f32.mrf.mxu0
      %v4768 = vadd.f32 0.0, %v4767
      %v4769 = vpop.f32.mrf.mxu0
      %v4770 = vpop.f32.mrf.mxu0
      %v4771 = vadd.f32 0.0, %v4770
      %v4772 = vpop.f32.mrf.mxu0
      %4773 = vmatprep.mubr.bf16.mxu0 0
      %4774 = vmatmul.mubr.bf16.gmra.mxu0 %v4636
      %v4775 = vpop.f32.mrf.mxu0
      %v4776 = vadd.f32 0.0, %v4775
      %v4777 = vpop.f32.mrf.mxu0
      %v4778 = vpop.f32.mrf.mxu0
      %v4779 = vadd.f32 0.0, %v4778
      %v4780 = vpop.f32.mrf.mxu0
      %4781 = vmatprep.mubr.bf16.mxu0 0
      %4782 = vmatmul.mubr.bf16.gmra.mxu0 %v4639
      %v4783 = vpop.f32.mrf.mxu0
      %v4784 = vadd.f32 0.0, %v4783
      %v4785 = vpop.f32.mrf.mxu0
      %v4786 = vpop.f32.mrf.mxu0
      %v4787 = vadd.f32 0.0, %v4786
      %v4788 = vpop.f32.mrf.mxu0
      %4789 = vmatprep.mubr.bf16.mxu0 0
      %4790 = vmatmul.mubr.bf16.gmra.mxu0 %v4642
      %v4791 = vpop.f32.mrf.mxu0
      %v4792 = vadd.f32 0.0, %v4791
      %v4793 = vpop.f32.mrf.mxu0
      %v4794 = vpop.f32.mrf.mxu0
      %v4795 = vadd.f32 0.0, %v4794
      %v4796 = vpop.f32.mrf.mxu0
      %4797 = vmatprep.mubr.bf16.mxu0 0
      %4798 = vmatmul.mubr.bf16.gmra.mxu0 %v4645
      %v4799 = vpop.f32.mrf.mxu0
      %v4800 = vadd.f32 0.0, %v4799
      %v4801 = vpop.f32.mrf.mxu0
      %v4802 = vpop.f32.mrf.mxu0
      %v4803 = vadd.f32 0.0, %v4802
      %v4804 = vpop.f32.mrf.mxu0
      %4805 = vmatprep.mubr.bf16.mxu0 0
      %4806 = vmatmul.mubr.bf16.gmra.mxu0 %v4648
      %v4807 = vpop.f32.mrf.mxu0
      %v4808 = vadd.f32 0.0, %v4807
      %v4809 = vpop.f32.mrf.mxu0
      %v4810 = vpop.f32.mrf.mxu0
      %v4811 = vadd.f32 0.0, %v4810
      %v4812 = vpop.f32.mrf.mxu0
      %4813 = vdwg.mxu0
      %v4814 = vadd.f32 %v4568, %v4688
      %v4815 = vadd.f32 %v4569, %v4691
      %v4816 = vadd.f32 %v4570, %v4696
      %v4817 = vadd.f32 %v4571, %v4699
      %v4818 = vadd.f32 %v4572, %v4704
      %v4819 = vadd.f32 %v4573, %v4707
      %v4820 = vadd.f32 %v4574, %v4712
      %v4821 = vadd.f32 %v4575, %v4715
      %v4822 = vadd.f32 %v4576, %v4720
      %v4823 = vadd.f32 %v4577, %v4723
      %v4824 = vadd.f32 %v4578, %v4728
      %v4825 = vadd.f32 %v4579, %v4731
      %v4826 = vadd.f32 %v4580, %v4736
      %v4827 = vadd.f32 %v4581, %v4739
      %v4828 = vadd.f32 %v4582, %v4744
      %v4829 = vadd.f32 %v4583, %v4747
      %v4830 = vadd.f32 %v4584, %v4752
      %v4831 = vadd.f32 %v4585, %v4755
      %v4832 = vadd.f32 %v4586, %v4760
      %v4833 = vadd.f32 %v4587, %v4763
      %v4834 = vadd.f32 %v4588, %v4768
      %v4835 = vadd.f32 %v4589, %v4771
      %v4836 = vadd.f32 %v4590, %v4776
      %v4837 = vadd.f32 %v4591, %v4779
      %v4838 = vadd.f32 %v4592, %v4784
      %v4839 = vadd.f32 %v4593, %v4787
      %v4840 = vadd.f32 %v4594, %v4792
      %v4841 = vadd.f32 %v4595, %v4795
      %v4842 = vadd.f32 %v4596, %v4800
      %v4843 = vadd.f32 %v4597, %v4803
      %v4844 = vadd.f32 %v4598, %v4808
      %v4845 = vadd.f32 %v4599, %v4811
      %vm4846 = vcmask 130048
      %4847 = vst.msk [vmem:[%s305] sm:$0xff] %vm4846, %v4814
      %4848 = vst.msk [vmem:[%s305 + $0x8] sm:$0xff] %vm4846, %v4815
      %4849 = vst.msk [vmem:[%s305 + $0x10] sm:$0xff] %vm4846, %v4816
      %4850 = vst.msk [vmem:[%s305 + $0x18] sm:$0xff] %vm4846, %v4817
      %4851 = vst.msk [vmem:[%s305 + $0x20] sm:$0xff] %vm4846, %v4818
      %4852 = vst.msk [vmem:[%s305 + $0x28] sm:$0xff] %vm4846, %v4819
      %4853 = vst.msk [vmem:[%s305 + $0x30] sm:$0xff] %vm4846, %v4820
      %4854 = vst.msk [vmem:[%s305 + $0x38] sm:$0xff] %vm4846, %v4821
      %4855 = vst.msk [vmem:[%s305 + $0x40] sm:$0xff] %vm4846, %v4822
      %4856 = vst.msk [vmem:[%s305 + $0x48] sm:$0xff] %vm4846, %v4823
      %4857 = vst.msk [vmem:[%s305 + $0x50] sm:$0xff] %vm4846, %v4824
      %4858 = vst.msk [vmem:[%s305 + $0x58] sm:$0xff] %vm4846, %v4825
      %4859 = vst.msk [vmem:[%s305 + $0x60] sm:$0xff] %vm4846, %v4826
      %4860 = vst.msk [vmem:[%s305 + $0x68] sm:$0xff] %vm4846, %v4827
      %4861 = vst.msk [vmem:[%s305 + $0x70] sm:$0xff] %vm4846, %v4828
      %4862 = vst.msk [vmem:[%s305 + $0x78] sm:$0xff] %vm4846, %v4829
      %4863 = vst.msk [vmem:[%s305 + $0x80] sm:$0xff] %vm4846, %v4830
      %4864 = vst.msk [vmem:[%s305 + $0x88] sm:$0xff] %vm4846, %v4831
      %4865 = vst.msk [vmem:[%s305 + $0x90] sm:$0xff] %vm4846, %v4832
      %4866 = vst.msk [vmem:[%s305 + $0x98] sm:$0xff] %vm4846, %v4833
      %4867 = vst.msk [vmem:[%s305 + $0xa0] sm:$0xff] %vm4846, %v4834
      %4868 = vst.msk [vmem:[%s305 + $0xa8] sm:$0xff] %vm4846, %v4835
      %4869 = vst.msk [vmem:[%s305 + $0xb0] sm:$0xff] %vm4846, %v4836
      %4870 = vst.msk [vmem:[%s305 + $0xb8] sm:$0xff] %vm4846, %v4837
      %4871 = vst.msk [vmem:[%s305 + $0xc0] sm:$0xff] %vm4846, %v4838
      %4872 = vst.msk [vmem:[%s305 + $0xc8] sm:$0xff] %vm4846, %v4839
      %4873 = vst.msk [vmem:[%s305 + $0xd0] sm:$0xff] %vm4846, %v4840
      %4874 = vst.msk [vmem:[%s305 + $0xd8] sm:$0xff] %vm4846, %v4841
      %4875 = vst.msk [vmem:[%s305 + $0xe0] sm:$0xff] %vm4846, %v4842
      %4876 = vst.msk [vmem:[%s305 + $0xe8] sm:$0xff] %vm4846, %v4843
      %4877 = vst.msk [vmem:[%s305 + $0xf0] sm:$0xff] %vm4846, %v4844
      %4878 = vst.msk [vmem:[%s305 + $0xf8] sm:$0xff] %vm4846, %v4845
      %p4879 = scmp.lt.s32.totalorder %s19, 1
      %s4880 = scalar_select %p4879, %s19, 1
      %s4881 = smul.addr %s4880, 32
      %s4882 = smul.addr %s4881, 8
      %s4883 = scalar_lea.vmem %s8, %s4882
      // Predicated region
      $region53: #{tpu_custom_call.1} parent=51 // pred_check
        %p4884 = pneg %p210
      $region54: #{tpu_custom_call.1} parent=51 // pred_check_branch
        %4886 = sbr.rel (%p4884) target = $region56
      $region55: #{tpu_custom_call.1} parent=51 // pred_region
        _
      $region56: #{tpu_custom_call.1} parent=51 // pred_fallthru
        _
    $region52: #{tpu_custom_call.1} parent=5 // pred_fallthru
      _
    %p4887 = scmp.le.s32.totalorder 2, %s14
    // Predicated region
    $region57: #{tpu_custom_call.1} parent=5 // pred_check
      %p4888 = pneg %p4887
    $region58: #{tpu_custom_call.1} parent=5 // pred_check_branch
      %4890 = sbr.rel (%p4888) target = $region60
    $region59: #{tpu_custom_call.1} parent=5 // pred_region
      %s4891 = ssub.s32 %s14, 2
      // Predicated region
      $region61: #{tpu_custom_call.1} parent=59 // pred_check
        %p4892 = pneg %p216
      $region62: #{tpu_custom_call.1} parent=59 // pred_check_branch
        %4894 = sbr.rel (%p4892) target = $region64
      $region63: #{tpu_custom_call.1} parent=59 // pred_region
        %p4895 = scmp.lt.s32.totalorder %s20, 1
        %s4896 = scalar_select %p4895, %s20, 1
        %s4897 = smul.addr %s4896, 32
        %s4898 = smul.addr %s4897, 8
        %s4899 = scalar_lea.vmem %s8, %s4898
      $region64: #{tpu_custom_call.1} parent=59 // pred_fallthru
        _
    $region60: #{tpu_custom_call.1} parent=5 // pred_fallthru
      _
  $region6: #{tpu_custom_call.1} parent=0 // loop_footer
    %s18 = sadd.s32 1, %s14
  $region7: #{tpu_custom_call.1} parent=0 // loop_footer_branch
    %13 = sbr.rel target = $region3
  $region8: #{tpu_custom_call.1} parent=0 // loop_exit
    _

</llo_original>
